<compile_context>
chip_gen: v6e
topology: v6e:2x2x1
jax: 0.10.0
libtpu: 0.0.40
codegen_flags: <defaults>
</compile_context>

<pallas_src>
import functools

import jax
import jax.numpy as jnp
from jax.experimental import pallas as pl
from jax.experimental.pallas import tpu as pltpu


def lstm_cov_classifier_kernel(
    # activations
    word_ref,        # (T, E)   decoder input sequence (batch = 1)
    h0_ref,          # (1, H)
    c0_ref,          # (1, H)
    enc_ref,         # (L, H)   encoder_output.view(-1, H)
    cov_in_ref,      # (1, L)   coverage vector
    attnw_in_ref,    # (1, L)   previous attention weights
    # parameters
    wih_ref,         # (4, E, H)  LSTM input weights, gate order [i, f, g, o]
    whh_ref,         # (4, H, H)  LSTM hidden weights
    b_lstm_ref,      # (4, 1, H)  b_ih + b_hh, per gate
    attn_wT_ref,     # (H, H)
    attn_b_ref,      # (1, H)
    cov_wT_ref,      # (L, H)
    cov_b_ref,       # (1, H)
    whc_hT_ref,      # (H, H)   Whc weight, hidden half (transposed)
    whc_cT_ref,      # (H, H)   Whc weight, context half (transposed)
    whc_b_ref,       # (1, H)
    ws_wT_ref,       # (H, V)
    ws_b_ref,        # (1, V)
    # outputs
    y_ref,           # (1, V)   log-softmax scores
    h_out_ref,       # (1, H)
    c_out_ref,       # (1, H)
    cov_out_ref,     # (1, L)   updated coverage
    attnw_out_ref,   # (1, L)   new attention weights
    *, seq_len):
    f32 = jnp.float32

    # coverage_vec = coverage_vec + attention_weights
    cov_new = cov_in_ref[...] + attnw_in_ref[...]
    cov_out_ref[...] = cov_new

    # --- single-layer LSTM (batch_first, num_layers=1) over the sequence ---
    h = h0_ref[...]
    c = c0_ref[...]
    for t in range(seq_len):                       # static unroll (tiny T)
        x_t = word_ref[pl.ds(t, 1), :]             # (1, E)

        def gate(k):
            return (jnp.dot(x_t, wih_ref[k], preferred_element_type=f32)
                    + jnp.dot(h, whh_ref[k], preferred_element_type=f32)
                    + b_lstm_ref[k])

        i_g = jax.nn.sigmoid(gate(0))
        f_g = jax.nn.sigmoid(gate(1))
        g_g = jnp.tanh(gate(2))
        o_g = jax.nn.sigmoid(gate(3))
        c = f_g * c + i_g * g_g
        h = o_g * jnp.tanh(c)
    h_out_ref[...] = h
    c_out_ref[...] = c

    # --- coverage-aware attention over the encoder outputs -----------------
    attn_h = jnp.dot(h, attn_wT_ref[...], preferred_element_type=f32) + attn_b_ref[...]
    con_ll = jnp.dot(cov_new, cov_wT_ref[...], preferred_element_type=f32) + cov_b_ref[...]
    attn_cov = attn_h + con_ll                                     # (1, H)

    enc = enc_ref[...]                                             # (L, H)
    # attn_cov @ enc.T  (contract on H) without materializing a transpose
    attn_prod = jax.lax.dot_general(
        attn_cov, enc, (((1,), (1,)), ((), ())),
        preferred_element_type=f32)                                # (1, L)

    m = jnp.max(attn_prod, axis=1, keepdims=True)
    e = jnp.exp(attn_prod - m)
    attn_w = e / jnp.sum(e, axis=1, keepdims=True)                 # softmax
    attnw_out_ref[...] = attn_w

    context = jnp.dot(attn_w, enc, preferred_element_type=f32)     # (1, H)

    # hc = [h, context]; Whc is pre-split, so no in-kernel lane concat
    out_hc = jnp.tanh(
        jnp.dot(h, whc_hT_ref[...], preferred_element_type=f32)
        + jnp.dot(context, whc_cT_ref[...], preferred_element_type=f32)
        + whc_b_ref[...])                                          # (1, H)

    logits = jnp.dot(out_hc, ws_wT_ref[...], preferred_element_type=f32) + ws_b_ref[...]
    lm = jnp.max(logits, axis=1, keepdims=True)
    lse = lm + jnp.log(jnp.sum(jnp.exp(logits - lm), axis=1, keepdims=True))
    y_ref[...] = logits - lse                                      # LogSoftmax(dim=1)


def lstm_cov_classifier_forward(params, word, hidden, encoder_output,
                                coverage_vec, attention_weights):
    """JAX wrapper reproducing LSTMCovClassifier.forward (batch = 1)."""
    h0, c0 = hidden                                  # each (1, 1, H)
    B, T, E = word.shape
    H = params["lstm_w_hh"].shape[1]
    V = params["ws_w"].shape[0]
    L = params["cov_w"].shape[1]
    assert B == 1, "the module's mm-based attention assumes batch = 1"

    enc2d = encoder_output.reshape(-1, H).astype(jnp.float32)  # .view(-1, H)
    assert enc2d.shape[0] == L

    # Re-layout parameters for lane-friendly kernel matmuls (done once, in JAX)
    w_ih = params["lstm_w_ih"].reshape(4, H, E).transpose(0, 2, 1)   # (4, E, H)
    w_hh = params["lstm_w_hh"].reshape(4, H, H).transpose(0, 2, 1)   # (4, H, H)
    b_lstm = (params["lstm_b_ih"] + params["lstm_b_hh"]).reshape(4, 1, H)
    attn_wT = params["attn_w"].T                       # (H, H)
    attn_b = params["attn_b"].reshape(1, H)
    cov_wT = params["cov_w"].T                         # (L, H)
    cov_b = params["cov_b"].reshape(1, H)
    whc_hT = params["whc_w"][:, :H].T                  # (H, H)
    whc_cT = params["whc_w"][:, H:].T                  # (H, H)
    whc_b = params["whc_b"].reshape(1, H)
    ws_wT = params["ws_w"].T                           # (H, V)
    ws_b = params["ws_b"].reshape(1, V)

    kernel = functools.partial(lstm_cov_classifier_kernel, seq_len=T)
    vmem = pl.BlockSpec(memory_space=pltpu.MemorySpace.VMEM)

    y, h_n, c_n, cov_new, attn_w_new = pl.pallas_call(
        kernel,
        out_shape=(
            jax.ShapeDtypeStruct((1, V), jnp.float32),
            jax.ShapeDtypeStruct((1, H), jnp.float32),
            jax.ShapeDtypeStruct((1, H), jnp.float32),
            jax.ShapeDtypeStruct((1, L), jnp.float32),
            jax.ShapeDtypeStruct((1, L), jnp.float32),
        ),
        in_specs=[vmem] * 18,
        out_specs=(vmem,) * 5,
    )(word.reshape(T, E).astype(jnp.float32),
      h0.reshape(1, H).astype(jnp.float32),
      c0.reshape(1, H).astype(jnp.float32),
      enc2d,
      coverage_vec.reshape(1, L).astype(jnp.float32),
      attention_weights.reshape(1, L).astype(jnp.float32),
      w_ih, w_hh, b_lstm,
      attn_wT, attn_b, cov_wT, cov_b,
      whc_hT, whc_cT, whc_b, ws_wT, ws_b)

    return (y.reshape(1, 1, V),                       # y.unsqueeze(0)
            (h_n.reshape(1, 1, H), c_n.reshape(1, 1, H)),
            cov_new.reshape(coverage_vec.shape),
            attn_w_new)                               # (1, L), like torch.mm result


if __name__ == "__main__":
    # Module hyperparameters (small, consistent with the forward pass)
    embedding_dim = 32
    hidden_dim = 32
    vocab_size = 128            # lane-dense output row
    max_sent_len = 16
    seq_len = 4

    H, E, V, L = hidden_dim, embedding_dim, vocab_size, max_sent_len

    key = jax.random.PRNGKey(0)
    keys = jax.random.split(key, 16)

    def xavier(k, shape):       # nn.init.xavier_uniform_ (gain=1)
        fan_out, fan_in = shape
        bound = (6.0 / (fan_in + fan_out)) ** 0.5
        return jax.random.uniform(k, shape, jnp.float32, -bound, bound)

    def linear_init(kw, kb, out_f, in_f):   # PyTorch nn.Linear default init
        bound = 1.0 / (in_f ** 0.5)
        w = jax.random.uniform(kw, (out_f, in_f), jnp.float32, -bound, bound)
        b = jax.random.uniform(kb, (out_f,), jnp.float32, -bound, bound)
        return w, b

    attn_w, attn_b = linear_init(keys[2], keys[3], H, H)
    cov_w, cov_b = linear_init(keys[4], keys[5], H, L)
    whc_w, whc_b = linear_init(keys[6], keys[7], H, 2 * H)
    ws_w, ws_b = linear_init(keys[8], keys[9], V, H)

    params = {
        "lstm_w_ih": xavier(keys[0], (4 * H, E)),
        "lstm_w_hh": xavier(keys[1], (4 * H, H)),
        "lstm_b_ih": jnp.zeros((4 * H,), jnp.float32),   # init_weight: constant_(0)
        "lstm_b_hh": jnp.zeros((4 * H,), jnp.float32),
        "attn_w": attn_w, "attn_b": attn_b,
        "cov_w": cov_w, "cov_b": cov_b,
        "whc_w": whc_w, "whc_b": whc_b,
        "ws_w": ws_w, "ws_b": ws_b,
        # NOTE: self.hidden2label is defined in __init__ but unused in forward.
    }

    word = jax.random.normal(keys[10], (1, seq_len, E), jnp.float32)
    h0 = 0.1 * jax.random.normal(keys[11], (1, 1, H), jnp.float32)
    c0 = 0.1 * jax.random.normal(keys[12], (1, 1, H), jnp.float32)
    encoder_output = jax.random.normal(keys[13], (1, L, H), jnp.float32)
    coverage_vec = jnp.zeros((1, 1, L), jnp.float32)
    prev_attn = jax.nn.softmax(
        jax.random.normal(keys[14], (1, 1, L), jnp.float32), axis=-1)

    y, (h_n, c_n), cov_new, attn_w_new = lstm_cov_classifier_forward(
        params, word, (h0, c0), encoder_output, coverage_vec, prev_attn)
    jax.block_until_ready((y, h_n, c_n, cov_new, attn_w_new))

    assert y.shape == (1, 1, V)
    assert h_n.shape == (1, 1, H) and c_n.shape == (1, 1, H)
    assert cov_new.shape == (1, 1, L)
    assert attn_w_new.shape == (1, L)
    assert bool(jnp.all(jnp.isfinite(y)))
    # log-softmax output exponentiates to a probability distribution
    assert bool(jnp.allclose(jnp.sum(jnp.exp(y)), 1.0, atol=1e-4))
    # attention weights are a softmax over encoder positions
    assert bool(jnp.allclose(jnp.sum(attn_w_new), 1.0, atol=1e-4))
    print("KERNEL_OK")
</pallas_src>

<mosaic_0001>
module attributes {stable_mosaic.version = 11 : i64} {
  func.func @lstm_cov_classifier_kernel(%arg0: memref<4x32xf32, #tpu.memory_space<vmem>>, %arg1: memref<1x32xf32, #tpu.memory_space<vmem>>, %arg2: memref<1x32xf32, #tpu.memory_space<vmem>>, %arg3: memref<16x32xf32, #tpu.memory_space<vmem>>, %arg4: memref<1x16xf32, #tpu.memory_space<vmem>>, %arg5: memref<1x16xf32, #tpu.memory_space<vmem>>, %arg6: memref<4x32x32xf32, #tpu.memory_space<vmem>>, %arg7: memref<4x32x32xf32, #tpu.memory_space<vmem>>, %arg8: memref<4x1x32xf32, #tpu.memory_space<vmem>>, %arg9: memref<32x32xf32, #tpu.memory_space<vmem>>, %arg10: memref<1x32xf32, #tpu.memory_space<vmem>>, %arg11: memref<16x32xf32, #tpu.memory_space<vmem>>, %arg12: memref<1x32xf32, #tpu.memory_space<vmem>>, %arg13: memref<32x32xf32, #tpu.memory_space<vmem>>, %arg14: memref<32x32xf32, #tpu.memory_space<vmem>>, %arg15: memref<1x32xf32, #tpu.memory_space<vmem>>, %arg16: memref<32x128xf32, #tpu.memory_space<vmem>>, %arg17: memref<1x128xf32, #tpu.memory_space<vmem>>, %arg18: memref<1x128xf32, #tpu.memory_space<vmem>>, %arg19: memref<1x32xf32, #tpu.memory_space<vmem>>, %arg20: memref<1x32xf32, #tpu.memory_space<vmem>>, %arg21: memref<1x16xf32, #tpu.memory_space<vmem>>, %arg22: memref<1x16xf32, #tpu.memory_space<vmem>>) attributes {dimension_semantics = [], scalar_prefetch = 0 : i64, scratch_operands = 0 : i64, tpu.core_type = #tpu.core_type<tc>} {
    %c0 = arith.constant 0 : index
    %c0_0 = arith.constant 0 : index
    %0 = vector.load %arg4[%c0, %c0_0] : memref<1x16xf32, #tpu.memory_space<vmem>>, vector<1x16xf32>
    %c0_1 = arith.constant 0 : index
    %c0_2 = arith.constant 0 : index
    %1 = vector.load %arg5[%c0_1, %c0_2] : memref<1x16xf32, #tpu.memory_space<vmem>>, vector<1x16xf32>
    %2 = arith.addf %0, %1 : vector<1x16xf32>
    %c0_3 = arith.constant 0 : index
    %c0_4 = arith.constant 0 : index
    %3 = vector.load %arg21[%c0_3, %c0_4] : memref<1x16xf32, #tpu.memory_space<vmem>>, vector<1x16xf32>
    tpu.vector_store %arg21[%c0_3, %c0_4], %2 {strides = array<i32>} : memref<1x16xf32, #tpu.memory_space<vmem>>, vector<1x16xf32>,
    %c0_5 = arith.constant 0 : index
    %c0_6 = arith.constant 0 : index
    %4 = vector.load %arg1[%c0_5, %c0_6] : memref<1x32xf32, #tpu.memory_space<vmem>>, vector<1x32xf32>
    %c0_7 = arith.constant 0 : index
    %c0_8 = arith.constant 0 : index
    %5 = vector.load %arg2[%c0_7, %c0_8] : memref<1x32xf32, #tpu.memory_space<vmem>>, vector<1x32xf32>
    %c0_9 = arith.constant 0 : index
    %c0_10 = arith.constant 0 : index
    %6 = vector.load %arg0[%c0_9, %c0_10] : memref<4x32xf32, #tpu.memory_space<vmem>>, vector<1x32xf32>
    %c0_11 = arith.constant 0 : index
    %c0_12 = arith.constant 0 : index
    %c0_13 = arith.constant 0 : index
    %7 = vector.load %arg6[%c0_11, %c0_12, %c0_13] : memref<4x32x32xf32, #tpu.memory_space<vmem>>, vector<1x32x32xf32>
    %8 = vector.shape_cast %7 : vector<1x32x32xf32> to vector<32x32xf32>
    %cst = arith.constant dense<0.000000e+00> : vector<1x32xf32>
    %9 = tpu.matmul %6, %8, %cst {dimension_numbers = #tpu.dot_dimension_numbers<[1], [0], [0], [1], [0, 0, 1, 1], [], []>} : vector<1x32xf32>, vector<32x32xf32>, vector<1x32xf32> -> vector<1x32xf32>
    %c0_14 = arith.constant 0 : index
    %c0_15 = arith.constant 0 : index
    %c0_16 = arith.constant 0 : index
    %10 = vector.load %arg7[%c0_14, %c0_15, %c0_16] : memref<4x32x32xf32, #tpu.memory_space<vmem>>, vector<1x32x32xf32>
    %11 = vector.shape_cast %10 : vector<1x32x32xf32> to vector<32x32xf32>
    %cst_17 = arith.constant dense<0.000000e+00> : vector<1x32xf32>
    %12 = tpu.matmul %4, %11, %cst_17 {dimension_numbers = #tpu.dot_dimension_numbers<[1], [0], [0], [1], [0, 0, 1, 1], [], []>} : vector<1x32xf32>, vector<32x32xf32>, vector<1x32xf32> -> vector<1x32xf32>
    %13 = arith.addf %9, %12 : vector<1x32xf32>
    %c0_18 = arith.constant 0 : index
    %c0_19 = arith.constant 0 : index
    %c0_20 = arith.constant 0 : index
    %14 = vector.load %arg8[%c0_18, %c0_19, %c0_20] : memref<4x1x32xf32, #tpu.memory_space<vmem>>, vector<1x1x32xf32>
    %15 = vector.shape_cast %14 : vector<1x1x32xf32> to vector<1x32xf32>
    %16 = arith.addf %13, %15 : vector<1x32xf32>
    %17 = arith.negf %16 : vector<1x32xf32>
    %18 = math.exp %17 : vector<1x32xf32>
    %cst_21 = arith.constant 1.000000e+00 : f32
    %19 = vector.broadcast %cst_21 : f32 to vector<1x32xf32>
    %20 = arith.addf %19, %18 : vector<1x32xf32>
    %21 = arith.divf %19, %20 : vector<1x32xf32>
    %c1 = arith.constant 1 : index
    %c0_22 = arith.constant 0 : index
    %c0_23 = arith.constant 0 : index
    %22 = vector.load %arg6[%c1, %c0_22, %c0_23] : memref<4x32x32xf32, #tpu.memory_space<vmem>>, vector<1x32x32xf32>
    %23 = vector.shape_cast %22 : vector<1x32x32xf32> to vector<32x32xf32>
    %cst_24 = arith.constant dense<0.000000e+00> : vector<1x32xf32>
    %24 = tpu.matmul %6, %23, %cst_24 {dimension_numbers = #tpu.dot_dimension_numbers<[1], [0], [0], [1], [0, 0, 1, 1], [], []>} : vector<1x32xf32>, vector<32x32xf32>, vector<1x32xf32> -> vector<1x32xf32>
    %c1_25 = arith.constant 1 : index
    %c0_26 = arith.constant 0 : index
    %c0_27 = arith.constant 0 : index
    %25 = vector.load %arg7[%c1_25, %c0_26, %c0_27] : memref<4x32x32xf32, #tpu.memory_space<vmem>>, vector<1x32x32xf32>
    %26 = vector.shape_cast %25 : vector<1x32x32xf32> to vector<32x32xf32>
    %cst_28 = arith.constant dense<0.000000e+00> : vector<1x32xf32>
    %27 = tpu.matmul %4, %26, %cst_28 {dimension_numbers = #tpu.dot_dimension_numbers<[1], [0], [0], [1], [0, 0, 1, 1], [], []>} : vector<1x32xf32>, vector<32x32xf32>, vector<1x32xf32> -> vector<1x32xf32>
    %28 = arith.addf %24, %27 : vector<1x32xf32>
    %c1_29 = arith.constant 1 : index
    %c0_30 = arith.constant 0 : index
    %c0_31 = arith.constant 0 : index
    %29 = vector.load %arg8[%c1_29, %c0_30, %c0_31] : memref<4x1x32xf32, #tpu.memory_space<vmem>>, vector<1x1x32xf32>
    %30 = vector.shape_cast %29 : vector<1x1x32xf32> to vector<1x32xf32>
    %31 = arith.addf %28, %30 : vector<1x32xf32>
    %32 = arith.negf %31 : vector<1x32xf32>
    %33 = math.exp %32 : vector<1x32xf32>
    %cst_32 = arith.constant 1.000000e+00 : f32
    %34 = vector.broadcast %cst_32 : f32 to vector<1x32xf32>
    %35 = arith.addf %34, %33 : vector<1x32xf32>
    %36 = arith.divf %34, %35 : vector<1x32xf32>
    %c2 = arith.constant 2 : index
    %c0_33 = arith.constant 0 : index
    %c0_34 = arith.constant 0 : index
    %37 = vector.load %arg6[%c2, %c0_33, %c0_34] : memref<4x32x32xf32, #tpu.memory_space<vmem>>, vector<1x32x32xf32>
    %38 = vector.shape_cast %37 : vector<1x32x32xf32> to vector<32x32xf32>
    %cst_35 = arith.constant dense<0.000000e+00> : vector<1x32xf32>
    %39 = tpu.matmul %6, %38, %cst_35 {dimension_numbers = #tpu.dot_dimension_numbers<[1], [0], [0], [1], [0, 0, 1, 1], [], []>} : vector<1x32xf32>, vector<32x32xf32>, vector<1x32xf32> -> vector<1x32xf32>
    %c2_36 = arith.constant 2 : index
    %c0_37 = arith.constant 0 : index
    %c0_38 = arith.constant 0 : index
    %40 = vector.load %arg7[%c2_36, %c0_37, %c0_38] : memref<4x32x32xf32, #tpu.memory_space<vmem>>, vector<1x32x32xf32>
    %41 = vector.shape_cast %40 : vector<1x32x32xf32> to vector<32x32xf32>
    %cst_39 = arith.constant dense<0.000000e+00> : vector<1x32xf32>
    %42 = tpu.matmul %4, %41, %cst_39 {dimension_numbers = #tpu.dot_dimension_numbers<[1], [0], [0], [1], [0, 0, 1, 1], [], []>} : vector<1x32xf32>, vector<32x32xf32>, vector<1x32xf32> -> vector<1x32xf32>
    %43 = arith.addf %39, %42 : vector<1x32xf32>
    %c2_40 = arith.constant 2 : index
    %c0_41 = arith.constant 0 : index
    %c0_42 = arith.constant 0 : index
    %44 = vector.load %arg8[%c2_40, %c0_41, %c0_42] : memref<4x1x32xf32, #tpu.memory_space<vmem>>, vector<1x1x32xf32>
    %45 = vector.shape_cast %44 : vector<1x1x32xf32> to vector<1x32xf32>
    %46 = arith.addf %43, %45 : vector<1x32xf32>
    %47 = math.tanh %46 : vector<1x32xf32>
    %c3 = arith.constant 3 : index
    %c0_43 = arith.constant 0 : index
    %c0_44 = arith.constant 0 : index
    %48 = vector.load %arg6[%c3, %c0_43, %c0_44] : memref<4x32x32xf32, #tpu.memory_space<vmem>>, vector<1x32x32xf32>
    %49 = vector.shape_cast %48 : vector<1x32x32xf32> to vector<32x32xf32>
    %cst_45 = arith.constant dense<0.000000e+00> : vector<1x32xf32>
    %50 = tpu.matmul %6, %49, %cst_45 {dimension_numbers = #tpu.dot_dimension_numbers<[1], [0], [0], [1], [0, 0, 1, 1], [], []>} : vector<1x32xf32>, vector<32x32xf32>, vector<1x32xf32> -> vector<1x32xf32>
    %c3_46 = arith.constant 3 : index
    %c0_47 = arith.constant 0 : index
    %c0_48 = arith.constant 0 : index
    %51 = vector.load %arg7[%c3_46, %c0_47, %c0_48] : memref<4x32x32xf32, #tpu.memory_space<vmem>>, vector<1x32x32xf32>
    %52 = vector.shape_cast %51 : vector<1x32x32xf32> to vector<32x32xf32>
    %cst_49 = arith.constant dense<0.000000e+00> : vector<1x32xf32>
    %53 = tpu.matmul %4, %52, %cst_49 {dimension_numbers = #tpu.dot_dimension_numbers<[1], [0], [0], [1], [0, 0, 1, 1], [], []>} : vector<1x32xf32>, vector<32x32xf32>, vector<1x32xf32> -> vector<1x32xf32>
    %54 = arith.addf %50, %53 : vector<1x32xf32>
    %c3_50 = arith.constant 3 : index
    %c0_51 = arith.constant 0 : index
    %c0_52 = arith.constant 0 : index
    %55 = vector.load %arg8[%c3_50, %c0_51, %c0_52] : memref<4x1x32xf32, #tpu.memory_space<vmem>>, vector<1x1x32xf32>
    %56 = vector.shape_cast %55 : vector<1x1x32xf32> to vector<1x32xf32>
    %57 = arith.addf %54, %56 : vector<1x32xf32>
    %58 = arith.negf %57 : vector<1x32xf32>
    %59 = math.exp %58 : vector<1x32xf32>
    %cst_53 = arith.constant 1.000000e+00 : f32
    %60 = vector.broadcast %cst_53 : f32 to vector<1x32xf32>
    %61 = arith.addf %60, %59 : vector<1x32xf32>
    %62 = arith.divf %60, %61 : vector<1x32xf32>
    %63 = arith.mulf %36, %5 : vector<1x32xf32>
    %64 = arith.mulf %21, %47 : vector<1x32xf32>
    %65 = arith.addf %63, %64 : vector<1x32xf32>
    %66 = math.tanh %65 : vector<1x32xf32>
    %67 = arith.mulf %62, %66 : vector<1x32xf32>
    %c1_54 = arith.constant 1 : index
    %c0_55 = arith.constant 0 : index
    %68 = vector.load %arg0[%c1_54, %c0_55] : memref<4x32xf32, #tpu.memory_space<vmem>>, vector<1x32xf32>
    %c0_56 = arith.constant 0 : index
    %c0_57 = arith.constant 0 : index
    %c0_58 = arith.constant 0 : index
    %69 = vector.load %arg6[%c0_56, %c0_57, %c0_58] : memref<4x32x32xf32, #tpu.memory_space<vmem>>, vector<1x32x32xf32>
    %70 = vector.shape_cast %69 : vector<1x32x32xf32> to vector<32x32xf32>
    %cst_59 = arith.constant dense<0.000000e+00> : vector<1x32xf32>
    %71 = tpu.matmul %68, %70, %cst_59 {dimension_numbers = #tpu.dot_dimension_numbers<[1], [0], [0], [1], [0, 0, 1, 1], [], []>} : vector<1x32xf32>, vector<32x32xf32>, vector<1x32xf32> -> vector<1x32xf32>
    %c0_60 = arith.constant 0 : index
    %c0_61 = arith.constant 0 : index
    %c0_62 = arith.constant 0 : index
    %72 = vector.load %arg7[%c0_60, %c0_61, %c0_62] : memref<4x32x32xf32, #tpu.memory_space<vmem>>, vector<1x32x32xf32>
    %73 = vector.shape_cast %72 : vector<1x32x32xf32> to vector<32x32xf32>
    %cst_63 = arith.constant dense<0.000000e+00> : vector<1x32xf32>
    %74 = tpu.matmul %67, %73, %cst_63 {dimension_numbers = #tpu.dot_dimension_numbers<[1], [0], [0], [1], [0, 0, 1, 1], [], []>} : vector<1x32xf32>, vector<32x32xf32>, vector<1x32xf32> -> vector<1x32xf32>
    %75 = arith.addf %71, %74 : vector<1x32xf32>
    %c0_64 = arith.constant 0 : index
    %c0_65 = arith.constant 0 : index
    %c0_66 = arith.constant 0 : index
    %76 = vector.load %arg8[%c0_64, %c0_65, %c0_66] : memref<4x1x32xf32, #tpu.memory_space<vmem>>, vector<1x1x32xf32>
    %77 = vector.shape_cast %76 : vector<1x1x32xf32> to vector<1x32xf32>
    %78 = arith.addf %75, %77 : vector<1x32xf32>
    %79 = arith.negf %78 : vector<1x32xf32>
    %80 = math.exp %79 : vector<1x32xf32>
    %cst_67 = arith.constant 1.000000e+00 : f32
    %81 = vector.broadcast %cst_67 : f32 to vector<1x32xf32>
    %82 = arith.addf %81, %80 : vector<1x32xf32>
    %83 = arith.divf %81, %82 : vector<1x32xf32>
    %c1_68 = arith.constant 1 : index
    %c0_69 = arith.constant 0 : index
    %c0_70 = arith.constant 0 : index
    %84 = vector.load %arg6[%c1_68, %c0_69, %c0_70] : memref<4x32x32xf32, #tpu.memory_space<vmem>>, vector<1x32x32xf32>
    %85 = vector.shape_cast %84 : vector<1x32x32xf32> to vector<32x32xf32>
    %cst_71 = arith.constant dense<0.000000e+00> : vector<1x32xf32>
    %86 = tpu.matmul %68, %85, %cst_71 {dimension_numbers = #tpu.dot_dimension_numbers<[1], [0], [0], [1], [0, 0, 1, 1], [], []>} : vector<1x32xf32>, vector<32x32xf32>, vector<1x32xf32> -> vector<1x32xf32>
    %c1_72 = arith.constant 1 : index
    %c0_73 = arith.constant 0 : index
    %c0_74 = arith.constant 0 : index
    %87 = vector.load %arg7[%c1_72, %c0_73, %c0_74] : memref<4x32x32xf32, #tpu.memory_space<vmem>>, vector<1x32x32xf32>
    %88 = vector.shape_cast %87 : vector<1x32x32xf32> to vector<32x32xf32>
    %cst_75 = arith.constant dense<0.000000e+00> : vector<1x32xf32>
    %89 = tpu.matmul %67, %88, %cst_75 {dimension_numbers = #tpu.dot_dimension_numbers<[1], [0], [0], [1], [0, 0, 1, 1], [], []>} : vector<1x32xf32>, vector<32x32xf32>, vector<1x32xf32> -> vector<1x32xf32>
    %90 = arith.addf %86, %89 : vector<1x32xf32>
    %c1_76 = arith.constant 1 : index
    %c0_77 = arith.constant 0 : index
    %c0_78 = arith.constant 0 : index
    %91 = vector.load %arg8[%c1_76, %c0_77, %c0_78] : memref<4x1x32xf32, #tpu.memory_space<vmem>>, vector<1x1x32xf32>
    %92 = vector.shape_cast %91 : vector<1x1x32xf32> to vector<1x32xf32>
    %93 = arith.addf %90, %92 : vector<1x32xf32>
    %94 = arith.negf %93 : vector<1x32xf32>
    %95 = math.exp %94 : vector<1x32xf32>
    %cst_79 = arith.constant 1.000000e+00 : f32
    %96 = vector.broadcast %cst_79 : f32 to vector<1x32xf32>
    %97 = arith.addf %96, %95 : vector<1x32xf32>
    %98 = arith.divf %96, %97 : vector<1x32xf32>
    %c2_80 = arith.constant 2 : index
    %c0_81 = arith.constant 0 : index
    %c0_82 = arith.constant 0 : index
    %99 = vector.load %arg6[%c2_80, %c0_81, %c0_82] : memref<4x32x32xf32, #tpu.memory_space<vmem>>, vector<1x32x32xf32>
    %100 = vector.shape_cast %99 : vector<1x32x32xf32> to vector<32x32xf32>
    %cst_83 = arith.constant dense<0.000000e+00> : vector<1x32xf32>
    %101 = tpu.matmul %68, %100, %cst_83 {dimension_numbers = #tpu.dot_dimension_numbers<[1], [0], [0], [1], [0, 0, 1, 1], [], []>} : vector<1x32xf32>, vector<32x32xf32>, vector<1x32xf32> -> vector<1x32xf32>
    %c2_84 = arith.constant 2 : index
    %c0_85 = arith.constant 0 : index
    %c0_86 = arith.constant 0 : index
    %102 = vector.load %arg7[%c2_84, %c0_85, %c0_86] : memref<4x32x32xf32, #tpu.memory_space<vmem>>, vector<1x32x32xf32>
    %103 = vector.shape_cast %102 : vector<1x32x32xf32> to vector<32x32xf32>
    %cst_87 = arith.constant dense<0.000000e+00> : vector<1x32xf32>
    %104 = tpu.matmul %67, %103, %cst_87 {dimension_numbers = #tpu.dot_dimension_numbers<[1], [0], [0], [1], [0, 0, 1, 1], [], []>} : vector<1x32xf32>, vector<32x32xf32>, vector<1x32xf32> -> vector<1x32xf32>
    %105 = arith.addf %101, %104 : vector<1x32xf32>
    %c2_88 = arith.constant 2 : index
    %c0_89 = arith.constant 0 : index
    %c0_90 = arith.constant 0 : index
    %106 = vector.load %arg8[%c2_88, %c0_89, %c0_90] : memref<4x1x32xf32, #tpu.memory_space<vmem>>, vector<1x1x32xf32>
    %107 = vector.shape_cast %106 : vector<1x1x32xf32> to vector<1x32xf32>
    %108 = arith.addf %105, %107 : vector<1x32xf32>
    %109 = math.tanh %108 : vector<1x32xf32>
    %c3_91 = arith.constant 3 : index
    %c0_92 = arith.constant 0 : index
    %c0_93 = arith.constant 0 : index
    %110 = vector.load %arg6[%c3_91, %c0_92, %c0_93] : memref<4x32x32xf32, #tpu.memory_space<vmem>>, vector<1x32x32xf32>
    %111 = vector.shape_cast %110 : vector<1x32x32xf32> to vector<32x32xf32>
    %cst_94 = arith.constant dense<0.000000e+00> : vector<1x32xf32>
    %112 = tpu.matmul %68, %111, %cst_94 {dimension_numbers = #tpu.dot_dimension_numbers<[1], [0], [0], [1], [0, 0, 1, 1], [], []>} : vector<1x32xf32>, vector<32x32xf32>, vector<1x32xf32> -> vector<1x32xf32>
    %c3_95 = arith.constant 3 : index
    %c0_96 = arith.constant 0 : index
    %c0_97 = arith.constant 0 : index
    %113 = vector.load %arg7[%c3_95, %c0_96, %c0_97] : memref<4x32x32xf32, #tpu.memory_space<vmem>>, vector<1x32x32xf32>
    %114 = vector.shape_cast %113 : vector<1x32x32xf32> to vector<32x32xf32>
    %cst_98 = arith.constant dense<0.000000e+00> : vector<1x32xf32>
    %115 = tpu.matmul %67, %114, %cst_98 {dimension_numbers = #tpu.dot_dimension_numbers<[1], [0], [0], [1], [0, 0, 1, 1], [], []>} : vector<1x32xf32>, vector<32x32xf32>, vector<1x32xf32> -> vector<1x32xf32>
    %116 = arith.addf %112, %115 : vector<1x32xf32>
    %c3_99 = arith.constant 3 : index
    %c0_100 = arith.constant 0 : index
    %c0_101 = arith.constant 0 : index
    %117 = vector.load %arg8[%c3_99, %c0_100, %c0_101] : memref<4x1x32xf32, #tpu.memory_space<vmem>>, vector<1x1x32xf32>
    %118 = vector.shape_cast %117 : vector<1x1x32xf32> to vector<1x32xf32>
    %119 = arith.addf %116, %118 : vector<1x32xf32>
    %120 = arith.negf %119 : vector<1x32xf32>
    %121 = math.exp %120 : vector<1x32xf32>
    %cst_102 = arith.constant 1.000000e+00 : f32
    %122 = vector.broadcast %cst_102 : f32 to vector<1x32xf32>
    %123 = arith.addf %122, %121 : vector<1x32xf32>
    %124 = arith.divf %122, %123 : vector<1x32xf32>
    %125 = arith.mulf %98, %65 : vector<1x32xf32>
    %126 = arith.mulf %83, %109 : vector<1x32xf32>
    %127 = arith.addf %125, %126 : vector<1x32xf32>
    %128 = math.tanh %127 : vector<1x32xf32>
    %129 = arith.mulf %124, %128 : vector<1x32xf32>
    %c2_103 = arith.constant 2 : index
    %c0_104 = arith.constant 0 : index
    %130 = vector.load %arg0[%c2_103, %c0_104] : memref<4x32xf32, #tpu.memory_space<vmem>>, vector<1x32xf32>
    %c0_105 = arith.constant 0 : index
    %c0_106 = arith.constant 0 : index
    %c0_107 = arith.constant 0 : index
    %131 = vector.load %arg6[%c0_105, %c0_106, %c0_107] : memref<4x32x32xf32, #tpu.memory_space<vmem>>, vector<1x32x32xf32>
    %132 = vector.shape_cast %131 : vector<1x32x32xf32> to vector<32x32xf32>
    %cst_108 = arith.constant dense<0.000000e+00> : vector<1x32xf32>
    %133 = tpu.matmul %130, %132, %cst_108 {dimension_numbers = #tpu.dot_dimension_numbers<[1], [0], [0], [1], [0, 0, 1, 1], [], []>} : vector<1x32xf32>, vector<32x32xf32>, vector<1x32xf32> -> vector<1x32xf32>
    %c0_109 = arith.constant 0 : index
    %c0_110 = arith.constant 0 : index
    %c0_111 = arith.constant 0 : index
    %134 = vector.load %arg7[%c0_109, %c0_110, %c0_111] : memref<4x32x32xf32, #tpu.memory_space<vmem>>, vector<1x32x32xf32>
    %135 = vector.shape_cast %134 : vector<1x32x32xf32> to vector<32x32xf32>
    %cst_112 = arith.constant dense<0.000000e+00> : vector<1x32xf32>
    %136 = tpu.matmul %129, %135, %cst_112 {dimension_numbers = #tpu.dot_dimension_numbers<[1], [0], [0], [1], [0, 0, 1, 1], [], []>} : vector<1x32xf32>, vector<32x32xf32>, vector<1x32xf32> -> vector<1x32xf32>
    %137 = arith.addf %133, %136 : vector<1x32xf32>
    %c0_113 = arith.constant 0 : index
    %c0_114 = arith.constant 0 : index
    %c0_115 = arith.constant 0 : index
    %138 = vector.load %arg8[%c0_113, %c0_114, %c0_115] : memref<4x1x32xf32, #tpu.memory_space<vmem>>, vector<1x1x32xf32>
    %139 = vector.shape_cast %138 : vector<1x1x32xf32> to vector<1x32xf32>
    %140 = arith.addf %137, %139 : vector<1x32xf32>
    %141 = arith.negf %140 : vector<1x32xf32>
    %142 = math.exp %141 : vector<1x32xf32>
    %cst_116 = arith.constant 1.000000e+00 : f32
    %143 = vector.broadcast %cst_116 : f32 to vector<1x32xf32>
    %144 = arith.addf %143, %142 : vector<1x32xf32>
    %145 = arith.divf %143, %144 : vector<1x32xf32>
    %c1_117 = arith.constant 1 : index
    %c0_118 = arith.constant 0 : index
    %c0_119 = arith.constant 0 : index
    %146 = vector.load %arg6[%c1_117, %c0_118, %c0_119] : memref<4x32x32xf32, #tpu.memory_space<vmem>>, vector<1x32x32xf32>
    %147 = vector.shape_cast %146 : vector<1x32x32xf32> to vector<32x32xf32>
    %cst_120 = arith.constant dense<0.000000e+00> : vector<1x32xf32>
    %148 = tpu.matmul %130, %147, %cst_120 {dimension_numbers = #tpu.dot_dimension_numbers<[1], [0], [0], [1], [0, 0, 1, 1], [], []>} : vector<1x32xf32>, vector<32x32xf32>, vector<1x32xf32> -> vector<1x32xf32>
    %c1_121 = arith.constant 1 : index
    %c0_122 = arith.constant 0 : index
    %c0_123 = arith.constant 0 : index
    %149 = vector.load %arg7[%c1_121, %c0_122, %c0_123] : memref<4x32x32xf32, #tpu.memory_space<vmem>>, vector<1x32x32xf32>
    %150 = vector.shape_cast %149 : vector<1x32x32xf32> to vector<32x32xf32>
    %cst_124 = arith.constant dense<0.000000e+00> : vector<1x32xf32>
    %151 = tpu.matmul %129, %150, %cst_124 {dimension_numbers = #tpu.dot_dimension_numbers<[1], [0], [0], [1], [0, 0, 1, 1], [], []>} : vector<1x32xf32>, vector<32x32xf32>, vector<1x32xf32> -> vector<1x32xf32>
    %152 = arith.addf %148, %151 : vector<1x32xf32>
    %c1_125 = arith.constant 1 : index
    %c0_126 = arith.constant 0 : index
    %c0_127 = arith.constant 0 : index
    %153 = vector.load %arg8[%c1_125, %c0_126, %c0_127] : memref<4x1x32xf32, #tpu.memory_space<vmem>>, vector<1x1x32xf32>
    %154 = vector.shape_cast %153 : vector<1x1x32xf32> to vector<1x32xf32>
    %155 = arith.addf %152, %154 : vector<1x32xf32>
    %156 = arith.negf %155 : vector<1x32xf32>
    %157 = math.exp %156 : vector<1x32xf32>
    %cst_128 = arith.constant 1.000000e+00 : f32
    %158 = vector.broadcast %cst_128 : f32 to vector<1x32xf32>
    %159 = arith.addf %158, %157 : vector<1x32xf32>
    %160 = arith.divf %158, %159 : vector<1x32xf32>
    %c2_129 = arith.constant 2 : index
    %c0_130 = arith.constant 0 : index
    %c0_131 = arith.constant 0 : index
    %161 = vector.load %arg6[%c2_129, %c0_130, %c0_131] : memref<4x32x32xf32, #tpu.memory_space<vmem>>, vector<1x32x32xf32>
    %162 = vector.shape_cast %161 : vector<1x32x32xf32> to vector<32x32xf32>
    %cst_132 = arith.constant dense<0.000000e+00> : vector<1x32xf32>
    %163 = tpu.matmul %130, %162, %cst_132 {dimension_numbers = #tpu.dot_dimension_numbers<[1], [0], [0], [1], [0, 0, 1, 1], [], []>} : vector<1x32xf32>, vector<32x32xf32>, vector<1x32xf32> -> vector<1x32xf32>
    %c2_133 = arith.constant 2 : index
    %c0_134 = arith.constant 0 : index
    %c0_135 = arith.constant 0 : index
    %164 = vector.load %arg7[%c2_133, %c0_134, %c0_135] : memref<4x32x32xf32, #tpu.memory_space<vmem>>, vector<1x32x32xf32>
    %165 = vector.shape_cast %164 : vector<1x32x32xf32> to vector<32x32xf32>
    %cst_136 = arith.constant dense<0.000000e+00> : vector<1x32xf32>
    %166 = tpu.matmul %129, %165, %cst_136 {dimension_numbers = #tpu.dot_dimension_numbers<[1], [0], [0], [1], [0, 0, 1, 1], [], []>} : vector<1x32xf32>, vector<32x32xf32>, vector<1x32xf32> -> vector<1x32xf32>
    %167 = arith.addf %163, %166 : vector<1x32xf32>
    %c2_137 = arith.constant 2 : index
    %c0_138 = arith.constant 0 : index
    %c0_139 = arith.constant 0 : index
    %168 = vector.load %arg8[%c2_137, %c0_138, %c0_139] : memref<4x1x32xf32, #tpu.memory_space<vmem>>, vector<1x1x32xf32>
    %169 = vector.shape_cast %168 : vector<1x1x32xf32> to vector<1x32xf32>
    %170 = arith.addf %167, %169 : vector<1x32xf32>
    %171 = math.tanh %170 : vector<1x32xf32>
    %c3_140 = arith.constant 3 : index
    %c0_141 = arith.constant 0 : index
    %c0_142 = arith.constant 0 : index
    %172 = vector.load %arg6[%c3_140, %c0_141, %c0_142] : memref<4x32x32xf32, #tpu.memory_space<vmem>>, vector<1x32x32xf32>
    %173 = vector.shape_cast %172 : vector<1x32x32xf32> to vector<32x32xf32>
    %cst_143 = arith.constant dense<0.000000e+00> : vector<1x32xf32>
    %174 = tpu.matmul %130, %173, %cst_143 {dimension_numbers = #tpu.dot_dimension_numbers<[1], [0], [0], [1], [0, 0, 1, 1], [], []>} : vector<1x32xf32>, vector<32x32xf32>, vector<1x32xf32> -> vector<1x32xf32>
    %c3_144 = arith.constant 3 : index
    %c0_145 = arith.constant 0 : index
    %c0_146 = arith.constant 0 : index
    %175 = vector.load %arg7[%c3_144, %c0_145, %c0_146] : memref<4x32x32xf32, #tpu.memory_space<vmem>>, vector<1x32x32xf32>
    %176 = vector.shape_cast %175 : vector<1x32x32xf32> to vector<32x32xf32>
    %cst_147 = arith.constant dense<0.000000e+00> : vector<1x32xf32>
    %177 = tpu.matmul %129, %176, %cst_147 {dimension_numbers = #tpu.dot_dimension_numbers<[1], [0], [0], [1], [0, 0, 1, 1], [], []>} : vector<1x32xf32>, vector<32x32xf32>, vector<1x32xf32> -> vector<1x32xf32>
    %178 = arith.addf %174, %177 : vector<1x32xf32>
    %c3_148 = arith.constant 3 : index
    %c0_149 = arith.constant 0 : index
    %c0_150 = arith.constant 0 : index
    %179 = vector.load %arg8[%c3_148, %c0_149, %c0_150] : memref<4x1x32xf32, #tpu.memory_space<vmem>>, vector<1x1x32xf32>
    %180 = vector.shape_cast %179 : vector<1x1x32xf32> to vector<1x32xf32>
    %181 = arith.addf %178, %180 : vector<1x32xf32>
    %182 = arith.negf %181 : vector<1x32xf32>
    %183 = math.exp %182 : vector<1x32xf32>
    %cst_151 = arith.constant 1.000000e+00 : f32
    %184 = vector.broadcast %cst_151 : f32 to vector<1x32xf32>
    %185 = arith.addf %184, %183 : vector<1x32xf32>
    %186 = arith.divf %184, %185 : vector<1x32xf32>
    %187 = arith.mulf %160, %127 : vector<1x32xf32>
    %188 = arith.mulf %145, %171 : vector<1x32xf32>
    %189 = arith.addf %187, %188 : vector<1x32xf32>
    %190 = math.tanh %189 : vector<1x32xf32>
    %191 = arith.mulf %186, %190 : vector<1x32xf32>
    %c3_152 = arith.constant 3 : index
    %c0_153 = arith.constant 0 : index
    %192 = vector.load %arg0[%c3_152, %c0_153] : memref<4x32xf32, #tpu.memory_space<vmem>>, vector<1x32xf32>
    %c0_154 = arith.constant 0 : index
    %c0_155 = arith.constant 0 : index
    %c0_156 = arith.constant 0 : index
    %193 = vector.load %arg6[%c0_154, %c0_155, %c0_156] : memref<4x32x32xf32, #tpu.memory_space<vmem>>, vector<1x32x32xf32>
    %194 = vector.shape_cast %193 : vector<1x32x32xf32> to vector<32x32xf32>
    %cst_157 = arith.constant dense<0.000000e+00> : vector<1x32xf32>
    %195 = tpu.matmul %192, %194, %cst_157 {dimension_numbers = #tpu.dot_dimension_numbers<[1], [0], [0], [1], [0, 0, 1, 1], [], []>} : vector<1x32xf32>, vector<32x32xf32>, vector<1x32xf32> -> vector<1x32xf32>
    %c0_158 = arith.constant 0 : index
    %c0_159 = arith.constant 0 : index
    %c0_160 = arith.constant 0 : index
    %196 = vector.load %arg7[%c0_158, %c0_159, %c0_160] : memref<4x32x32xf32, #tpu.memory_space<vmem>>, vector<1x32x32xf32>
    %197 = vector.shape_cast %196 : vector<1x32x32xf32> to vector<32x32xf32>
    %cst_161 = arith.constant dense<0.000000e+00> : vector<1x32xf32>
    %198 = tpu.matmul %191, %197, %cst_161 {dimension_numbers = #tpu.dot_dimension_numbers<[1], [0], [0], [1], [0, 0, 1, 1], [], []>} : vector<1x32xf32>, vector<32x32xf32>, vector<1x32xf32> -> vector<1x32xf32>
    %199 = arith.addf %195, %198 : vector<1x32xf32>
    %c0_162 = arith.constant 0 : index
    %c0_163 = arith.constant 0 : index
    %c0_164 = arith.constant 0 : index
    %200 = vector.load %arg8[%c0_162, %c0_163, %c0_164] : memref<4x1x32xf32, #tpu.memory_space<vmem>>, vector<1x1x32xf32>
    %201 = vector.shape_cast %200 : vector<1x1x32xf32> to vector<1x32xf32>
    %202 = arith.addf %199, %201 : vector<1x32xf32>
    %203 = arith.negf %202 : vector<1x32xf32>
    %204 = math.exp %203 : vector<1x32xf32>
    %cst_165 = arith.constant 1.000000e+00 : f32
    %205 = vector.broadcast %cst_165 : f32 to vector<1x32xf32>
    %206 = arith.addf %205, %204 : vector<1x32xf32>
    %207 = arith.divf %205, %206 : vector<1x32xf32>
    %c1_166 = arith.constant 1 : index
    %c0_167 = arith.constant 0 : index
    %c0_168 = arith.constant 0 : index
    %208 = vector.load %arg6[%c1_166, %c0_167, %c0_168] : memref<4x32x32xf32, #tpu.memory_space<vmem>>, vector<1x32x32xf32>
    %209 = vector.shape_cast %208 : vector<1x32x32xf32> to vector<32x32xf32>
    %cst_169 = arith.constant dense<0.000000e+00> : vector<1x32xf32>
    %210 = tpu.matmul %192, %209, %cst_169 {dimension_numbers = #tpu.dot_dimension_numbers<[1], [0], [0], [1], [0, 0, 1, 1], [], []>} : vector<1x32xf32>, vector<32x32xf32>, vector<1x32xf32> -> vector<1x32xf32>
    %c1_170 = arith.constant 1 : index
    %c0_171 = arith.constant 0 : index
    %c0_172 = arith.constant 0 : index
    %211 = vector.load %arg7[%c1_170, %c0_171, %c0_172] : memref<4x32x32xf32, #tpu.memory_space<vmem>>, vector<1x32x32xf32>
    %212 = vector.shape_cast %211 : vector<1x32x32xf32> to vector<32x32xf32>
    %cst_173 = arith.constant dense<0.000000e+00> : vector<1x32xf32>
    %213 = tpu.matmul %191, %212, %cst_173 {dimension_numbers = #tpu.dot_dimension_numbers<[1], [0], [0], [1], [0, 0, 1, 1], [], []>} : vector<1x32xf32>, vector<32x32xf32>, vector<1x32xf32> -> vector<1x32xf32>
    %214 = arith.addf %210, %213 : vector<1x32xf32>
    %c1_174 = arith.constant 1 : index
    %c0_175 = arith.constant 0 : index
    %c0_176 = arith.constant 0 : index
    %215 = vector.load %arg8[%c1_174, %c0_175, %c0_176] : memref<4x1x32xf32, #tpu.memory_space<vmem>>, vector<1x1x32xf32>
    %216 = vector.shape_cast %215 : vector<1x1x32xf32> to vector<1x32xf32>
    %217 = arith.addf %214, %216 : vector<1x32xf32>
    %218 = arith.negf %217 : vector<1x32xf32>
    %219 = math.exp %218 : vector<1x32xf32>
    %cst_177 = arith.constant 1.000000e+00 : f32
    %220 = vector.broadcast %cst_177 : f32 to vector<1x32xf32>
    %221 = arith.addf %220, %219 : vector<1x32xf32>
    %222 = arith.divf %220, %221 : vector<1x32xf32>
    %c2_178 = arith.constant 2 : index
    %c0_179 = arith.constant 0 : index
    %c0_180 = arith.constant 0 : index
    %223 = vector.load %arg6[%c2_178, %c0_179, %c0_180] : memref<4x32x32xf32, #tpu.memory_space<vmem>>, vector<1x32x32xf32>
    %224 = vector.shape_cast %223 : vector<1x32x32xf32> to vector<32x32xf32>
    %cst_181 = arith.constant dense<0.000000e+00> : vector<1x32xf32>
    %225 = tpu.matmul %192, %224, %cst_181 {dimension_numbers = #tpu.dot_dimension_numbers<[1], [0], [0], [1], [0, 0, 1, 1], [], []>} : vector<1x32xf32>, vector<32x32xf32>, vector<1x32xf32> -> vector<1x32xf32>
    %c2_182 = arith.constant 2 : index
    %c0_183 = arith.constant 0 : index
    %c0_184 = arith.constant 0 : index
    %226 = vector.load %arg7[%c2_182, %c0_183, %c0_184] : memref<4x32x32xf32, #tpu.memory_space<vmem>>, vector<1x32x32xf32>
    %227 = vector.shape_cast %226 : vector<1x32x32xf32> to vector<32x32xf32>
    %cst_185 = arith.constant dense<0.000000e+00> : vector<1x32xf32>
    %228 = tpu.matmul %191, %227, %cst_185 {dimension_numbers = #tpu.dot_dimension_numbers<[1], [0], [0], [1], [0, 0, 1, 1], [], []>} : vector<1x32xf32>, vector<32x32xf32>, vector<1x32xf32> -> vector<1x32xf32>
    %229 = arith.addf %225, %228 : vector<1x32xf32>
    %c2_186 = arith.constant 2 : index
    %c0_187 = arith.constant 0 : index
    %c0_188 = arith.constant 0 : index
    %230 = vector.load %arg8[%c2_186, %c0_187, %c0_188] : memref<4x1x32xf32, #tpu.memory_space<vmem>>, vector<1x1x32xf32>
    %231 = vector.shape_cast %230 : vector<1x1x32xf32> to vector<1x32xf32>
    %232 = arith.addf %229, %231 : vector<1x32xf32>
    %233 = math.tanh %232 : vector<1x32xf32>
    %c3_189 = arith.constant 3 : index
    %c0_190 = arith.constant 0 : index
    %c0_191 = arith.constant 0 : index
    %234 = vector.load %arg6[%c3_189, %c0_190, %c0_191] : memref<4x32x32xf32, #tpu.memory_space<vmem>>, vector<1x32x32xf32>
    %235 = vector.shape_cast %234 : vector<1x32x32xf32> to vector<32x32xf32>
    %cst_192 = arith.constant dense<0.000000e+00> : vector<1x32xf32>
    %236 = tpu.matmul %192, %235, %cst_192 {dimension_numbers = #tpu.dot_dimension_numbers<[1], [0], [0], [1], [0, 0, 1, 1], [], []>} : vector<1x32xf32>, vector<32x32xf32>, vector<1x32xf32> -> vector<1x32xf32>
    %c3_193 = arith.constant 3 : index
    %c0_194 = arith.constant 0 : index
    %c0_195 = arith.constant 0 : index
    %237 = vector.load %arg7[%c3_193, %c0_194, %c0_195] : memref<4x32x32xf32, #tpu.memory_space<vmem>>, vector<1x32x32xf32>
    %238 = vector.shape_cast %237 : vector<1x32x32xf32> to vector<32x32xf32>
    %cst_196 = arith.constant dense<0.000000e+00> : vector<1x32xf32>
    %239 = tpu.matmul %191, %238, %cst_196 {dimension_numbers = #tpu.dot_dimension_numbers<[1], [0], [0], [1], [0, 0, 1, 1], [], []>} : vector<1x32xf32>, vector<32x32xf32>, vector<1x32xf32> -> vector<1x32xf32>
    %240 = arith.addf %236, %239 : vector<1x32xf32>
    %c3_197 = arith.constant 3 : index
    %c0_198 = arith.constant 0 : index
    %c0_199 = arith.constant 0 : index
    %241 = vector.load %arg8[%c3_197, %c0_198, %c0_199] : memref<4x1x32xf32, #tpu.memory_space<vmem>>, vector<1x1x32xf32>
    %242 = vector.shape_cast %241 : vector<1x1x32xf32> to vector<1x32xf32>
    %243 = arith.addf %240, %242 : vector<1x32xf32>
    %244 = arith.negf %243 : vector<1x32xf32>
    %245 = math.exp %244 : vector<1x32xf32>
    %cst_200 = arith.constant 1.000000e+00 : f32
    %246 = vector.broadcast %cst_200 : f32 to vector<1x32xf32>
    %247 = arith.addf %246, %245 : vector<1x32xf32>
    %248 = arith.divf %246, %247 : vector<1x32xf32>
    %249 = arith.mulf %222, %189 : vector<1x32xf32>
    %250 = arith.mulf %207, %233 : vector<1x32xf32>
    %251 = arith.addf %249, %250 : vector<1x32xf32>
    %252 = math.tanh %251 : vector<1x32xf32>
    %253 = arith.mulf %248, %252 : vector<1x32xf32>
    %c0_201 = arith.constant 0 : index
    %c0_202 = arith.constant 0 : index
    %254 = vector.load %arg19[%c0_201, %c0_202] : memref<1x32xf32, #tpu.memory_space<vmem>>, vector<1x32xf32>
    tpu.vector_store %arg19[%c0_201, %c0_202], %253 {strides = array<i32>} : memref<1x32xf32, #tpu.memory_space<vmem>>, vector<1x32xf32>,
    %c0_203 = arith.constant 0 : index
    %c0_204 = arith.constant 0 : index
    %255 = vector.load %arg20[%c0_203, %c0_204] : memref<1x32xf32, #tpu.memory_space<vmem>>, vector<1x32xf32>
    tpu.vector_store %arg20[%c0_203, %c0_204], %251 {strides = array<i32>} : memref<1x32xf32, #tpu.memory_space<vmem>>, vector<1x32xf32>,
    %c0_205 = arith.constant 0 : index
    %c0_206 = arith.constant 0 : index
    %256 = vector.load %arg9[%c0_205, %c0_206] : memref<32x32xf32, #tpu.memory_space<vmem>>, vector<32x32xf32>
    %cst_207 = arith.constant dense<0.000000e+00> : vector<1x32xf32>
    %257 = tpu.matmul %253, %256, %cst_207 {dimension_numbers = #tpu.dot_dimension_numbers<[1], [0], [0], [1], [0, 0, 1, 1], [], []>} : vector<1x32xf32>, vector<32x32xf32>, vector<1x32xf32> -> vector<1x32xf32>
    %c0_208 = arith.constant 0 : index
    %c0_209 = arith.constant 0 : index
    %258 = vector.load %arg10[%c0_208, %c0_209] : memref<1x32xf32, #tpu.memory_space<vmem>>, vector<1x32xf32>
    %259 = arith.addf %257, %258 : vector<1x32xf32>
    %c0_210 = arith.constant 0 : index
    %c0_211 = arith.constant 0 : index
    %260 = vector.load %arg11[%c0_210, %c0_211] : memref<16x32xf32, #tpu.memory_space<vmem>>, vector<16x32xf32>
    %cst_212 = arith.constant dense<0.000000e+00> : vector<1x32xf32>
    %261 = tpu.matmul %2, %260, %cst_212 {dimension_numbers = #tpu.dot_dimension_numbers<[1], [0], [0], [1], [0, 0, 1, 1], [], []>} : vector<1x16xf32>, vector<16x32xf32>, vector<1x32xf32> -> vector<1x32xf32>
    %c0_213 = arith.constant 0 : index
    %c0_214 = arith.constant 0 : index
    %262 = vector.load %arg12[%c0_213, %c0_214] : memref<1x32xf32, #tpu.memory_space<vmem>>, vector<1x32xf32>
    %263 = arith.addf %261, %262 : vector<1x32xf32>
    %264 = arith.addf %259, %263 : vector<1x32xf32>
    %c0_215 = arith.constant 0 : index
    %c0_216 = arith.constant 0 : index
    %265 = vector.load %arg3[%c0_215, %c0_216] : memref<16x32xf32, #tpu.memory_space<vmem>>, vector<16x32xf32>
    %cst_217 = arith.constant dense<0.000000e+00> : vector<1x16xf32>
    %266 = tpu.matmul %264, %265, %cst_217 {dimension_numbers = #tpu.dot_dimension_numbers<[1], [1], [0], [0], [0, 0, 1, 0], [], []>} : vector<1x32xf32>, vector<16x32xf32>, vector<1x16xf32> -> vector<1x16xf32>
    %cst_218 = arith.constant dense<0xFF800000> : vector<1xf32>
    %267 = vector.multi_reduction <maximumf>, %266, %cst_218 [1] : vector<1x16xf32> to vector<1xf32>
    %268 = vector.shape_cast %267 : vector<1xf32> to vector<1x1xf32>
    %269 = vector.broadcast %268 : vector<1x1xf32> to vector<1x16xf32>
    %270 = arith.subf %266, %269 : vector<1x16xf32>
    %271 = math.exp %270 : vector<1x16xf32>
    %cst_219 = arith.constant dense<0.000000e+00> : vector<1xf32>
    %272 = vector.multi_reduction <add>, %271, %cst_219 [1] : vector<1x16xf32> to vector<1xf32>
    %273 = vector.shape_cast %272 : vector<1xf32> to vector<1x1xf32>
    %274 = vector.broadcast %273 : vector<1x1xf32> to vector<1x16xf32>
    %275 = arith.divf %271, %274 : vector<1x16xf32>
    %c0_220 = arith.constant 0 : index
    %c0_221 = arith.constant 0 : index
    %276 = vector.load %arg22[%c0_220, %c0_221] : memref<1x16xf32, #tpu.memory_space<vmem>>, vector<1x16xf32>
    tpu.vector_store %arg22[%c0_220, %c0_221], %275 {strides = array<i32>} : memref<1x16xf32, #tpu.memory_space<vmem>>, vector<1x16xf32>,
    %cst_222 = arith.constant dense<0.000000e+00> : vector<1x32xf32>
    %277 = tpu.matmul %275, %265, %cst_222 {dimension_numbers = #tpu.dot_dimension_numbers<[1], [0], [0], [1], [0, 0, 1, 1], [], []>} : vector<1x16xf32>, vector<16x32xf32>, vector<1x32xf32> -> vector<1x32xf32>
    %c0_223 = arith.constant 0 : index
    %c0_224 = arith.constant 0 : index
    %278 = vector.load %arg13[%c0_223, %c0_224] : memref<32x32xf32, #tpu.memory_space<vmem>>, vector<32x32xf32>
    %cst_225 = arith.constant dense<0.000000e+00> : vector<1x32xf32>
    %279 = tpu.matmul %253, %278, %cst_225 {dimension_numbers = #tpu.dot_dimension_numbers<[1], [0], [0], [1], [0, 0, 1, 1], [], []>} : vector<1x32xf32>, vector<32x32xf32>, vector<1x32xf32> -> vector<1x32xf32>
    %c0_226 = arith.constant 0 : index
    %c0_227 = arith.constant 0 : index
    %280 = vector.load %arg14[%c0_226, %c0_227] : memref<32x32xf32, #tpu.memory_space<vmem>>, vector<32x32xf32>
    %cst_228 = arith.constant dense<0.000000e+00> : vector<1x32xf32>
    %281 = tpu.matmul %277, %280, %cst_228 {dimension_numbers = #tpu.dot_dimension_numbers<[1], [0], [0], [1], [0, 0, 1, 1], [], []>} : vector<1x32xf32>, vector<32x32xf32>, vector<1x32xf32> -> vector<1x32xf32>
    %282 = arith.addf %279, %281 : vector<1x32xf32>
    %c0_229 = arith.constant 0 : index
    %c0_230 = arith.constant 0 : index
    %283 = vector.load %arg15[%c0_229, %c0_230] : memref<1x32xf32, #tpu.memory_space<vmem>>, vector<1x32xf32>
    %284 = arith.addf %282, %283 : vector<1x32xf32>
    %285 = math.tanh %284 : vector<1x32xf32>
    %c0_231 = arith.constant 0 : index
    %c0_232 = arith.constant 0 : index
    %286 = vector.load %arg16[%c0_231, %c0_232] : memref<32x128xf32, #tpu.memory_space<vmem>>, vector<32x128xf32>
    %cst_233 = arith.constant dense<0.000000e+00> : vector<1x128xf32>
    %287 = tpu.matmul %285, %286, %cst_233 {dimension_numbers = #tpu.dot_dimension_numbers<[1], [0], [0], [1], [0, 0, 1, 1], [], []>} : vector<1x32xf32>, vector<32x128xf32>, vector<1x128xf32> -> vector<1x128xf32>
    %c0_234 = arith.constant 0 : index
    %c0_235 = arith.constant 0 : index
    %288 = vector.load %arg17[%c0_234, %c0_235] : memref<1x128xf32, #tpu.memory_space<vmem>>, vector<1x128xf32>
    %289 = arith.addf %287, %288 : vector<1x128xf32>
    %cst_236 = arith.constant dense<0xFF800000> : vector<1xf32>
    %290 = vector.multi_reduction <maximumf>, %289, %cst_236 [1] : vector<1x128xf32> to vector<1xf32>
    %291 = vector.shape_cast %290 : vector<1xf32> to vector<1x1xf32>
    %292 = vector.broadcast %291 : vector<1x1xf32> to vector<1x128xf32>
    %293 = arith.subf %289, %292 : vector<1x128xf32>
    %294 = math.exp %293 : vector<1x128xf32>
    %cst_237 = arith.constant dense<0.000000e+00> : vector<1xf32>
    %295 = vector.multi_reduction <add>, %294, %cst_237 [1] : vector<1x128xf32> to vector<1xf32>
    %296 = vector.shape_cast %295 : vector<1xf32> to vector<1x1xf32>
    %297 = math.log %296 : vector<1x1xf32>
    %298 = arith.addf %291, %297 : vector<1x1xf32>
    %299 = vector.broadcast %298 : vector<1x1xf32> to vector<1x128xf32>
    %300 = arith.subf %289, %299 : vector<1x128xf32>
    %c0_238 = arith.constant 0 : index
    %c0_239 = arith.constant 0 : index
    %301 = vector.load %arg18[%c0_238, %c0_239] : memref<1x128xf32, #tpu.memory_space<vmem>>, vector<1x128xf32>
    tpu.vector_store %arg18[%c0_238, %c0_239], %300 {strides = array<i32>} : memref<1x128xf32, #tpu.memory_space<vmem>>, vector<1x128xf32>,
    return
  }
}

</mosaic_0001>

<llo_original>
// kernel: tpu_custom_call.1
$region0: #{tpu_custom_call.1}
  #allocation0 [shape = 'u32[]', space=smem, size = 0x4, offset = 0x4, fixed_abs, tag = 'smem constant byte address 0x4 - core index']
  #allocation1 [shape = 'u32[144,128]{1,0:T(1,128)}', space=vmem, size = 0x12000, scoped, tag = 'internal scratch']
  %s0 = inlined_call_operand.hbm [shape: f32[4,32], index: 0, kind: input, shape index: {}]
  %s1 = inlined_call_operand.hbm [shape: f32[1,32], index: 1, kind: input, shape index: {}]
  %s2 = inlined_call_operand.hbm [shape: f32[1,32], index: 2, kind: input, shape index: {}]
  %s3 = inlined_call_operand.hbm [shape: f32[16,32], index: 3, kind: input, shape index: {}]
  %s4 = inlined_call_operand.hbm [shape: f32[1,16], index: 4, kind: input, shape index: {}]
  %s5 = inlined_call_operand.hbm [shape: f32[1,16], index: 5, kind: input, shape index: {}]
  %s6 = inlined_call_operand.hbm [shape: f32[4,32,32], index: 6, kind: input, shape index: {}]
  %s7 = inlined_call_operand.hbm [shape: f32[4,32,32], index: 7, kind: input, shape index: {}]
  %s8 = inlined_call_operand.vmem [shape: f32[4,1,32], index: 8, kind: input, shape index: {}]
  %s9 = inlined_call_operand.hbm [shape: f32[32,32], index: 9, kind: input, shape index: {}]
  %s10 = inlined_call_operand.hbm [shape: f32[1,32], index: 10, kind: input, shape index: {}]
  %s11 = inlined_call_operand.vmem [shape: f32[16,32], index: 11, kind: input, shape index: {}]
  %s12 = inlined_call_operand.vmem [shape: f32[1,32], index: 12, kind: input, shape index: {}]
  %s13 = inlined_call_operand.hbm [shape: f32[32,32], index: 13, kind: input, shape index: {}]
  %s14 = inlined_call_operand.hbm [shape: f32[32,32], index: 14, kind: input, shape index: {}]
  %s15 = inlined_call_operand.vmem [shape: f32[1,32], index: 15, kind: input, shape index: {}]
  %s16 = inlined_call_operand.hbm [shape: f32[32,128], index: 16, kind: input, shape index: {}]
  %s17 = inlined_call_operand.vmem [shape: f32[1,128], index: 17, kind: input, shape index: {}]
  %s18 = inlined_call_operand.hbm [shape: f32[1,128], index: 18, kind: output, shape index: {0}]
  %s19 = inlined_call_operand.hbm [shape: f32[1,32], index: 19, kind: output, shape index: {1}]
  %s20 = inlined_call_operand.hbm [shape: f32[1,32], index: 20, kind: output, shape index: {2}]
  %s21 = inlined_call_operand.hbm [shape: f32[1,16], index: 21, kind: output, shape index: {3}]
  %s22 = inlined_call_operand.hbm [shape: f32[1,16], index: 22, kind: output, shape index: {4}]
  %23 = xla_tuple %s18, %s19, %s20, %s21, %s22
  %s24 = sld [smem:[#allocation0]]
  $region166: #{tpu_custom_call.1} parent=0
    _
  %s26 = ssub.s32 1, %s24
  %s27 = scalar_select 0, %s26, %s24
  $region1: #{tpu_custom_call.1} parent=0
    #allocation2 [shape = 'u8[2048]{0}', space=vmem, size = 0x800, scoped, tag = 'input window, operand 0, single buffered']
    #allocation3 [shape = 's32[1]{0}', space=sflag, size = 0x4, scoped, tag = 'scoped memory for tpu_custom_call.1']
    #allocation4 [shape = 's32[1]{0}', space=sflag, size = 0x4, scoped, tag = 'scoped memory for tpu_custom_call.1']
    #allocation5 [shape = 'u8[512]{0}', space=vmem, size = 0x400, scoped, tag = 'input window, operand 1, single buffered']
    #allocation6 [shape = 's32[1]{0}', space=sflag, size = 0x4, scoped, tag = 'scoped memory for tpu_custom_call.1']
    #allocation7 [shape = 'u8[512]{0}', space=vmem, size = 0x400, scoped, tag = 'input window, operand 2, single buffered']
    #allocation8 [shape = 'u8[8192]{0}', space=vmem, size = 0x2000, scoped, tag = 'input window, operand 3, single buffered']
    #allocation9 [shape = 's32[1]{0}', space=sflag, size = 0x4, scoped, tag = 'scoped memory for tpu_custom_call.1']
    #allocation10 [shape = 'u8[512]{0}', space=vmem, size = 0x400, scoped, tag = 'input window, operand 4, single buffered']
    #allocation11 [shape = 'u8[512]{0}', space=vmem, size = 0x400, scoped, tag = 'input window, operand 5, single buffered']
    #allocation12 [shape = 's32[1]{0}', space=sflag, size = 0x4, scoped, tag = 'scoped memory for tpu_custom_call.1']
    #allocation13 [shape = 'u8[65536]{0}', space=vmem, size = 0x10000, scoped, tag = 'input window, operand 6, single buffered']
    #allocation14 [shape = 'u8[65536]{0}', space=vmem, size = 0x10000, scoped, tag = 'input window, operand 7, single buffered']
    #allocation15 [shape = 's32[1]{0}', space=sflag, size = 0x4, scoped, tag = 'scoped memory for tpu_custom_call.1']
    #allocation16 [shape = 'u8[16384]{0}', space=vmem, size = 0x4000, scoped, tag = 'input window, operand 9, single buffered']
    #allocation17 [shape = 'u8[512]{0}', space=vmem, size = 0x400, scoped, tag = 'input window, operand 10, single buffered']
    #allocation18 [shape = 's32[1]{0}', space=sflag, size = 0x4, scoped, tag = 'scoped memory for tpu_custom_call.1']
    #allocation19 [shape = 'u8[16384]{0}', space=vmem, size = 0x4000, scoped, tag = 'input window, operand 13, single buffered']
    #allocation20 [shape = 'u8[16384]{0}', space=vmem, size = 0x4000, scoped, tag = 'input window, operand 14, single buffered']
    #allocation21 [shape = 's32[1]{0}', space=sflag, size = 0x4, scoped, tag = 'scoped memory for tpu_custom_call.1']
    #allocation22 [shape = 'u8[16384]{0}', space=vmem, size = 0x4000, scoped, tag = 'input window, operand 16, single buffered']
    #allocation23 [shape = 'u8[512]{0}', space=vmem, size = 0x400, scoped, tag = 'output window, operand 0, single buffered']
    #allocation24 [shape = 'u8[512]{0}', space=vmem, size = 0x400, scoped, tag = 'output window, operand 1, single buffered']
    #allocation25 [shape = 's32[1]{0}', space=sflag, size = 0x4, scoped, tag = 'scoped memory for tpu_custom_call.1']
    #allocation26 [shape = 'u8[512]{0}', space=vmem, size = 0x400, scoped, tag = 'output window, operand 2, single buffered']
    #allocation27 [shape = 'u8[512]{0}', space=vmem, size = 0x400, scoped, tag = 'output window, operand 3, single buffered']
    #allocation28 [shape = 's32[1]{0}', space=sflag, size = 0x4, scoped, tag = 'scoped memory for tpu_custom_call.1']
    #allocation29 [shape = 'u8[512]{0}', space=vmem, size = 0x400, scoped, tag = 'output window, operand 4, single buffered']
    %28 = vsyncpa [#allocation3], 0
    %29 = vsyncpa [#allocation6], 0
    %30 = vsyncpa [#allocation9], 0
    %31 = vsyncpa [#allocation12], 0
    %32 = vsyncpa [#allocation15], 0
    %33 = vsyncpa [#allocation18], 0
    %34 = vsyncpa [#allocation21], 0
    %35 = vsyncpa [#allocation4], 0
    %36 = vsyncpa [#allocation25], 0
    %37 = vsyncpa [#allocation28], 0
    // Predicated region
    $region2: #{tpu_custom_call.1} parent=1 // pred_check
      _
    $region3: #{tpu_custom_call.1} parent=1 // pred_check_branch
      %39 = sbr.rel (0) target = $region5
    $region4: #{tpu_custom_call.1} parent=1 // pred_region
      %s41 = ssub.s32 64, 64
      %42 = vsyncadd [#allocation3], %s41
      %s44 = sshll.u32 [#allocation2], 4
      %s45 = int_to_ptr.vmem [resolvable:$true] %s44
      %47 = dma.hbm_to_vmem [thread:$0]  %s0, 64, %s45, [#allocation3]
    $region5: #{tpu_custom_call.1} parent=1 // pred_fallthru
      _
    // Predicated region
    $region6: #{tpu_custom_call.1} parent=1 // pred_check
      _
    $region7: #{tpu_custom_call.1} parent=1 // pred_check_branch
      %49 = sbr.rel (0) target = $region9
    $region8: #{tpu_custom_call.1} parent=1 // pred_region
      %s51 = ssub.s32 16, 16
      %52 = vsyncadd [#allocation6], %s51
      %s54 = sshll.u32 [#allocation5], 4
      %s55 = int_to_ptr.vmem [resolvable:$true] %s54
      %57 = dma.hbm_to_vmem [thread:$0]  %s1, 16, %s55, [#allocation6]
    $region9: #{tpu_custom_call.1} parent=1 // pred_fallthru
      _
    // Predicated region
    $region10: #{tpu_custom_call.1} parent=1 // pred_check
      _
    $region11: #{tpu_custom_call.1} parent=1 // pred_check_branch
      %59 = sbr.rel (0) target = $region13
    $region12: #{tpu_custom_call.1} parent=1 // pred_region
      %s61 = ssub.s32 16, 16
      %62 = vsyncadd [#allocation6], %s61
      %s64 = sshll.u32 [#allocation7], 4
      %s65 = int_to_ptr.vmem [resolvable:$true] %s64
      %67 = dma.hbm_to_vmem [thread:$0]  %s2, 16, %s65, [#allocation6]
    $region13: #{tpu_custom_call.1} parent=1 // pred_fallthru
      _
    // Predicated region
    $region14: #{tpu_custom_call.1} parent=1 // pred_check
      _
    $region15: #{tpu_custom_call.1} parent=1 // pred_check_branch
      %69 = sbr.rel (0) target = $region17
    $region16: #{tpu_custom_call.1} parent=1 // pred_region
      %s71 = ssub.s32 256, 256
      %72 = vsyncadd [#allocation9], %s71
      %s73 = sshll.u32 [#allocation8], 4
      %s74 = int_to_ptr.vmem [resolvable:$true] %s73
      %79 = dma.hbm_to_vmem [thread:$0]  %s3, 256, %s74, [#allocation9], 128, 128, 8
    $region17: #{tpu_custom_call.1} parent=1 // pred_fallthru
      _
    // Predicated region
    $region18: #{tpu_custom_call.1} parent=1 // pred_check
      _
    $region19: #{tpu_custom_call.1} parent=1 // pred_check_branch
      %81 = sbr.rel (0) target = $region21
    $region20: #{tpu_custom_call.1} parent=1 // pred_region
      %s83 = ssub.s32 16, 16
      %84 = vsyncadd [#allocation9], %s83
      %s86 = sshll.u32 [#allocation10], 4
      %s87 = int_to_ptr.vmem [resolvable:$true] %s86
      %89 = dma.hbm_to_vmem [thread:$0]  %s4, 16, %s87, [#allocation9]
    $region21: #{tpu_custom_call.1} parent=1 // pred_fallthru
      _
    // Predicated region
    $region22: #{tpu_custom_call.1} parent=1 // pred_check
      _
    $region23: #{tpu_custom_call.1} parent=1 // pred_check_branch
      %91 = sbr.rel (0) target = $region25
    $region24: #{tpu_custom_call.1} parent=1 // pred_region
      %s93 = ssub.s32 16, 16
      %94 = vsyncadd [#allocation12], %s93
      %s96 = sshll.u32 [#allocation11], 4
      %s97 = int_to_ptr.vmem [resolvable:$true] %s96
      %99 = dma.hbm_to_vmem [thread:$0]  %s5, 16, %s97, [#allocation12]
    $region25: #{tpu_custom_call.1} parent=1 // pred_fallthru
      _
    // Predicated region
    $region26: #{tpu_custom_call.1} parent=1 // pred_check
      _
    $region27: #{tpu_custom_call.1} parent=1 // pred_check_branch
      %101 = sbr.rel (0) target = $region29
    $region28: #{tpu_custom_call.1} parent=1 // pred_region
      %s103 = ssub.s32 2048, 2048
      %104 = vsyncadd [#allocation12], %s103
      %s105 = sshll.u32 [#allocation13], 4
      %s106 = int_to_ptr.vmem [resolvable:$true] %s105
      %111 = dma.hbm_to_vmem [thread:$0]  %s6, 2048, %s106, [#allocation12], 128, 128, 8
    $region29: #{tpu_custom_call.1} parent=1 // pred_fallthru
      _
    // Predicated region
    $region30: #{tpu_custom_call.1} parent=1 // pred_check
      _
    $region31: #{tpu_custom_call.1} parent=1 // pred_check_branch
      %113 = sbr.rel (0) target = $region33
    $region32: #{tpu_custom_call.1} parent=1 // pred_region
      %s115 = ssub.s32 2048, 2048
      %116 = vsyncadd [#allocation15], %s115
      %s117 = sshll.u32 [#allocation14], 4
      %s118 = int_to_ptr.vmem [resolvable:$true] %s117
      %123 = dma.hbm_to_vmem [thread:$0]  %s7, 2048, %s118, [#allocation15], 128, 128, 8
    $region33: #{tpu_custom_call.1} parent=1 // pred_fallthru
      _
    // Predicated region
    $region34: #{tpu_custom_call.1} parent=1 // pred_check
      _
    $region35: #{tpu_custom_call.1} parent=1 // pred_check_branch
      %125 = sbr.rel (0) target = $region37
    $region36: #{tpu_custom_call.1} parent=1 // pred_region
      _
    $region37: #{tpu_custom_call.1} parent=1 // pred_fallthru
      _
    // Predicated region
    $region38: #{tpu_custom_call.1} parent=1 // pred_check
      _
    $region39: #{tpu_custom_call.1} parent=1 // pred_check_branch
      %127 = sbr.rel (0) target = $region41
    $region40: #{tpu_custom_call.1} parent=1 // pred_region
      %s129 = ssub.s32 512, 512
      %130 = vsyncadd [#allocation15], %s129
      %s131 = sshll.u32 [#allocation16], 4
      %s132 = int_to_ptr.vmem [resolvable:$true] %s131
      %137 = dma.hbm_to_vmem [thread:$0]  %s9, 512, %s132, [#allocation15], 128, 128, 8
    $region41: #{tpu_custom_call.1} parent=1 // pred_fallthru
      _
    // Predicated region
    $region42: #{tpu_custom_call.1} parent=1 // pred_check
      _
    $region43: #{tpu_custom_call.1} parent=1 // pred_check_branch
      %139 = sbr.rel (0) target = $region45
    $region44: #{tpu_custom_call.1} parent=1 // pred_region
      %s141 = ssub.s32 16, 16
      %142 = vsyncadd [#allocation18], %s141
      %s144 = sshll.u32 [#allocation17], 4
      %s145 = int_to_ptr.vmem [resolvable:$true] %s144
      %147 = dma.hbm_to_vmem [thread:$0]  %s10, 16, %s145, [#allocation18]
    $region45: #{tpu_custom_call.1} parent=1 // pred_fallthru
      _
    // Predicated region
    $region46: #{tpu_custom_call.1} parent=1 // pred_check
      _
    $region47: #{tpu_custom_call.1} parent=1 // pred_check_branch
      %149 = sbr.rel (0) target = $region49
    $region48: #{tpu_custom_call.1} parent=1 // pred_region
      _
    $region49: #{tpu_custom_call.1} parent=1 // pred_fallthru
      _
    // Predicated region
    $region50: #{tpu_custom_call.1} parent=1 // pred_check
      _
    $region51: #{tpu_custom_call.1} parent=1 // pred_check_branch
      %151 = sbr.rel (0) target = $region53
    $region52: #{tpu_custom_call.1} parent=1 // pred_region
      _
    $region53: #{tpu_custom_call.1} parent=1 // pred_fallthru
      _
    // Predicated region
    $region54: #{tpu_custom_call.1} parent=1 // pred_check
      _
    $region55: #{tpu_custom_call.1} parent=1 // pred_check_branch
      %153 = sbr.rel (0) target = $region57
    $region56: #{tpu_custom_call.1} parent=1 // pred_region
      %s155 = ssub.s32 512, 512
      %156 = vsyncadd [#allocation18], %s155
      %s157 = sshll.u32 [#allocation19], 4
      %s158 = int_to_ptr.vmem [resolvable:$true] %s157
      %163 = dma.hbm_to_vmem [thread:$0]  %s13, 512, %s158, [#allocation18], 128, 128, 8
    $region57: #{tpu_custom_call.1} parent=1 // pred_fallthru
      _
    // Predicated region
    $region58: #{tpu_custom_call.1} parent=1 // pred_check
      _
    $region59: #{tpu_custom_call.1} parent=1 // pred_check_branch
      %165 = sbr.rel (0) target = $region61
    $region60: #{tpu_custom_call.1} parent=1 // pred_region
      %s167 = ssub.s32 512, 512
      %168 = vsyncadd [#allocation21], %s167
      %s169 = sshll.u32 [#allocation20], 4
      %s170 = int_to_ptr.vmem [resolvable:$true] %s169
      %175 = dma.hbm_to_vmem [thread:$0]  %s14, 512, %s170, [#allocation21], 128, 128, 8
    $region61: #{tpu_custom_call.1} parent=1 // pred_fallthru
      _
    // Predicated region
    $region62: #{tpu_custom_call.1} parent=1 // pred_check
      _
    $region63: #{tpu_custom_call.1} parent=1 // pred_check_branch
      %177 = sbr.rel (0) target = $region65
    $region64: #{tpu_custom_call.1} parent=1 // pred_region
      _
    $region65: #{tpu_custom_call.1} parent=1 // pred_fallthru
      _
    // Predicated region
    $region66: #{tpu_custom_call.1} parent=1 // pred_check
      _
    $region67: #{tpu_custom_call.1} parent=1 // pred_check_branch
      %179 = sbr.rel (0) target = $region69
    $region68: #{tpu_custom_call.1} parent=1 // pred_region
      %s181 = ssub.s32 512, 512
      %182 = vsyncadd [#allocation21], %s181
      %s183 = sshll.u32 [#allocation22], 4
      %s184 = int_to_ptr.vmem [resolvable:$true] %s183
      %189 = dma.hbm_to_vmem [thread:$0]  %s16, 512, %s184, [#allocation21], 128, 128, 8
    $region69: #{tpu_custom_call.1} parent=1 // pred_fallthru
      _
    // Predicated region
    $region70: #{tpu_custom_call.1} parent=1 // pred_check
      _
    $region71: #{tpu_custom_call.1} parent=1 // pred_check_branch
      %191 = sbr.rel (0) target = $region73
    $region72: #{tpu_custom_call.1} parent=1 // pred_region
      _
    $region73: #{tpu_custom_call.1} parent=1 // pred_fallthru
      _
    // Predicated region
    $region74: #{tpu_custom_call.1} parent=1 // pred_check
      _
    $region75: #{tpu_custom_call.1} parent=1 // pred_check_branch
      %193 = sbr.rel (0) target = $region77
    $region76: #{tpu_custom_call.1} parent=1 // pred_region
      %194 = dma.done [#allocation3], 64
    $region77: #{tpu_custom_call.1} parent=1 // pred_fallthru
      _
    // Predicated region
    $region78: #{tpu_custom_call.1} parent=1 // pred_check
      _
    $region79: #{tpu_custom_call.1} parent=1 // pred_check_branch
      %196 = sbr.rel (0) target = $region81
    $region80: #{tpu_custom_call.1} parent=1 // pred_region
      %197 = dma.done [#allocation6], 16
    $region81: #{tpu_custom_call.1} parent=1 // pred_fallthru
      _
    // Predicated region
    $region82: #{tpu_custom_call.1} parent=1 // pred_check
      _
    $region83: #{tpu_custom_call.1} parent=1 // pred_check_branch
      %199 = sbr.rel (0) target = $region85
    $region84: #{tpu_custom_call.1} parent=1 // pred_region
      %200 = dma.done [#allocation6], 16
    $region85: #{tpu_custom_call.1} parent=1 // pred_fallthru
      _
    // Predicated region
    $region86: #{tpu_custom_call.1} parent=1 // pred_check
      _
    $region87: #{tpu_custom_call.1} parent=1 // pred_check_branch
      %202 = sbr.rel (0) target = $region89
    $region88: #{tpu_custom_call.1} parent=1 // pred_region
      %203 = dma.done [#allocation9], 256
    $region89: #{tpu_custom_call.1} parent=1 // pred_fallthru
      _
    // Predicated region
    $region90: #{tpu_custom_call.1} parent=1 // pred_check
      _
    $region91: #{tpu_custom_call.1} parent=1 // pred_check_branch
      %205 = sbr.rel (0) target = $region93
    $region92: #{tpu_custom_call.1} parent=1 // pred_region
      %206 = dma.done [#allocation9], 16
    $region93: #{tpu_custom_call.1} parent=1 // pred_fallthru
      _
    // Predicated region
    $region94: #{tpu_custom_call.1} parent=1 // pred_check
      _
    $region95: #{tpu_custom_call.1} parent=1 // pred_check_branch
      %208 = sbr.rel (0) target = $region97
    $region96: #{tpu_custom_call.1} parent=1 // pred_region
      %209 = dma.done [#allocation12], 16
    $region97: #{tpu_custom_call.1} parent=1 // pred_fallthru
      _
    // Predicated region
    $region98: #{tpu_custom_call.1} parent=1 // pred_check
      _
    $region99: #{tpu_custom_call.1} parent=1 // pred_check_branch
      %211 = sbr.rel (0) target = $region101
    $region100: #{tpu_custom_call.1} parent=1 // pred_region
      %212 = dma.done [#allocation12], 2048
    $region101: #{tpu_custom_call.1} parent=1 // pred_fallthru
      _
    // Predicated region
    $region102: #{tpu_custom_call.1} parent=1 // pred_check
      _
    $region103: #{tpu_custom_call.1} parent=1 // pred_check_branch
      %214 = sbr.rel (0) target = $region105
    $region104: #{tpu_custom_call.1} parent=1 // pred_region
      %215 = dma.done [#allocation15], 2048
    $region105: #{tpu_custom_call.1} parent=1 // pred_fallthru
      _
    // Predicated region
    $region106: #{tpu_custom_call.1} parent=1 // pred_check
      _
    $region107: #{tpu_custom_call.1} parent=1 // pred_check_branch
      %217 = sbr.rel (0) target = $region109
    $region108: #{tpu_custom_call.1} parent=1 // pred_region
      %218 = dma.done [#allocation15], 512
    $region109: #{tpu_custom_call.1} parent=1 // pred_fallthru
      _
    // Predicated region
    $region110: #{tpu_custom_call.1} parent=1 // pred_check
      _
    $region111: #{tpu_custom_call.1} parent=1 // pred_check_branch
      %220 = sbr.rel (0) target = $region113
    $region112: #{tpu_custom_call.1} parent=1 // pred_region
      %221 = dma.done [#allocation18], 16
    $region113: #{tpu_custom_call.1} parent=1 // pred_fallthru
      _
    // Predicated region
    $region114: #{tpu_custom_call.1} parent=1 // pred_check
      _
    $region115: #{tpu_custom_call.1} parent=1 // pred_check_branch
      %223 = sbr.rel (0) target = $region117
    $region116: #{tpu_custom_call.1} parent=1 // pred_region
      %224 = dma.done [#allocation18], 512
    $region117: #{tpu_custom_call.1} parent=1 // pred_fallthru
      _
    // Predicated region
    $region118: #{tpu_custom_call.1} parent=1 // pred_check
      _
    $region119: #{tpu_custom_call.1} parent=1 // pred_check_branch
      %226 = sbr.rel (0) target = $region121
    $region120: #{tpu_custom_call.1} parent=1 // pred_region
      %227 = dma.done [#allocation21], 512
    $region121: #{tpu_custom_call.1} parent=1 // pred_fallthru
      _
    // Predicated region
    $region122: #{tpu_custom_call.1} parent=1 // pred_check
      _
    $region123: #{tpu_custom_call.1} parent=1 // pred_check_branch
      %229 = sbr.rel (0) target = $region125
    $region124: #{tpu_custom_call.1} parent=1 // pred_region
      %230 = dma.done [#allocation21], 512
    $region125: #{tpu_custom_call.1} parent=1 // pred_fallthru
      _
    %v231 = vld [vmem:[#allocation10] sm:$0x1]
    %v232 = vld [vmem:[#allocation11] sm:$0x1]
    %v233 = vadd.f32 %v231, %v232
    %vm234 = vcmask 122880
    %235 = vst.msk [vmem:[#allocation27] sm:$0x1] %vm234, %v233
    %v236 = vld [vmem:[#allocation5] sm:$0x1]
    %v237 = vld [vmem:[#allocation7] sm:$0x1]
    %v238 = vld [vmem:[#allocation2] sm:$0x1]
    %v239 = vld [vmem:[#allocation13] sm:$0xff]
    %v240 = vld [vmem:[#allocation13 + $0x8] sm:$0xff]
    %v241 = vld [vmem:[#allocation13 + $0x10] sm:$0xff]
    %v242 = vld [vmem:[#allocation13 + $0x18] sm:$0xff]
    %v243 = vld [vmem:[#allocation14] sm:$0xff]
    %v244 = vld [vmem:[#allocation14 + $0x8] sm:$0xff]
    %v245 = vld [vmem:[#allocation14 + $0x10] sm:$0xff]
    %v246 = vld [vmem:[#allocation14 + $0x18] sm:$0xff]
    %vm247 = vcmask 261120
    %v249 = vsel %vm247, %v236, 0
    %251 = vmatprep.subr.mxu0 0.0
    %252 = vmatpush1.msra.mxu0 0.0
    %253 = vmatprep.subr.mxu0 0.0
    %254 = vmatpush1.msra.mxu0 0.0
    %255 = vmatprep.subr.mxu0 0.0
    %256 = vmatpush1.msra.mxu0 0.0
    %257 = vmatprep.subr.mxu0 0.0
    %258 = vmatpush1.msra.mxu0 0.0
    %259 = vmatprep.subr.mxu0 0.0
    %260 = vmatpush1.msra.mxu0 0.0
    %261 = vmatprep.subr.mxu0 0.0
    %262 = vmatpush1.msra.mxu0 0.0
    %263 = vmatprep.subr.mxu0 0.0
    %264 = vmatpush1.msra.mxu0 0.0
    %265 = vmatprep.subr.mxu0 0.0
    %266 = vmatpush1.msra.mxu0 0.0
    %267 = vmatprep.subr.mxu0 0.0
    %268 = vmatpush1.msra.mxu0 0.0
    %269 = vmatprep.subr.mxu0 0.0
    %270 = vmatpush1.msra.mxu0 0.0
    %271 = vmatprep.subr.mxu0 0.0
    %272 = vmatpush1.msra.mxu0 0.0
    %273 = vmatprep.subr.mxu0 0.0
    %274 = vmatpush1.msra.mxu0 0.0
    %275 = vmatprep.subr.mxu0 0.0
    %276 = vmatpush1.msra.mxu0 %v246
    %277 = vmatprep.subr.mxu0 0.0
    %278 = vmatpush1.msra.mxu0 %v245
    %279 = vmatprep.subr.mxu0 0.0
    %280 = vmatpush1.msra.mxu0 %v244
    %281 = vmatprep.subr.mxu0 0.0
    %282 = vmatpush1.msra.mxu0 %v243
    %283 = vmatprep.subr.mxu0 0.0
    %284 = vmatpush2.msra.mxu0 0.0
    %285 = vmatprep.subr.mxu0 0.0
    %286 = vmatpush2.msra.mxu0 0.0
    %287 = vmatprep.subr.mxu0 0.0
    %288 = vmatpush2.msra.mxu0 0.0
    %289 = vmatprep.subr.mxu0 0.0
    %290 = vmatpush2.msra.mxu0 0.0
    %291 = vmatprep.subr.mxu0 0.0
    %292 = vmatpush2.msra.mxu0 0.0
    %293 = vmatprep.subr.mxu0 0.0
    %294 = vmatpush2.msra.mxu0 0.0
    %295 = vmatprep.subr.mxu0 0.0
    %296 = vmatpush2.msra.mxu0 0.0
    %297 = vmatprep.subr.mxu0 0.0
    %298 = vmatpush2.msra.mxu0 0.0
    %299 = vmatprep.subr.mxu0 0.0
    %300 = vmatpush2.msra.mxu0 0.0
    %301 = vmatprep.subr.mxu0 0.0
    %302 = vmatpush2.msra.mxu0 0.0
    %303 = vmatprep.subr.mxu0 0.0
    %304 = vmatpush2.msra.mxu0 0.0
    %305 = vmatprep.subr.mxu0 0.0
    %306 = vmatpush2.msra.mxu0 0.0
    %307 = vmatprep.subr.mxu0 0.0
    %308 = vmatpush2.msra.mxu0 0.0
    %309 = vmatprep.subr.mxu0 0.0
    %310 = vmatpush2.msra.mxu0 0.0
    %311 = vmatprep.subr.mxu0 0.0
    %312 = vmatpush2.msra.mxu0 0.0
    %313 = vmatprep.subr.mxu0 0.0
    %314 = vmatpush2.msra.mxu0 0.0
    %315 = vmatprep.mubr.f32.mxu0 0.0
    %316 = vmatmul.mubr.f32.gmra.mxu0 %v249
    %v317 = vpop.f32.mrf.mxu0
    %v318 = vadd.f32 0.0, %v317
    %v319 = vpop.f32.mrf.mxu0
    %320 = vdwg.mxu0
    %v322 = vsel %vm247, %v238, 0
    %324 = vmatprep.subr.mxu0 0.0
    %325 = vmatpush1.msra.mxu0 0.0
    %326 = vmatprep.subr.mxu0 0.0
    %327 = vmatpush1.msra.mxu0 0.0
    %328 = vmatprep.subr.mxu0 0.0
    %329 = vmatpush1.msra.mxu0 0.0
    %330 = vmatprep.subr.mxu0 0.0
    %331 = vmatpush1.msra.mxu0 0.0
    %332 = vmatprep.subr.mxu0 0.0
    %333 = vmatpush1.msra.mxu0 0.0
    %334 = vmatprep.subr.mxu0 0.0
    %335 = vmatpush1.msra.mxu0 0.0
    %336 = vmatprep.subr.mxu0 0.0
    %337 = vmatpush1.msra.mxu0 0.0
    %338 = vmatprep.subr.mxu0 0.0
    %339 = vmatpush1.msra.mxu0 0.0
    %340 = vmatprep.subr.mxu0 0.0
    %341 = vmatpush1.msra.mxu0 0.0
    %342 = vmatprep.subr.mxu0 0.0
    %343 = vmatpush1.msra.mxu0 0.0
    %344 = vmatprep.subr.mxu0 0.0
    %345 = vmatpush1.msra.mxu0 0.0
    %346 = vmatprep.subr.mxu0 0.0
    %347 = vmatpush1.msra.mxu0 0.0
    %348 = vmatprep.subr.mxu0 0.0
    %349 = vmatpush1.msra.mxu0 %v242
    %350 = vmatprep.subr.mxu0 0.0
    %351 = vmatpush1.msra.mxu0 %v241
    %352 = vmatprep.subr.mxu0 0.0
    %353 = vmatpush1.msra.mxu0 %v240
    %354 = vmatprep.subr.mxu0 0.0
    %355 = vmatpush1.msra.mxu0 %v239
    %356 = vmatprep.subr.mxu0 0.0
    %357 = vmatpush2.msra.mxu0 0.0
    %358 = vmatprep.subr.mxu0 0.0
    %359 = vmatpush2.msra.mxu0 0.0
    %360 = vmatprep.subr.mxu0 0.0
    %361 = vmatpush2.msra.mxu0 0.0
    %362 = vmatprep.subr.mxu0 0.0
    %363 = vmatpush2.msra.mxu0 0.0
    %364 = vmatprep.subr.mxu0 0.0
    %365 = vmatpush2.msra.mxu0 0.0
    %366 = vmatprep.subr.mxu0 0.0
    %367 = vmatpush2.msra.mxu0 0.0
    %368 = vmatprep.subr.mxu0 0.0
    %369 = vmatpush2.msra.mxu0 0.0
    %370 = vmatprep.subr.mxu0 0.0
    %371 = vmatpush2.msra.mxu0 0.0
    %372 = vmatprep.subr.mxu0 0.0
    %373 = vmatpush2.msra.mxu0 0.0
    %374 = vmatprep.subr.mxu0 0.0
    %375 = vmatpush2.msra.mxu0 0.0
    %376 = vmatprep.subr.mxu0 0.0
    %377 = vmatpush2.msra.mxu0 0.0
    %378 = vmatprep.subr.mxu0 0.0
    %379 = vmatpush2.msra.mxu0 0.0
    %380 = vmatprep.subr.mxu0 0.0
    %381 = vmatpush2.msra.mxu0 0.0
    %382 = vmatprep.subr.mxu0 0.0
    %383 = vmatpush2.msra.mxu0 0.0
    %384 = vmatprep.subr.mxu0 0.0
    %385 = vmatpush2.msra.mxu0 0.0
    %386 = vmatprep.subr.mxu0 0.0
    %387 = vmatpush2.msra.mxu0 0.0
    %388 = vmatprep.mubr.f32.mxu0 0.0
    %389 = vmatmul.mubr.f32.gmra.mxu0 %v322
    %v390 = vpop.f32.mrf.mxu0
    %v391 = vadd.f32 %v318, %v390
    %v392 = vpop.f32.mrf.mxu0
    %393 = vdwg.mxu0
    %v394 = vld [vmem:[%s8] sm:$0x1]
    %v395 = vadd.f32 %v391, %v394
    %v396 = vxor.u32 %v395, 2147483648
    %v397 = vmul.f32 %v396, 1.442695
    %v398 = vpow.pop %v397
    %v399 = vadd.f32 %v398, 1.0
    %v400 = vrcp.pop %v399
    %v401 = vmul.f32 1.0, %v400
    %s402 = scalar_lea.vmem [#allocation13], 32
    %v403 = vld [vmem:[%s402] sm:$0xff]
    %v404 = vld [vmem:[%s402 + $0x8] sm:$0xff]
    %v405 = vld [vmem:[%s402 + $0x10] sm:$0xff]
    %v406 = vld [vmem:[%s402 + $0x18] sm:$0xff]
    %s407 = scalar_lea.vmem [#allocation14], 32
    %v408 = vld [vmem:[%s407] sm:$0xff]
    %v409 = vld [vmem:[%s407 + $0x8] sm:$0xff]
    %v410 = vld [vmem:[%s407 + $0x10] sm:$0xff]
    %v411 = vld [vmem:[%s407 + $0x18] sm:$0xff]
    %412 = vmatprep.subr.mxu0 0.0
    %413 = vmatpush1.msra.mxu0 0.0
    %414 = vmatprep.subr.mxu0 0.0
    %415 = vmatpush1.msra.mxu0 0.0
    %416 = vmatprep.subr.mxu0 0.0
    %417 = vmatpush1.msra.mxu0 0.0
    %418 = vmatprep.subr.mxu0 0.0
    %419 = vmatpush1.msra.mxu0 0.0
    %420 = vmatprep.subr.mxu0 0.0
    %421 = vmatpush1.msra.mxu0 0.0
    %422 = vmatprep.subr.mxu0 0.0
    %423 = vmatpush1.msra.mxu0 0.0
    %424 = vmatprep.subr.mxu0 0.0
    %425 = vmatpush1.msra.mxu0 0.0
    %426 = vmatprep.subr.mxu0 0.0
    %427 = vmatpush1.msra.mxu0 0.0
    %428 = vmatprep.subr.mxu0 0.0
    %429 = vmatpush1.msra.mxu0 0.0
    %430 = vmatprep.subr.mxu0 0.0
    %431 = vmatpush1.msra.mxu0 0.0
    %432 = vmatprep.subr.mxu0 0.0
    %433 = vmatpush1.msra.mxu0 0.0
    %434 = vmatprep.subr.mxu0 0.0
    %435 = vmatpush1.msra.mxu0 0.0
    %436 = vmatprep.subr.mxu0 0.0
    %437 = vmatpush1.msra.mxu0 %v411
    %438 = vmatprep.subr.mxu0 0.0
    %439 = vmatpush1.msra.mxu0 %v410
    %440 = vmatprep.subr.mxu0 0.0
    %441 = vmatpush1.msra.mxu0 %v409
    %442 = vmatprep.subr.mxu0 0.0
    %443 = vmatpush1.msra.mxu0 %v408
    %444 = vmatprep.subr.mxu0 0.0
    %445 = vmatpush2.msra.mxu0 0.0
    %446 = vmatprep.subr.mxu0 0.0
    %447 = vmatpush2.msra.mxu0 0.0
    %448 = vmatprep.subr.mxu0 0.0
    %449 = vmatpush2.msra.mxu0 0.0
    %450 = vmatprep.subr.mxu0 0.0
    %451 = vmatpush2.msra.mxu0 0.0
    %452 = vmatprep.subr.mxu0 0.0
    %453 = vmatpush2.msra.mxu0 0.0
    %454 = vmatprep.subr.mxu0 0.0
    %455 = vmatpush2.msra.mxu0 0.0
    %456 = vmatprep.subr.mxu0 0.0
    %457 = vmatpush2.msra.mxu0 0.0
    %458 = vmatprep.subr.mxu0 0.0
    %459 = vmatpush2.msra.mxu0 0.0
    %460 = vmatprep.subr.mxu0 0.0
    %461 = vmatpush2.msra.mxu0 0.0
    %462 = vmatprep.subr.mxu0 0.0
    %463 = vmatpush2.msra.mxu0 0.0
    %464 = vmatprep.subr.mxu0 0.0
    %465 = vmatpush2.msra.mxu0 0.0
    %466 = vmatprep.subr.mxu0 0.0
    %467 = vmatpush2.msra.mxu0 0.0
    %468 = vmatprep.subr.mxu0 0.0
    %469 = vmatpush2.msra.mxu0 0.0
    %470 = vmatprep.subr.mxu0 0.0
    %471 = vmatpush2.msra.mxu0 0.0
    %472 = vmatprep.subr.mxu0 0.0
    %473 = vmatpush2.msra.mxu0 0.0
    %474 = vmatprep.subr.mxu0 0.0
    %475 = vmatpush2.msra.mxu0 0.0
    %476 = vmatprep.mubr.f32.mxu0 0.0
    %477 = vmatmul.mubr.f32.gmra.mxu0 %v249
    %v478 = vpop.f32.mrf.mxu0
    %v479 = vadd.f32 0.0, %v478
    %v480 = vpop.f32.mrf.mxu0
    %481 = vdwg.mxu0
    %482 = vmatprep.subr.mxu0 0.0
    %483 = vmatpush1.msra.mxu0 0.0
    %484 = vmatprep.subr.mxu0 0.0
    %485 = vmatpush1.msra.mxu0 0.0
    %486 = vmatprep.subr.mxu0 0.0
    %487 = vmatpush1.msra.mxu0 0.0
    %488 = vmatprep.subr.mxu0 0.0
    %489 = vmatpush1.msra.mxu0 0.0
    %490 = vmatprep.subr.mxu0 0.0
    %491 = vmatpush1.msra.mxu0 0.0
    %492 = vmatprep.subr.mxu0 0.0
    %493 = vmatpush1.msra.mxu0 0.0
    %494 = vmatprep.subr.mxu0 0.0
    %495 = vmatpush1.msra.mxu0 0.0
    %496 = vmatprep.subr.mxu0 0.0
    %497 = vmatpush1.msra.mxu0 0.0
    %498 = vmatprep.subr.mxu0 0.0
    %499 = vmatpush1.msra.mxu0 0.0
    %500 = vmatprep.subr.mxu0 0.0
    %501 = vmatpush1.msra.mxu0 0.0
    %502 = vmatprep.subr.mxu0 0.0
    %503 = vmatpush1.msra.mxu0 0.0
    %504 = vmatprep.subr.mxu0 0.0
    %505 = vmatpush1.msra.mxu0 0.0
    %506 = vmatprep.subr.mxu0 0.0
    %507 = vmatpush1.msra.mxu0 %v406
    %508 = vmatprep.subr.mxu0 0.0
    %509 = vmatpush1.msra.mxu0 %v405
    %510 = vmatprep.subr.mxu0 0.0
    %511 = vmatpush1.msra.mxu0 %v404
    %512 = vmatprep.subr.mxu0 0.0
    %513 = vmatpush1.msra.mxu0 %v403
    %514 = vmatprep.subr.mxu0 0.0
    %515 = vmatpush2.msra.mxu0 0.0
    %516 = vmatprep.subr.mxu0 0.0
    %517 = vmatpush2.msra.mxu0 0.0
    %518 = vmatprep.subr.mxu0 0.0
    %519 = vmatpush2.msra.mxu0 0.0
    %520 = vmatprep.subr.mxu0 0.0
    %521 = vmatpush2.msra.mxu0 0.0
    %522 = vmatprep.subr.mxu0 0.0
    %523 = vmatpush2.msra.mxu0 0.0
    %524 = vmatprep.subr.mxu0 0.0
    %525 = vmatpush2.msra.mxu0 0.0
    %526 = vmatprep.subr.mxu0 0.0
    %527 = vmatpush2.msra.mxu0 0.0
    %528 = vmatprep.subr.mxu0 0.0
    %529 = vmatpush2.msra.mxu0 0.0
    %530 = vmatprep.subr.mxu0 0.0
    %531 = vmatpush2.msra.mxu0 0.0
    %532 = vmatprep.subr.mxu0 0.0
    %533 = vmatpush2.msra.mxu0 0.0
    %534 = vmatprep.subr.mxu0 0.0
    %535 = vmatpush2.msra.mxu0 0.0
    %536 = vmatprep.subr.mxu0 0.0
    %537 = vmatpush2.msra.mxu0 0.0
    %538 = vmatprep.subr.mxu0 0.0
    %539 = vmatpush2.msra.mxu0 0.0
    %540 = vmatprep.subr.mxu0 0.0
    %541 = vmatpush2.msra.mxu0 0.0
    %542 = vmatprep.subr.mxu0 0.0
    %543 = vmatpush2.msra.mxu0 0.0
    %544 = vmatprep.subr.mxu0 0.0
    %545 = vmatpush2.msra.mxu0 0.0
    %546 = vmatprep.mubr.f32.mxu0 0.0
    %547 = vmatmul.mubr.f32.gmra.mxu0 %v322
    %v548 = vpop.f32.mrf.mxu0
    %v549 = vadd.f32 %v479, %v548
    %v550 = vpop.f32.mrf.mxu0
    %551 = vdwg.mxu0
    %s552 = scalar_lea.vmem %s8, 1
    %v553 = vld [vmem:[%s552] sm:$0x1]
    %v554 = vadd.f32 %v549, %v553
    %v555 = vxor.u32 %v554, 2147483648
    %v556 = vmul.f32 %v555, 1.442695
    %v557 = vpow.pop %v556
    %v558 = vadd.f32 %v557, 1.0
    %v559 = vrcp.pop %v558
    %v560 = vmul.f32 1.0, %v559
    %s561 = scalar_lea.vmem [#allocation13], 64
    %v562 = vld [vmem:[%s561] sm:$0xff]
    %v563 = vld [vmem:[%s561 + $0x8] sm:$0xff]
    %v564 = vld [vmem:[%s561 + $0x10] sm:$0xff]
    %v565 = vld [vmem:[%s561 + $0x18] sm:$0xff]
    %s566 = scalar_lea.vmem [#allocation14], 64
    %v567 = vld [vmem:[%s566] sm:$0xff]
    %v568 = vld [vmem:[%s566 + $0x8] sm:$0xff]
    %v569 = vld [vmem:[%s566 + $0x10] sm:$0xff]
    %v570 = vld [vmem:[%s566 + $0x18] sm:$0xff]
    %571 = vmatprep.subr.mxu0 0.0
    %572 = vmatpush1.msra.mxu0 0.0
    %573 = vmatprep.subr.mxu0 0.0
    %574 = vmatpush1.msra.mxu0 0.0
    %575 = vmatprep.subr.mxu0 0.0
    %576 = vmatpush1.msra.mxu0 0.0
    %577 = vmatprep.subr.mxu0 0.0
    %578 = vmatpush1.msra.mxu0 0.0
    %579 = vmatprep.subr.mxu0 0.0
    %580 = vmatpush1.msra.mxu0 0.0
    %581 = vmatprep.subr.mxu0 0.0
    %582 = vmatpush1.msra.mxu0 0.0
    %583 = vmatprep.subr.mxu0 0.0
    %584 = vmatpush1.msra.mxu0 0.0
    %585 = vmatprep.subr.mxu0 0.0
    %586 = vmatpush1.msra.mxu0 0.0
    %587 = vmatprep.subr.mxu0 0.0
    %588 = vmatpush1.msra.mxu0 0.0
    %589 = vmatprep.subr.mxu0 0.0
    %590 = vmatpush1.msra.mxu0 0.0
    %591 = vmatprep.subr.mxu0 0.0
    %592 = vmatpush1.msra.mxu0 0.0
    %593 = vmatprep.subr.mxu0 0.0
    %594 = vmatpush1.msra.mxu0 0.0
    %595 = vmatprep.subr.mxu0 0.0
    %596 = vmatpush1.msra.mxu0 %v570
    %597 = vmatprep.subr.mxu0 0.0
    %598 = vmatpush1.msra.mxu0 %v569
    %599 = vmatprep.subr.mxu0 0.0
    %600 = vmatpush1.msra.mxu0 %v568
    %601 = vmatprep.subr.mxu0 0.0
    %602 = vmatpush1.msra.mxu0 %v567
    %603 = vmatprep.subr.mxu0 0.0
    %604 = vmatpush2.msra.mxu0 0.0
    %605 = vmatprep.subr.mxu0 0.0
    %606 = vmatpush2.msra.mxu0 0.0
    %607 = vmatprep.subr.mxu0 0.0
    %608 = vmatpush2.msra.mxu0 0.0
    %609 = vmatprep.subr.mxu0 0.0
    %610 = vmatpush2.msra.mxu0 0.0
    %611 = vmatprep.subr.mxu0 0.0
    %612 = vmatpush2.msra.mxu0 0.0
    %613 = vmatprep.subr.mxu0 0.0
    %614 = vmatpush2.msra.mxu0 0.0
    %615 = vmatprep.subr.mxu0 0.0
    %616 = vmatpush2.msra.mxu0 0.0
    %617 = vmatprep.subr.mxu0 0.0
    %618 = vmatpush2.msra.mxu0 0.0
    %619 = vmatprep.subr.mxu0 0.0
    %620 = vmatpush2.msra.mxu0 0.0
    %621 = vmatprep.subr.mxu0 0.0
    %622 = vmatpush2.msra.mxu0 0.0
    %623 = vmatprep.subr.mxu0 0.0
    %624 = vmatpush2.msra.mxu0 0.0
    %625 = vmatprep.subr.mxu0 0.0
    %626 = vmatpush2.msra.mxu0 0.0
    %627 = vmatprep.subr.mxu0 0.0
    %628 = vmatpush2.msra.mxu0 0.0
    %629 = vmatprep.subr.mxu0 0.0
    %630 = vmatpush2.msra.mxu0 0.0
    %631 = vmatprep.subr.mxu0 0.0
    %632 = vmatpush2.msra.mxu0 0.0
    %633 = vmatprep.subr.mxu0 0.0
    %634 = vmatpush2.msra.mxu0 0.0
    %635 = vmatprep.mubr.f32.mxu0 0.0
    %636 = vmatmul.mubr.f32.gmra.mxu0 %v249
    %v637 = vpop.f32.mrf.mxu0
    %v638 = vadd.f32 0.0, %v637
    %v639 = vpop.f32.mrf.mxu0
    %640 = vdwg.mxu0
    %641 = vmatprep.subr.mxu0 0.0
    %642 = vmatpush1.msra.mxu0 0.0
    %643 = vmatprep.subr.mxu0 0.0
    %644 = vmatpush1.msra.mxu0 0.0
    %645 = vmatprep.subr.mxu0 0.0
    %646 = vmatpush1.msra.mxu0 0.0
    %647 = vmatprep.subr.mxu0 0.0
    %648 = vmatpush1.msra.mxu0 0.0
    %649 = vmatprep.subr.mxu0 0.0
    %650 = vmatpush1.msra.mxu0 0.0
    %651 = vmatprep.subr.mxu0 0.0
    %652 = vmatpush1.msra.mxu0 0.0
    %653 = vmatprep.subr.mxu0 0.0
    %654 = vmatpush1.msra.mxu0 0.0
    %655 = vmatprep.subr.mxu0 0.0
    %656 = vmatpush1.msra.mxu0 0.0
    %657 = vmatprep.subr.mxu0 0.0
    %658 = vmatpush1.msra.mxu0 0.0
    %659 = vmatprep.subr.mxu0 0.0
    %660 = vmatpush1.msra.mxu0 0.0
    %661 = vmatprep.subr.mxu0 0.0
    %662 = vmatpush1.msra.mxu0 0.0
    %663 = vmatprep.subr.mxu0 0.0
    %664 = vmatpush1.msra.mxu0 0.0
    %665 = vmatprep.subr.mxu0 0.0
    %666 = vmatpush1.msra.mxu0 %v565
    %667 = vmatprep.subr.mxu0 0.0
    %668 = vmatpush1.msra.mxu0 %v564
    %669 = vmatprep.subr.mxu0 0.0
    %670 = vmatpush1.msra.mxu0 %v563
    %671 = vmatprep.subr.mxu0 0.0
    %672 = vmatpush1.msra.mxu0 %v562
    %673 = vmatprep.subr.mxu0 0.0
    %674 = vmatpush2.msra.mxu0 0.0
    %675 = vmatprep.subr.mxu0 0.0
    %676 = vmatpush2.msra.mxu0 0.0
    %677 = vmatprep.subr.mxu0 0.0
    %678 = vmatpush2.msra.mxu0 0.0
    %679 = vmatprep.subr.mxu0 0.0
    %680 = vmatpush2.msra.mxu0 0.0
    %681 = vmatprep.subr.mxu0 0.0
    %682 = vmatpush2.msra.mxu0 0.0
    %683 = vmatprep.subr.mxu0 0.0
    %684 = vmatpush2.msra.mxu0 0.0
    %685 = vmatprep.subr.mxu0 0.0
    %686 = vmatpush2.msra.mxu0 0.0
    %687 = vmatprep.subr.mxu0 0.0
    %688 = vmatpush2.msra.mxu0 0.0
    %689 = vmatprep.subr.mxu0 0.0
    %690 = vmatpush2.msra.mxu0 0.0
    %691 = vmatprep.subr.mxu0 0.0
    %692 = vmatpush2.msra.mxu0 0.0
    %693 = vmatprep.subr.mxu0 0.0
    %694 = vmatpush2.msra.mxu0 0.0
    %695 = vmatprep.subr.mxu0 0.0
    %696 = vmatpush2.msra.mxu0 0.0
    %697 = vmatprep.subr.mxu0 0.0
    %698 = vmatpush2.msra.mxu0 0.0
    %699 = vmatprep.subr.mxu0 0.0
    %700 = vmatpush2.msra.mxu0 0.0
    %701 = vmatprep.subr.mxu0 0.0
    %702 = vmatpush2.msra.mxu0 0.0
    %703 = vmatprep.subr.mxu0 0.0
    %704 = vmatpush2.msra.mxu0 0.0
    %705 = vmatprep.mubr.f32.mxu0 0.0
    %706 = vmatmul.mubr.f32.gmra.mxu0 %v322
    %v707 = vpop.f32.mrf.mxu0
    %v708 = vadd.f32 %v638, %v707
    %v709 = vpop.f32.mrf.mxu0
    %710 = vdwg.mxu0
    %s711 = scalar_lea.vmem %s8, 2
    %v712 = vld [vmem:[%s711] sm:$0x1]
    %v713 = vadd.f32 %v708, %v712
    %v714 = vtanh.pop %v713
    %s715 = scalar_lea.vmem [#allocation13], 96
    %v716 = vld [vmem:[%s715] sm:$0xff]
    %v717 = vld [vmem:[%s715 + $0x8] sm:$0xff]
    %v718 = vld [vmem:[%s715 + $0x10] sm:$0xff]
    %v719 = vld [vmem:[%s715 + $0x18] sm:$0xff]
    %s720 = scalar_lea.vmem [#allocation14], 96
    %v721 = vld [vmem:[%s720] sm:$0xff]
    %v722 = vld [vmem:[%s720 + $0x8] sm:$0xff]
    %v723 = vld [vmem:[%s720 + $0x10] sm:$0xff]
    %v724 = vld [vmem:[%s720 + $0x18] sm:$0xff]
    %725 = vmatprep.subr.mxu0 0.0
    %726 = vmatpush1.msra.mxu0 0.0
    %727 = vmatprep.subr.mxu0 0.0
    %728 = vmatpush1.msra.mxu0 0.0
    %729 = vmatprep.subr.mxu0 0.0
    %730 = vmatpush1.msra.mxu0 0.0
    %731 = vmatprep.subr.mxu0 0.0
    %732 = vmatpush1.msra.mxu0 0.0
    %733 = vmatprep.subr.mxu0 0.0
    %734 = vmatpush1.msra.mxu0 0.0
    %735 = vmatprep.subr.mxu0 0.0
    %736 = vmatpush1.msra.mxu0 0.0
    %737 = vmatprep.subr.mxu0 0.0
    %738 = vmatpush1.msra.mxu0 0.0
    %739 = vmatprep.subr.mxu0 0.0
    %740 = vmatpush1.msra.mxu0 0.0
    %741 = vmatprep.subr.mxu0 0.0
    %742 = vmatpush1.msra.mxu0 0.0
    %743 = vmatprep.subr.mxu0 0.0
    %744 = vmatpush1.msra.mxu0 0.0
    %745 = vmatprep.subr.mxu0 0.0
    %746 = vmatpush1.msra.mxu0 0.0
    %747 = vmatprep.subr.mxu0 0.0
    %748 = vmatpush1.msra.mxu0 0.0
    %749 = vmatprep.subr.mxu0 0.0
    %750 = vmatpush1.msra.mxu0 %v724
    %751 = vmatprep.subr.mxu0 0.0
    %752 = vmatpush1.msra.mxu0 %v723
    %753 = vmatprep.subr.mxu0 0.0
    %754 = vmatpush1.msra.mxu0 %v722
    %755 = vmatprep.subr.mxu0 0.0
    %756 = vmatpush1.msra.mxu0 %v721
    %757 = vmatprep.subr.mxu0 0.0
    %758 = vmatpush2.msra.mxu0 0.0
    %759 = vmatprep.subr.mxu0 0.0
    %760 = vmatpush2.msra.mxu0 0.0
    %761 = vmatprep.subr.mxu0 0.0
    %762 = vmatpush2.msra.mxu0 0.0
    %763 = vmatprep.subr.mxu0 0.0
    %764 = vmatpush2.msra.mxu0 0.0
    %765 = vmatprep.subr.mxu0 0.0
    %766 = vmatpush2.msra.mxu0 0.0
    %767 = vmatprep.subr.mxu0 0.0
    %768 = vmatpush2.msra.mxu0 0.0
    %769 = vmatprep.subr.mxu0 0.0
    %770 = vmatpush2.msra.mxu0 0.0
    %771 = vmatprep.subr.mxu0 0.0
    %772 = vmatpush2.msra.mxu0 0.0
    %773 = vmatprep.subr.mxu0 0.0
    %774 = vmatpush2.msra.mxu0 0.0
    %775 = vmatprep.subr.mxu0 0.0
    %776 = vmatpush2.msra.mxu0 0.0
    %777 = vmatprep.subr.mxu0 0.0
    %778 = vmatpush2.msra.mxu0 0.0
    %779 = vmatprep.subr.mxu0 0.0
    %780 = vmatpush2.msra.mxu0 0.0
    %781 = vmatprep.subr.mxu0 0.0
    %782 = vmatpush2.msra.mxu0 0.0
    %783 = vmatprep.subr.mxu0 0.0
    %784 = vmatpush2.msra.mxu0 0.0
    %785 = vmatprep.subr.mxu0 0.0
    %786 = vmatpush2.msra.mxu0 0.0
    %787 = vmatprep.subr.mxu0 0.0
    %788 = vmatpush2.msra.mxu0 0.0
    %789 = vmatprep.mubr.f32.mxu0 0.0
    %790 = vmatmul.mubr.f32.gmra.mxu0 %v249
    %v791 = vpop.f32.mrf.mxu0
    %v792 = vadd.f32 0.0, %v791
    %v793 = vpop.f32.mrf.mxu0
    %794 = vdwg.mxu0
    %795 = vmatprep.subr.mxu0 0.0
    %796 = vmatpush1.msra.mxu0 0.0
    %797 = vmatprep.subr.mxu0 0.0
    %798 = vmatpush1.msra.mxu0 0.0
    %799 = vmatprep.subr.mxu0 0.0
    %800 = vmatpush1.msra.mxu0 0.0
    %801 = vmatprep.subr.mxu0 0.0
    %802 = vmatpush1.msra.mxu0 0.0
    %803 = vmatprep.subr.mxu0 0.0
    %804 = vmatpush1.msra.mxu0 0.0
    %805 = vmatprep.subr.mxu0 0.0
    %806 = vmatpush1.msra.mxu0 0.0
    %807 = vmatprep.subr.mxu0 0.0
    %808 = vmatpush1.msra.mxu0 0.0
    %809 = vmatprep.subr.mxu0 0.0
    %810 = vmatpush1.msra.mxu0 0.0
    %811 = vmatprep.subr.mxu0 0.0
    %812 = vmatpush1.msra.mxu0 0.0
    %813 = vmatprep.subr.mxu0 0.0
    %814 = vmatpush1.msra.mxu0 0.0
    %815 = vmatprep.subr.mxu0 0.0
    %816 = vmatpush1.msra.mxu0 0.0
    %817 = vmatprep.subr.mxu0 0.0
    %818 = vmatpush1.msra.mxu0 0.0
    %819 = vmatprep.subr.mxu0 0.0
    %820 = vmatpush1.msra.mxu0 %v719
    %821 = vmatprep.subr.mxu0 0.0
    %822 = vmatpush1.msra.mxu0 %v718
    %823 = vmatprep.subr.mxu0 0.0
    %824 = vmatpush1.msra.mxu0 %v717
    %825 = vmatprep.subr.mxu0 0.0
    %826 = vmatpush1.msra.mxu0 %v716
    %827 = vmatprep.subr.mxu0 0.0
    %828 = vmatpush2.msra.mxu0 0.0
    %829 = vmatprep.subr.mxu0 0.0
    %830 = vmatpush2.msra.mxu0 0.0
    %831 = vmatprep.subr.mxu0 0.0
    %832 = vmatpush2.msra.mxu0 0.0
    %833 = vmatprep.subr.mxu0 0.0
    %834 = vmatpush2.msra.mxu0 0.0
    %835 = vmatprep.subr.mxu0 0.0
    %836 = vmatpush2.msra.mxu0 0.0
    %837 = vmatprep.subr.mxu0 0.0
    %838 = vmatpush2.msra.mxu0 0.0
    %839 = vmatprep.subr.mxu0 0.0
    %840 = vmatpush2.msra.mxu0 0.0
    %841 = vmatprep.subr.mxu0 0.0
    %842 = vmatpush2.msra.mxu0 0.0
    %843 = vmatprep.subr.mxu0 0.0
    %844 = vmatpush2.msra.mxu0 0.0
    %845 = vmatprep.subr.mxu0 0.0
    %846 = vmatpush2.msra.mxu0 0.0
    %847 = vmatprep.subr.mxu0 0.0
    %848 = vmatpush2.msra.mxu0 0.0
    %849 = vmatprep.subr.mxu0 0.0
    %850 = vmatpush2.msra.mxu0 0.0
    %851 = vmatprep.subr.mxu0 0.0
    %852 = vmatpush2.msra.mxu0 0.0
    %853 = vmatprep.subr.mxu0 0.0
    %854 = vmatpush2.msra.mxu0 0.0
    %855 = vmatprep.subr.mxu0 0.0
    %856 = vmatpush2.msra.mxu0 0.0
    %857 = vmatprep.subr.mxu0 0.0
    %858 = vmatpush2.msra.mxu0 0.0
    %859 = vmatprep.mubr.f32.mxu0 0.0
    %860 = vmatmul.mubr.f32.gmra.mxu0 %v322
    %v861 = vpop.f32.mrf.mxu0
    %v862 = vadd.f32 %v792, %v861
    %v863 = vpop.f32.mrf.mxu0
    %864 = vdwg.mxu0
    %s865 = scalar_lea.vmem %s8, 3
    %v866 = vld [vmem:[%s865] sm:$0x1]
    %v867 = vadd.f32 %v862, %v866
    %v868 = vxor.u32 %v867, 2147483648
    %v869 = vmul.f32 %v868, 1.442695
    %v870 = vpow.pop %v869
    %v871 = vadd.f32 %v870, 1.0
    %v872 = vrcp.pop %v871
    %v873 = vmul.f32 1.0, %v872
    %v874 = vmul.f32 %v560, %v237
    %v875 = vmul.f32 %v401, %v714
    %v876 = vadd.f32 %v874, %v875
    %v877 = vtanh.pop %v876
    %v878 = vmul.f32 %v873, %v877
    %v879 = vld [vmem:[#allocation2 + $0x1] sm:$0x1]
    %v881 = vsel %vm247, %v878, 0
    %883 = vmatprep.subr.mxu0 0.0
    %884 = vmatpush1.msra.mxu0 0.0
    %885 = vmatprep.subr.mxu0 0.0
    %886 = vmatpush1.msra.mxu0 0.0
    %887 = vmatprep.subr.mxu0 0.0
    %888 = vmatpush1.msra.mxu0 0.0
    %889 = vmatprep.subr.mxu0 0.0
    %890 = vmatpush1.msra.mxu0 0.0
    %891 = vmatprep.subr.mxu0 0.0
    %892 = vmatpush1.msra.mxu0 0.0
    %893 = vmatprep.subr.mxu0 0.0
    %894 = vmatpush1.msra.mxu0 0.0
    %895 = vmatprep.subr.mxu0 0.0
    %896 = vmatpush1.msra.mxu0 0.0
    %897 = vmatprep.subr.mxu0 0.0
    %898 = vmatpush1.msra.mxu0 0.0
    %899 = vmatprep.subr.mxu0 0.0
    %900 = vmatpush1.msra.mxu0 0.0
    %901 = vmatprep.subr.mxu0 0.0
    %902 = vmatpush1.msra.mxu0 0.0
    %903 = vmatprep.subr.mxu0 0.0
    %904 = vmatpush1.msra.mxu0 0.0
    %905 = vmatprep.subr.mxu0 0.0
    %906 = vmatpush1.msra.mxu0 0.0
    %907 = vmatprep.subr.mxu0 0.0
    %908 = vmatpush1.msra.mxu0 %v246
    %909 = vmatprep.subr.mxu0 0.0
    %910 = vmatpush1.msra.mxu0 %v245
    %911 = vmatprep.subr.mxu0 0.0
    %912 = vmatpush1.msra.mxu0 %v244
    %913 = vmatprep.subr.mxu0 0.0
    %914 = vmatpush1.msra.mxu0 %v243
    %915 = vmatprep.subr.mxu0 0.0
    %916 = vmatpush2.msra.mxu0 0.0
    %917 = vmatprep.subr.mxu0 0.0
    %918 = vmatpush2.msra.mxu0 0.0
    %919 = vmatprep.subr.mxu0 0.0
    %920 = vmatpush2.msra.mxu0 0.0
    %921 = vmatprep.subr.mxu0 0.0
    %922 = vmatpush2.msra.mxu0 0.0
    %923 = vmatprep.subr.mxu0 0.0
    %924 = vmatpush2.msra.mxu0 0.0
    %925 = vmatprep.subr.mxu0 0.0
    %926 = vmatpush2.msra.mxu0 0.0
    %927 = vmatprep.subr.mxu0 0.0
    %928 = vmatpush2.msra.mxu0 0.0
    %929 = vmatprep.subr.mxu0 0.0
    %930 = vmatpush2.msra.mxu0 0.0
    %931 = vmatprep.subr.mxu0 0.0
    %932 = vmatpush2.msra.mxu0 0.0
    %933 = vmatprep.subr.mxu0 0.0
    %934 = vmatpush2.msra.mxu0 0.0
    %935 = vmatprep.subr.mxu0 0.0
    %936 = vmatpush2.msra.mxu0 0.0
    %937 = vmatprep.subr.mxu0 0.0
    %938 = vmatpush2.msra.mxu0 0.0
    %939 = vmatprep.subr.mxu0 0.0
    %940 = vmatpush2.msra.mxu0 0.0
    %941 = vmatprep.subr.mxu0 0.0
    %942 = vmatpush2.msra.mxu0 0.0
    %943 = vmatprep.subr.mxu0 0.0
    %944 = vmatpush2.msra.mxu0 0.0
    %945 = vmatprep.subr.mxu0 0.0
    %946 = vmatpush2.msra.mxu0 0.0
    %947 = vmatprep.mubr.f32.mxu0 0.0
    %948 = vmatmul.mubr.f32.gmra.mxu0 %v881
    %v949 = vpop.f32.mrf.mxu0
    %v950 = vadd.f32 0.0, %v949
    %v951 = vpop.f32.mrf.mxu0
    %952 = vdwg.mxu0
    %v954 = vsel %vm247, %v879, 0
    %956 = vmatprep.subr.mxu0 0.0
    %957 = vmatpush1.msra.mxu0 0.0
    %958 = vmatprep.subr.mxu0 0.0
    %959 = vmatpush1.msra.mxu0 0.0
    %960 = vmatprep.subr.mxu0 0.0
    %961 = vmatpush1.msra.mxu0 0.0
    %962 = vmatprep.subr.mxu0 0.0
    %963 = vmatpush1.msra.mxu0 0.0
    %964 = vmatprep.subr.mxu0 0.0
    %965 = vmatpush1.msra.mxu0 0.0
    %966 = vmatprep.subr.mxu0 0.0
    %967 = vmatpush1.msra.mxu0 0.0
    %968 = vmatprep.subr.mxu0 0.0
    %969 = vmatpush1.msra.mxu0 0.0
    %970 = vmatprep.subr.mxu0 0.0
    %971 = vmatpush1.msra.mxu0 0.0
    %972 = vmatprep.subr.mxu0 0.0
    %973 = vmatpush1.msra.mxu0 0.0
    %974 = vmatprep.subr.mxu0 0.0
    %975 = vmatpush1.msra.mxu0 0.0
    %976 = vmatprep.subr.mxu0 0.0
    %977 = vmatpush1.msra.mxu0 0.0
    %978 = vmatprep.subr.mxu0 0.0
    %979 = vmatpush1.msra.mxu0 0.0
    %980 = vmatprep.subr.mxu0 0.0
    %981 = vmatpush1.msra.mxu0 %v242
    %982 = vmatprep.subr.mxu0 0.0
    %983 = vmatpush1.msra.mxu0 %v241
    %984 = vmatprep.subr.mxu0 0.0
    %985 = vmatpush1.msra.mxu0 %v240
    %986 = vmatprep.subr.mxu0 0.0
    %987 = vmatpush1.msra.mxu0 %v239
    %988 = vmatprep.subr.mxu0 0.0
    %989 = vmatpush2.msra.mxu0 0.0
    %990 = vmatprep.subr.mxu0 0.0
    %991 = vmatpush2.msra.mxu0 0.0
    %992 = vmatprep.subr.mxu0 0.0
    %993 = vmatpush2.msra.mxu0 0.0
    %994 = vmatprep.subr.mxu0 0.0
    %995 = vmatpush2.msra.mxu0 0.0
    %996 = vmatprep.subr.mxu0 0.0
    %997 = vmatpush2.msra.mxu0 0.0
    %998 = vmatprep.subr.mxu0 0.0
    %999 = vmatpush2.msra.mxu0 0.0
    %1000 = vmatprep.subr.mxu0 0.0
    %1001 = vmatpush2.msra.mxu0 0.0
    %1002 = vmatprep.subr.mxu0 0.0
    %1003 = vmatpush2.msra.mxu0 0.0
    %1004 = vmatprep.subr.mxu0 0.0
    %1005 = vmatpush2.msra.mxu0 0.0
    %1006 = vmatprep.subr.mxu0 0.0
    %1007 = vmatpush2.msra.mxu0 0.0
    %1008 = vmatprep.subr.mxu0 0.0
    %1009 = vmatpush2.msra.mxu0 0.0
    %1010 = vmatprep.subr.mxu0 0.0
    %1011 = vmatpush2.msra.mxu0 0.0
    %1012 = vmatprep.subr.mxu0 0.0
    %1013 = vmatpush2.msra.mxu0 0.0
    %1014 = vmatprep.subr.mxu0 0.0
    %1015 = vmatpush2.msra.mxu0 0.0
    %1016 = vmatprep.subr.mxu0 0.0
    %1017 = vmatpush2.msra.mxu0 0.0
    %1018 = vmatprep.subr.mxu0 0.0
    %1019 = vmatpush2.msra.mxu0 0.0
    %1020 = vmatprep.mubr.f32.mxu0 0.0
    %1021 = vmatmul.mubr.f32.gmra.mxu0 %v954
    %v1022 = vpop.f32.mrf.mxu0
    %v1023 = vadd.f32 %v950, %v1022
    %v1024 = vpop.f32.mrf.mxu0
    %1025 = vdwg.mxu0
    %v1026 = vadd.f32 %v1023, %v394
    %v1027 = vxor.u32 %v1026, 2147483648
    %v1028 = vmul.f32 %v1027, 1.442695
    %v1029 = vpow.pop %v1028
    %v1030 = vadd.f32 %v1029, 1.0
    %v1031 = vrcp.pop %v1030
    %v1032 = vmul.f32 1.0, %v1031
    %1033 = vmatprep.subr.mxu0 0.0
    %1034 = vmatpush1.msra.mxu0 0.0
    %1035 = vmatprep.subr.mxu0 0.0
    %1036 = vmatpush1.msra.mxu0 0.0
    %1037 = vmatprep.subr.mxu0 0.0
    %1038 = vmatpush1.msra.mxu0 0.0
    %1039 = vmatprep.subr.mxu0 0.0
    %1040 = vmatpush1.msra.mxu0 0.0
    %1041 = vmatprep.subr.mxu0 0.0
    %1042 = vmatpush1.msra.mxu0 0.0
    %1043 = vmatprep.subr.mxu0 0.0
    %1044 = vmatpush1.msra.mxu0 0.0
    %1045 = vmatprep.subr.mxu0 0.0
    %1046 = vmatpush1.msra.mxu0 0.0
    %1047 = vmatprep.subr.mxu0 0.0
    %1048 = vmatpush1.msra.mxu0 0.0
    %1049 = vmatprep.subr.mxu0 0.0
    %1050 = vmatpush1.msra.mxu0 0.0
    %1051 = vmatprep.subr.mxu0 0.0
    %1052 = vmatpush1.msra.mxu0 0.0
    %1053 = vmatprep.subr.mxu0 0.0
    %1054 = vmatpush1.msra.mxu0 0.0
    %1055 = vmatprep.subr.mxu0 0.0
    %1056 = vmatpush1.msra.mxu0 0.0
    %1057 = vmatprep.subr.mxu0 0.0
    %1058 = vmatpush1.msra.mxu0 %v411
    %1059 = vmatprep.subr.mxu0 0.0
    %1060 = vmatpush1.msra.mxu0 %v410
    %1061 = vmatprep.subr.mxu0 0.0
    %1062 = vmatpush1.msra.mxu0 %v409
    %1063 = vmatprep.subr.mxu0 0.0
    %1064 = vmatpush1.msra.mxu0 %v408
    %1065 = vmatprep.subr.mxu0 0.0
    %1066 = vmatpush2.msra.mxu0 0.0
    %1067 = vmatprep.subr.mxu0 0.0
    %1068 = vmatpush2.msra.mxu0 0.0
    %1069 = vmatprep.subr.mxu0 0.0
    %1070 = vmatpush2.msra.mxu0 0.0
    %1071 = vmatprep.subr.mxu0 0.0
    %1072 = vmatpush2.msra.mxu0 0.0
    %1073 = vmatprep.subr.mxu0 0.0
    %1074 = vmatpush2.msra.mxu0 0.0
    %1075 = vmatprep.subr.mxu0 0.0
    %1076 = vmatpush2.msra.mxu0 0.0
    %1077 = vmatprep.subr.mxu0 0.0
    %1078 = vmatpush2.msra.mxu0 0.0
    %1079 = vmatprep.subr.mxu0 0.0
    %1080 = vmatpush2.msra.mxu0 0.0
    %1081 = vmatprep.subr.mxu0 0.0
    %1082 = vmatpush2.msra.mxu0 0.0
    %1083 = vmatprep.subr.mxu0 0.0
    %1084 = vmatpush2.msra.mxu0 0.0
    %1085 = vmatprep.subr.mxu0 0.0
    %1086 = vmatpush2.msra.mxu0 0.0
    %1087 = vmatprep.subr.mxu0 0.0
    %1088 = vmatpush2.msra.mxu0 0.0
    %1089 = vmatprep.subr.mxu0 0.0
    %1090 = vmatpush2.msra.mxu0 0.0
    %1091 = vmatprep.subr.mxu0 0.0
    %1092 = vmatpush2.msra.mxu0 0.0
    %1093 = vmatprep.subr.mxu0 0.0
    %1094 = vmatpush2.msra.mxu0 0.0
    %1095 = vmatprep.subr.mxu0 0.0
    %1096 = vmatpush2.msra.mxu0 0.0
    %1097 = vmatprep.mubr.f32.mxu0 0.0
    %1098 = vmatmul.mubr.f32.gmra.mxu0 %v881
    %v1099 = vpop.f32.mrf.mxu0
    %v1100 = vadd.f32 0.0, %v1099
    %v1101 = vpop.f32.mrf.mxu0
    %1102 = vdwg.mxu0
    %1103 = vmatprep.subr.mxu0 0.0
    %1104 = vmatpush1.msra.mxu0 0.0
    %1105 = vmatprep.subr.mxu0 0.0
    %1106 = vmatpush1.msra.mxu0 0.0
    %1107 = vmatprep.subr.mxu0 0.0
    %1108 = vmatpush1.msra.mxu0 0.0
    %1109 = vmatprep.subr.mxu0 0.0
    %1110 = vmatpush1.msra.mxu0 0.0
    %1111 = vmatprep.subr.mxu0 0.0
    %1112 = vmatpush1.msra.mxu0 0.0
    %1113 = vmatprep.subr.mxu0 0.0
    %1114 = vmatpush1.msra.mxu0 0.0
    %1115 = vmatprep.subr.mxu0 0.0
    %1116 = vmatpush1.msra.mxu0 0.0
    %1117 = vmatprep.subr.mxu0 0.0
    %1118 = vmatpush1.msra.mxu0 0.0
    %1119 = vmatprep.subr.mxu0 0.0
    %1120 = vmatpush1.msra.mxu0 0.0
    %1121 = vmatprep.subr.mxu0 0.0
    %1122 = vmatpush1.msra.mxu0 0.0
    %1123 = vmatprep.subr.mxu0 0.0
    %1124 = vmatpush1.msra.mxu0 0.0
    %1125 = vmatprep.subr.mxu0 0.0
    %1126 = vmatpush1.msra.mxu0 0.0
    %1127 = vmatprep.subr.mxu0 0.0
    %1128 = vmatpush1.msra.mxu0 %v406
    %1129 = vmatprep.subr.mxu0 0.0
    %1130 = vmatpush1.msra.mxu0 %v405
    %1131 = vmatprep.subr.mxu0 0.0
    %1132 = vmatpush1.msra.mxu0 %v404
    %1133 = vmatprep.subr.mxu0 0.0
    %1134 = vmatpush1.msra.mxu0 %v403
    %1135 = vmatprep.subr.mxu0 0.0
    %1136 = vmatpush2.msra.mxu0 0.0
    %1137 = vmatprep.subr.mxu0 0.0
    %1138 = vmatpush2.msra.mxu0 0.0
    %1139 = vmatprep.subr.mxu0 0.0
    %1140 = vmatpush2.msra.mxu0 0.0
    %1141 = vmatprep.subr.mxu0 0.0
    %1142 = vmatpush2.msra.mxu0 0.0
    %1143 = vmatprep.subr.mxu0 0.0
    %1144 = vmatpush2.msra.mxu0 0.0
    %1145 = vmatprep.subr.mxu0 0.0
    %1146 = vmatpush2.msra.mxu0 0.0
    %1147 = vmatprep.subr.mxu0 0.0
    %1148 = vmatpush2.msra.mxu0 0.0
    %1149 = vmatprep.subr.mxu0 0.0
    %1150 = vmatpush2.msra.mxu0 0.0
    %1151 = vmatprep.subr.mxu0 0.0
    %1152 = vmatpush2.msra.mxu0 0.0
    %1153 = vmatprep.subr.mxu0 0.0
    %1154 = vmatpush2.msra.mxu0 0.0
    %1155 = vmatprep.subr.mxu0 0.0
    %1156 = vmatpush2.msra.mxu0 0.0
    %1157 = vmatprep.subr.mxu0 0.0
    %1158 = vmatpush2.msra.mxu0 0.0
    %1159 = vmatprep.subr.mxu0 0.0
    %1160 = vmatpush2.msra.mxu0 0.0
    %1161 = vmatprep.subr.mxu0 0.0
    %1162 = vmatpush2.msra.mxu0 0.0
    %1163 = vmatprep.subr.mxu0 0.0
    %1164 = vmatpush2.msra.mxu0 0.0
    %1165 = vmatprep.subr.mxu0 0.0
    %1166 = vmatpush2.msra.mxu0 0.0
    %1167 = vmatprep.mubr.f32.mxu0 0.0
    %1168 = vmatmul.mubr.f32.gmra.mxu0 %v954
    %v1169 = vpop.f32.mrf.mxu0
    %v1170 = vadd.f32 %v1100, %v1169
    %v1171 = vpop.f32.mrf.mxu0
    %1172 = vdwg.mxu0
    %v1173 = vadd.f32 %v1170, %v553
    %v1174 = vxor.u32 %v1173, 2147483648
    %v1175 = vmul.f32 %v1174, 1.442695
    %v1176 = vpow.pop %v1175
    %v1177 = vadd.f32 %v1176, 1.0
    %v1178 = vrcp.pop %v1177
    %v1179 = vmul.f32 1.0, %v1178
    %1180 = vmatprep.subr.mxu0 0.0
    %1181 = vmatpush1.msra.mxu0 0.0
    %1182 = vmatprep.subr.mxu0 0.0
    %1183 = vmatpush1.msra.mxu0 0.0
    %1184 = vmatprep.subr.mxu0 0.0
    %1185 = vmatpush1.msra.mxu0 0.0
    %1186 = vmatprep.subr.mxu0 0.0
    %1187 = vmatpush1.msra.mxu0 0.0
    %1188 = vmatprep.subr.mxu0 0.0
    %1189 = vmatpush1.msra.mxu0 0.0
    %1190 = vmatprep.subr.mxu0 0.0
    %1191 = vmatpush1.msra.mxu0 0.0
    %1192 = vmatprep.subr.mxu0 0.0
    %1193 = vmatpush1.msra.mxu0 0.0
    %1194 = vmatprep.subr.mxu0 0.0
    %1195 = vmatpush1.msra.mxu0 0.0
    %1196 = vmatprep.subr.mxu0 0.0
    %1197 = vmatpush1.msra.mxu0 0.0
    %1198 = vmatprep.subr.mxu0 0.0
    %1199 = vmatpush1.msra.mxu0 0.0
    %1200 = vmatprep.subr.mxu0 0.0
    %1201 = vmatpush1.msra.mxu0 0.0
    %1202 = vmatprep.subr.mxu0 0.0
    %1203 = vmatpush1.msra.mxu0 0.0
    %1204 = vmatprep.subr.mxu0 0.0
    %1205 = vmatpush1.msra.mxu0 %v570
    %1206 = vmatprep.subr.mxu0 0.0
    %1207 = vmatpush1.msra.mxu0 %v569
    %1208 = vmatprep.subr.mxu0 0.0
    %1209 = vmatpush1.msra.mxu0 %v568
    %1210 = vmatprep.subr.mxu0 0.0
    %1211 = vmatpush1.msra.mxu0 %v567
    %1212 = vmatprep.subr.mxu0 0.0
    %1213 = vmatpush2.msra.mxu0 0.0
    %1214 = vmatprep.subr.mxu0 0.0
    %1215 = vmatpush2.msra.mxu0 0.0
    %1216 = vmatprep.subr.mxu0 0.0
    %1217 = vmatpush2.msra.mxu0 0.0
    %1218 = vmatprep.subr.mxu0 0.0
    %1219 = vmatpush2.msra.mxu0 0.0
    %1220 = vmatprep.subr.mxu0 0.0
    %1221 = vmatpush2.msra.mxu0 0.0
    %1222 = vmatprep.subr.mxu0 0.0
    %1223 = vmatpush2.msra.mxu0 0.0
    %1224 = vmatprep.subr.mxu0 0.0
    %1225 = vmatpush2.msra.mxu0 0.0
    %1226 = vmatprep.subr.mxu0 0.0
    %1227 = vmatpush2.msra.mxu0 0.0
    %1228 = vmatprep.subr.mxu0 0.0
    %1229 = vmatpush2.msra.mxu0 0.0
    %1230 = vmatprep.subr.mxu0 0.0
    %1231 = vmatpush2.msra.mxu0 0.0
    %1232 = vmatprep.subr.mxu0 0.0
    %1233 = vmatpush2.msra.mxu0 0.0
    %1234 = vmatprep.subr.mxu0 0.0
    %1235 = vmatpush2.msra.mxu0 0.0
    %1236 = vmatprep.subr.mxu0 0.0
    %1237 = vmatpush2.msra.mxu0 0.0
    %1238 = vmatprep.subr.mxu0 0.0
    %1239 = vmatpush2.msra.mxu0 0.0
    %1240 = vmatprep.subr.mxu0 0.0
    %1241 = vmatpush2.msra.mxu0 0.0
    %1242 = vmatprep.subr.mxu0 0.0
    %1243 = vmatpush2.msra.mxu0 0.0
    %1244 = vmatprep.mubr.f32.mxu0 0.0
    %1245 = vmatmul.mubr.f32.gmra.mxu0 %v881
    %v1246 = vpop.f32.mrf.mxu0
    %v1247 = vadd.f32 0.0, %v1246
    %v1248 = vpop.f32.mrf.mxu0
    %1249 = vdwg.mxu0
    %1250 = vmatprep.subr.mxu0 0.0
    %1251 = vmatpush1.msra.mxu0 0.0
    %1252 = vmatprep.subr.mxu0 0.0
    %1253 = vmatpush1.msra.mxu0 0.0
    %1254 = vmatprep.subr.mxu0 0.0
    %1255 = vmatpush1.msra.mxu0 0.0
    %1256 = vmatprep.subr.mxu0 0.0
    %1257 = vmatpush1.msra.mxu0 0.0
    %1258 = vmatprep.subr.mxu0 0.0
    %1259 = vmatpush1.msra.mxu0 0.0
    %1260 = vmatprep.subr.mxu0 0.0
    %1261 = vmatpush1.msra.mxu0 0.0
    %1262 = vmatprep.subr.mxu0 0.0
    %1263 = vmatpush1.msra.mxu0 0.0
    %1264 = vmatprep.subr.mxu0 0.0
    %1265 = vmatpush1.msra.mxu0 0.0
    %1266 = vmatprep.subr.mxu0 0.0
    %1267 = vmatpush1.msra.mxu0 0.0
    %1268 = vmatprep.subr.mxu0 0.0
    %1269 = vmatpush1.msra.mxu0 0.0
    %1270 = vmatprep.subr.mxu0 0.0
    %1271 = vmatpush1.msra.mxu0 0.0
    %1272 = vmatprep.subr.mxu0 0.0
    %1273 = vmatpush1.msra.mxu0 0.0
    %1274 = vmatprep.subr.mxu0 0.0
    %1275 = vmatpush1.msra.mxu0 %v565
    %1276 = vmatprep.subr.mxu0 0.0
    %1277 = vmatpush1.msra.mxu0 %v564
    %1278 = vmatprep.subr.mxu0 0.0
    %1279 = vmatpush1.msra.mxu0 %v563
    %1280 = vmatprep.subr.mxu0 0.0
    %1281 = vmatpush1.msra.mxu0 %v562
    %1282 = vmatprep.subr.mxu0 0.0
    %1283 = vmatpush2.msra.mxu0 0.0
    %1284 = vmatprep.subr.mxu0 0.0
    %1285 = vmatpush2.msra.mxu0 0.0
    %1286 = vmatprep.subr.mxu0 0.0
    %1287 = vmatpush2.msra.mxu0 0.0
    %1288 = vmatprep.subr.mxu0 0.0
    %1289 = vmatpush2.msra.mxu0 0.0
    %1290 = vmatprep.subr.mxu0 0.0
    %1291 = vmatpush2.msra.mxu0 0.0
    %1292 = vmatprep.subr.mxu0 0.0
    %1293 = vmatpush2.msra.mxu0 0.0
    %1294 = vmatprep.subr.mxu0 0.0
    %1295 = vmatpush2.msra.mxu0 0.0
    %1296 = vmatprep.subr.mxu0 0.0
    %1297 = vmatpush2.msra.mxu0 0.0
    %1298 = vmatprep.subr.mxu0 0.0
    %1299 = vmatpush2.msra.mxu0 0.0
    %1300 = vmatprep.subr.mxu0 0.0
    %1301 = vmatpush2.msra.mxu0 0.0
    %1302 = vmatprep.subr.mxu0 0.0
    %1303 = vmatpush2.msra.mxu0 0.0
    %1304 = vmatprep.subr.mxu0 0.0
    %1305 = vmatpush2.msra.mxu0 0.0
    %1306 = vmatprep.subr.mxu0 0.0
    %1307 = vmatpush2.msra.mxu0 0.0
    %1308 = vmatprep.subr.mxu0 0.0
    %1309 = vmatpush2.msra.mxu0 0.0
    %1310 = vmatprep.subr.mxu0 0.0
    %1311 = vmatpush2.msra.mxu0 0.0
    %1312 = vmatprep.subr.mxu0 0.0
    %1313 = vmatpush2.msra.mxu0 0.0
    %1314 = vmatprep.mubr.f32.mxu0 0.0
    %1315 = vmatmul.mubr.f32.gmra.mxu0 %v954
    %v1316 = vpop.f32.mrf.mxu0
    %v1317 = vadd.f32 %v1247, %v1316
    %v1318 = vpop.f32.mrf.mxu0
    %1319 = vdwg.mxu0
    %v1320 = vadd.f32 %v1317, %v712
    %v1321 = vtanh.pop %v1320
    %1322 = vmatprep.subr.mxu0 0.0
    %1323 = vmatpush1.msra.mxu0 0.0
    %1324 = vmatprep.subr.mxu0 0.0
    %1325 = vmatpush1.msra.mxu0 0.0
    %1326 = vmatprep.subr.mxu0 0.0
    %1327 = vmatpush1.msra.mxu0 0.0
    %1328 = vmatprep.subr.mxu0 0.0
    %1329 = vmatpush1.msra.mxu0 0.0
    %1330 = vmatprep.subr.mxu0 0.0
    %1331 = vmatpush1.msra.mxu0 0.0
    %1332 = vmatprep.subr.mxu0 0.0
    %1333 = vmatpush1.msra.mxu0 0.0
    %1334 = vmatprep.subr.mxu0 0.0
    %1335 = vmatpush1.msra.mxu0 0.0
    %1336 = vmatprep.subr.mxu0 0.0
    %1337 = vmatpush1.msra.mxu0 0.0
    %1338 = vmatprep.subr.mxu0 0.0
    %1339 = vmatpush1.msra.mxu0 0.0
    %1340 = vmatprep.subr.mxu0 0.0
    %1341 = vmatpush1.msra.mxu0 0.0
    %1342 = vmatprep.subr.mxu0 0.0
    %1343 = vmatpush1.msra.mxu0 0.0
    %1344 = vmatprep.subr.mxu0 0.0
    %1345 = vmatpush1.msra.mxu0 0.0
    %1346 = vmatprep.subr.mxu0 0.0
    %1347 = vmatpush1.msra.mxu0 %v724
    %1348 = vmatprep.subr.mxu0 0.0
    %1349 = vmatpush1.msra.mxu0 %v723
    %1350 = vmatprep.subr.mxu0 0.0
    %1351 = vmatpush1.msra.mxu0 %v722
    %1352 = vmatprep.subr.mxu0 0.0
    %1353 = vmatpush1.msra.mxu0 %v721
    %1354 = vmatprep.subr.mxu0 0.0
    %1355 = vmatpush2.msra.mxu0 0.0
    %1356 = vmatprep.subr.mxu0 0.0
    %1357 = vmatpush2.msra.mxu0 0.0
    %1358 = vmatprep.subr.mxu0 0.0
    %1359 = vmatpush2.msra.mxu0 0.0
    %1360 = vmatprep.subr.mxu0 0.0
    %1361 = vmatpush2.msra.mxu0 0.0
    %1362 = vmatprep.subr.mxu0 0.0
    %1363 = vmatpush2.msra.mxu0 0.0
    %1364 = vmatprep.subr.mxu0 0.0
    %1365 = vmatpush2.msra.mxu0 0.0
    %1366 = vmatprep.subr.mxu0 0.0
    %1367 = vmatpush2.msra.mxu0 0.0
    %1368 = vmatprep.subr.mxu0 0.0
    %1369 = vmatpush2.msra.mxu0 0.0
    %1370 = vmatprep.subr.mxu0 0.0
    %1371 = vmatpush2.msra.mxu0 0.0
    %1372 = vmatprep.subr.mxu0 0.0
    %1373 = vmatpush2.msra.mxu0 0.0
    %1374 = vmatprep.subr.mxu0 0.0
    %1375 = vmatpush2.msra.mxu0 0.0
    %1376 = vmatprep.subr.mxu0 0.0
    %1377 = vmatpush2.msra.mxu0 0.0
    %1378 = vmatprep.subr.mxu0 0.0
    %1379 = vmatpush2.msra.mxu0 0.0
    %1380 = vmatprep.subr.mxu0 0.0
    %1381 = vmatpush2.msra.mxu0 0.0
    %1382 = vmatprep.subr.mxu0 0.0
    %1383 = vmatpush2.msra.mxu0 0.0
    %1384 = vmatprep.subr.mxu0 0.0
    %1385 = vmatpush2.msra.mxu0 0.0
    %1386 = vmatprep.mubr.f32.mxu0 0.0
    %1387 = vmatmul.mubr.f32.gmra.mxu0 %v881
    %v1388 = vpop.f32.mrf.mxu0
    %v1389 = vadd.f32 0.0, %v1388
    %v1390 = vpop.f32.mrf.mxu0
    %1391 = vdwg.mxu0
    %1392 = vmatprep.subr.mxu0 0.0
    %1393 = vmatpush1.msra.mxu0 0.0
    %1394 = vmatprep.subr.mxu0 0.0
    %1395 = vmatpush1.msra.mxu0 0.0
    %1396 = vmatprep.subr.mxu0 0.0
    %1397 = vmatpush1.msra.mxu0 0.0
    %1398 = vmatprep.subr.mxu0 0.0
    %1399 = vmatpush1.msra.mxu0 0.0
    %1400 = vmatprep.subr.mxu0 0.0
    %1401 = vmatpush1.msra.mxu0 0.0
    %1402 = vmatprep.subr.mxu0 0.0
    %1403 = vmatpush1.msra.mxu0 0.0
    %1404 = vmatprep.subr.mxu0 0.0
    %1405 = vmatpush1.msra.mxu0 0.0
    %1406 = vmatprep.subr.mxu0 0.0
    %1407 = vmatpush1.msra.mxu0 0.0
    %1408 = vmatprep.subr.mxu0 0.0
    %1409 = vmatpush1.msra.mxu0 0.0
    %1410 = vmatprep.subr.mxu0 0.0
    %1411 = vmatpush1.msra.mxu0 0.0
    %1412 = vmatprep.subr.mxu0 0.0
    %1413 = vmatpush1.msra.mxu0 0.0
    %1414 = vmatprep.subr.mxu0 0.0
    %1415 = vmatpush1.msra.mxu0 0.0
    %1416 = vmatprep.subr.mxu0 0.0
    %1417 = vmatpush1.msra.mxu0 %v719
    %1418 = vmatprep.subr.mxu0 0.0
    %1419 = vmatpush1.msra.mxu0 %v718
    %1420 = vmatprep.subr.mxu0 0.0
    %1421 = vmatpush1.msra.mxu0 %v717
    %1422 = vmatprep.subr.mxu0 0.0
    %1423 = vmatpush1.msra.mxu0 %v716
    %1424 = vmatprep.subr.mxu0 0.0
    %1425 = vmatpush2.msra.mxu0 0.0
    %1426 = vmatprep.subr.mxu0 0.0
    %1427 = vmatpush2.msra.mxu0 0.0
    %1428 = vmatprep.subr.mxu0 0.0
    %1429 = vmatpush2.msra.mxu0 0.0
    %1430 = vmatprep.subr.mxu0 0.0
    %1431 = vmatpush2.msra.mxu0 0.0
    %1432 = vmatprep.subr.mxu0 0.0
    %1433 = vmatpush2.msra.mxu0 0.0
    %1434 = vmatprep.subr.mxu0 0.0
    %1435 = vmatpush2.msra.mxu0 0.0
    %1436 = vmatprep.subr.mxu0 0.0
    %1437 = vmatpush2.msra.mxu0 0.0
    %1438 = vmatprep.subr.mxu0 0.0
    %1439 = vmatpush2.msra.mxu0 0.0
    %1440 = vmatprep.subr.mxu0 0.0
    %1441 = vmatpush2.msra.mxu0 0.0
    %1442 = vmatprep.subr.mxu0 0.0
    %1443 = vmatpush2.msra.mxu0 0.0
    %1444 = vmatprep.subr.mxu0 0.0
    %1445 = vmatpush2.msra.mxu0 0.0
    %1446 = vmatprep.subr.mxu0 0.0
    %1447 = vmatpush2.msra.mxu0 0.0
    %1448 = vmatprep.subr.mxu0 0.0
    %1449 = vmatpush2.msra.mxu0 0.0
    %1450 = vmatprep.subr.mxu0 0.0
    %1451 = vmatpush2.msra.mxu0 0.0
    %1452 = vmatprep.subr.mxu0 0.0
    %1453 = vmatpush2.msra.mxu0 0.0
    %1454 = vmatprep.subr.mxu0 0.0
    %1455 = vmatpush2.msra.mxu0 0.0
    %1456 = vmatprep.mubr.f32.mxu0 0.0
    %1457 = vmatmul.mubr.f32.gmra.mxu0 %v954
    %v1458 = vpop.f32.mrf.mxu0
    %v1459 = vadd.f32 %v1389, %v1458
    %v1460 = vpop.f32.mrf.mxu0
    %1461 = vdwg.mxu0
    %v1462 = vadd.f32 %v1459, %v866
    %v1463 = vxor.u32 %v1462, 2147483648
    %v1464 = vmul.f32 %v1463, 1.442695
    %v1465 = vpow.pop %v1464
    %v1466 = vadd.f32 %v1465, 1.0
    %v1467 = vrcp.pop %v1466
    %v1468 = vmul.f32 1.0, %v1467
    %v1469 = vmul.f32 %v1179, %v876
    %v1470 = vmul.f32 %v1032, %v1321
    %v1471 = vadd.f32 %v1469, %v1470
    %v1472 = vtanh.pop %v1471
    %v1473 = vmul.f32 %v1468, %v1472
    %v1474 = vld [vmem:[#allocation2 + $0x2] sm:$0x1]
    %v1476 = vsel %vm247, %v1473, 0
    %1478 = vmatprep.subr.mxu0 0.0
    %1479 = vmatpush1.msra.mxu0 0.0
    %1480 = vmatprep.subr.mxu0 0.0
    %1481 = vmatpush1.msra.mxu0 0.0
    %1482 = vmatprep.subr.mxu0 0.0
    %1483 = vmatpush1.msra.mxu0 0.0
    %1484 = vmatprep.subr.mxu0 0.0
    %1485 = vmatpush1.msra.mxu0 0.0
    %1486 = vmatprep.subr.mxu0 0.0
    %1487 = vmatpush1.msra.mxu0 0.0
    %1488 = vmatprep.subr.mxu0 0.0
    %1489 = vmatpush1.msra.mxu0 0.0
    %1490 = vmatprep.subr.mxu0 0.0
    %1491 = vmatpush1.msra.mxu0 0.0
    %1492 = vmatprep.subr.mxu0 0.0
    %1493 = vmatpush1.msra.mxu0 0.0
    %1494 = vmatprep.subr.mxu0 0.0
    %1495 = vmatpush1.msra.mxu0 0.0
    %1496 = vmatprep.subr.mxu0 0.0
    %1497 = vmatpush1.msra.mxu0 0.0
    %1498 = vmatprep.subr.mxu0 0.0
    %1499 = vmatpush1.msra.mxu0 0.0
    %1500 = vmatprep.subr.mxu0 0.0
    %1501 = vmatpush1.msra.mxu0 0.0
    %1502 = vmatprep.subr.mxu0 0.0
    %1503 = vmatpush1.msra.mxu0 %v246
    %1504 = vmatprep.subr.mxu0 0.0
    %1505 = vmatpush1.msra.mxu0 %v245
    %1506 = vmatprep.subr.mxu0 0.0
    %1507 = vmatpush1.msra.mxu0 %v244
    %1508 = vmatprep.subr.mxu0 0.0
    %1509 = vmatpush1.msra.mxu0 %v243
    %1510 = vmatprep.subr.mxu0 0.0
    %1511 = vmatpush2.msra.mxu0 0.0
    %1512 = vmatprep.subr.mxu0 0.0
    %1513 = vmatpush2.msra.mxu0 0.0
    %1514 = vmatprep.subr.mxu0 0.0
    %1515 = vmatpush2.msra.mxu0 0.0
    %1516 = vmatprep.subr.mxu0 0.0
    %1517 = vmatpush2.msra.mxu0 0.0
    %1518 = vmatprep.subr.mxu0 0.0
    %1519 = vmatpush2.msra.mxu0 0.0
    %1520 = vmatprep.subr.mxu0 0.0
    %1521 = vmatpush2.msra.mxu0 0.0
    %1522 = vmatprep.subr.mxu0 0.0
    %1523 = vmatpush2.msra.mxu0 0.0
    %1524 = vmatprep.subr.mxu0 0.0
    %1525 = vmatpush2.msra.mxu0 0.0
    %1526 = vmatprep.subr.mxu0 0.0
    %1527 = vmatpush2.msra.mxu0 0.0
    %1528 = vmatprep.subr.mxu0 0.0
    %1529 = vmatpush2.msra.mxu0 0.0
    %1530 = vmatprep.subr.mxu0 0.0
    %1531 = vmatpush2.msra.mxu0 0.0
    %1532 = vmatprep.subr.mxu0 0.0
    %1533 = vmatpush2.msra.mxu0 0.0
    %1534 = vmatprep.subr.mxu0 0.0
    %1535 = vmatpush2.msra.mxu0 0.0
    %1536 = vmatprep.subr.mxu0 0.0
    %1537 = vmatpush2.msra.mxu0 0.0
    %1538 = vmatprep.subr.mxu0 0.0
    %1539 = vmatpush2.msra.mxu0 0.0
    %1540 = vmatprep.subr.mxu0 0.0
    %1541 = vmatpush2.msra.mxu0 0.0
    %1542 = vmatprep.mubr.f32.mxu0 0.0
    %1543 = vmatmul.mubr.f32.gmra.mxu0 %v1476
    %v1544 = vpop.f32.mrf.mxu0
    %v1545 = vadd.f32 0.0, %v1544
    %v1546 = vpop.f32.mrf.mxu0
    %1547 = vdwg.mxu0
    %v1549 = vsel %vm247, %v1474, 0
    %1551 = vmatprep.subr.mxu0 0.0
    %1552 = vmatpush1.msra.mxu0 0.0
    %1553 = vmatprep.subr.mxu0 0.0
    %1554 = vmatpush1.msra.mxu0 0.0
    %1555 = vmatprep.subr.mxu0 0.0
    %1556 = vmatpush1.msra.mxu0 0.0
    %1557 = vmatprep.subr.mxu0 0.0
    %1558 = vmatpush1.msra.mxu0 0.0
    %1559 = vmatprep.subr.mxu0 0.0
    %1560 = vmatpush1.msra.mxu0 0.0
    %1561 = vmatprep.subr.mxu0 0.0
    %1562 = vmatpush1.msra.mxu0 0.0
    %1563 = vmatprep.subr.mxu0 0.0
    %1564 = vmatpush1.msra.mxu0 0.0
    %1565 = vmatprep.subr.mxu0 0.0
    %1566 = vmatpush1.msra.mxu0 0.0
    %1567 = vmatprep.subr.mxu0 0.0
    %1568 = vmatpush1.msra.mxu0 0.0
    %1569 = vmatprep.subr.mxu0 0.0
    %1570 = vmatpush1.msra.mxu0 0.0
    %1571 = vmatprep.subr.mxu0 0.0
    %1572 = vmatpush1.msra.mxu0 0.0
    %1573 = vmatprep.subr.mxu0 0.0
    %1574 = vmatpush1.msra.mxu0 0.0
    %1575 = vmatprep.subr.mxu0 0.0
    %1576 = vmatpush1.msra.mxu0 %v242
    %1577 = vmatprep.subr.mxu0 0.0
    %1578 = vmatpush1.msra.mxu0 %v241
    %1579 = vmatprep.subr.mxu0 0.0
    %1580 = vmatpush1.msra.mxu0 %v240
    %1581 = vmatprep.subr.mxu0 0.0
    %1582 = vmatpush1.msra.mxu0 %v239
    %1583 = vmatprep.subr.mxu0 0.0
    %1584 = vmatpush2.msra.mxu0 0.0
    %1585 = vmatprep.subr.mxu0 0.0
    %1586 = vmatpush2.msra.mxu0 0.0
    %1587 = vmatprep.subr.mxu0 0.0
    %1588 = vmatpush2.msra.mxu0 0.0
    %1589 = vmatprep.subr.mxu0 0.0
    %1590 = vmatpush2.msra.mxu0 0.0
    %1591 = vmatprep.subr.mxu0 0.0
    %1592 = vmatpush2.msra.mxu0 0.0
    %1593 = vmatprep.subr.mxu0 0.0
    %1594 = vmatpush2.msra.mxu0 0.0
    %1595 = vmatprep.subr.mxu0 0.0
    %1596 = vmatpush2.msra.mxu0 0.0
    %1597 = vmatprep.subr.mxu0 0.0
    %1598 = vmatpush2.msra.mxu0 0.0
    %1599 = vmatprep.subr.mxu0 0.0
    %1600 = vmatpush2.msra.mxu0 0.0
    %1601 = vmatprep.subr.mxu0 0.0
    %1602 = vmatpush2.msra.mxu0 0.0
    %1603 = vmatprep.subr.mxu0 0.0
    %1604 = vmatpush2.msra.mxu0 0.0
    %1605 = vmatprep.subr.mxu0 0.0
    %1606 = vmatpush2.msra.mxu0 0.0
    %1607 = vmatprep.subr.mxu0 0.0
    %1608 = vmatpush2.msra.mxu0 0.0
    %1609 = vmatprep.subr.mxu0 0.0
    %1610 = vmatpush2.msra.mxu0 0.0
    %1611 = vmatprep.subr.mxu0 0.0
    %1612 = vmatpush2.msra.mxu0 0.0
    %1613 = vmatprep.subr.mxu0 0.0
    %1614 = vmatpush2.msra.mxu0 0.0
    %1615 = vmatprep.mubr.f32.mxu0 0.0
    %1616 = vmatmul.mubr.f32.gmra.mxu0 %v1549
    %v1617 = vpop.f32.mrf.mxu0
    %v1618 = vadd.f32 %v1545, %v1617
    %v1619 = vpop.f32.mrf.mxu0
    %1620 = vdwg.mxu0
    %v1621 = vadd.f32 %v1618, %v394
    %v1622 = vxor.u32 %v1621, 2147483648
    %v1623 = vmul.f32 %v1622, 1.442695
    %v1624 = vpow.pop %v1623
    %v1625 = vadd.f32 %v1624, 1.0
    %v1626 = vrcp.pop %v1625
    %v1627 = vmul.f32 1.0, %v1626
    %1628 = vmatprep.subr.mxu0 0.0
    %1629 = vmatpush1.msra.mxu0 0.0
    %1630 = vmatprep.subr.mxu0 0.0
    %1631 = vmatpush1.msra.mxu0 0.0
    %1632 = vmatprep.subr.mxu0 0.0
    %1633 = vmatpush1.msra.mxu0 0.0
    %1634 = vmatprep.subr.mxu0 0.0
    %1635 = vmatpush1.msra.mxu0 0.0
    %1636 = vmatprep.subr.mxu0 0.0
    %1637 = vmatpush1.msra.mxu0 0.0
    %1638 = vmatprep.subr.mxu0 0.0
    %1639 = vmatpush1.msra.mxu0 0.0
    %1640 = vmatprep.subr.mxu0 0.0
    %1641 = vmatpush1.msra.mxu0 0.0
    %1642 = vmatprep.subr.mxu0 0.0
    %1643 = vmatpush1.msra.mxu0 0.0
    %1644 = vmatprep.subr.mxu0 0.0
    %1645 = vmatpush1.msra.mxu0 0.0
    %1646 = vmatprep.subr.mxu0 0.0
    %1647 = vmatpush1.msra.mxu0 0.0
    %1648 = vmatprep.subr.mxu0 0.0
    %1649 = vmatpush1.msra.mxu0 0.0
    %1650 = vmatprep.subr.mxu0 0.0
    %1651 = vmatpush1.msra.mxu0 0.0
    %1652 = vmatprep.subr.mxu0 0.0
    %1653 = vmatpush1.msra.mxu0 %v411
    %1654 = vmatprep.subr.mxu0 0.0
    %1655 = vmatpush1.msra.mxu0 %v410
    %1656 = vmatprep.subr.mxu0 0.0
    %1657 = vmatpush1.msra.mxu0 %v409
    %1658 = vmatprep.subr.mxu0 0.0
    %1659 = vmatpush1.msra.mxu0 %v408
    %1660 = vmatprep.subr.mxu0 0.0
    %1661 = vmatpush2.msra.mxu0 0.0
    %1662 = vmatprep.subr.mxu0 0.0
    %1663 = vmatpush2.msra.mxu0 0.0
    %1664 = vmatprep.subr.mxu0 0.0
    %1665 = vmatpush2.msra.mxu0 0.0
    %1666 = vmatprep.subr.mxu0 0.0
    %1667 = vmatpush2.msra.mxu0 0.0
    %1668 = vmatprep.subr.mxu0 0.0
    %1669 = vmatpush2.msra.mxu0 0.0
    %1670 = vmatprep.subr.mxu0 0.0
    %1671 = vmatpush2.msra.mxu0 0.0
    %1672 = vmatprep.subr.mxu0 0.0
    %1673 = vmatpush2.msra.mxu0 0.0
    %1674 = vmatprep.subr.mxu0 0.0
    %1675 = vmatpush2.msra.mxu0 0.0
    %1676 = vmatprep.subr.mxu0 0.0
    %1677 = vmatpush2.msra.mxu0 0.0
    %1678 = vmatprep.subr.mxu0 0.0
    %1679 = vmatpush2.msra.mxu0 0.0
    %1680 = vmatprep.subr.mxu0 0.0
    %1681 = vmatpush2.msra.mxu0 0.0
    %1682 = vmatprep.subr.mxu0 0.0
    %1683 = vmatpush2.msra.mxu0 0.0
    %1684 = vmatprep.subr.mxu0 0.0
    %1685 = vmatpush2.msra.mxu0 0.0
    %1686 = vmatprep.subr.mxu0 0.0
    %1687 = vmatpush2.msra.mxu0 0.0
    %1688 = vmatprep.subr.mxu0 0.0
    %1689 = vmatpush2.msra.mxu0 0.0
    %1690 = vmatprep.subr.mxu0 0.0
    %1691 = vmatpush2.msra.mxu0 0.0
    %1692 = vmatprep.mubr.f32.mxu0 0.0
    %1693 = vmatmul.mubr.f32.gmra.mxu0 %v1476
    %v1694 = vpop.f32.mrf.mxu0
    %v1695 = vadd.f32 0.0, %v1694
    %v1696 = vpop.f32.mrf.mxu0
    %1697 = vdwg.mxu0
    %1698 = vmatprep.subr.mxu0 0.0
    %1699 = vmatpush1.msra.mxu0 0.0
    %1700 = vmatprep.subr.mxu0 0.0
    %1701 = vmatpush1.msra.mxu0 0.0
    %1702 = vmatprep.subr.mxu0 0.0
    %1703 = vmatpush1.msra.mxu0 0.0
    %1704 = vmatprep.subr.mxu0 0.0
    %1705 = vmatpush1.msra.mxu0 0.0
    %1706 = vmatprep.subr.mxu0 0.0
    %1707 = vmatpush1.msra.mxu0 0.0
    %1708 = vmatprep.subr.mxu0 0.0
    %1709 = vmatpush1.msra.mxu0 0.0
    %1710 = vmatprep.subr.mxu0 0.0
    %1711 = vmatpush1.msra.mxu0 0.0
    %1712 = vmatprep.subr.mxu0 0.0
    %1713 = vmatpush1.msra.mxu0 0.0
    %1714 = vmatprep.subr.mxu0 0.0
    %1715 = vmatpush1.msra.mxu0 0.0
    %1716 = vmatprep.subr.mxu0 0.0
    %1717 = vmatpush1.msra.mxu0 0.0
    %1718 = vmatprep.subr.mxu0 0.0
    %1719 = vmatpush1.msra.mxu0 0.0
    %1720 = vmatprep.subr.mxu0 0.0
    %1721 = vmatpush1.msra.mxu0 0.0
    %1722 = vmatprep.subr.mxu0 0.0
    %1723 = vmatpush1.msra.mxu0 %v406
    %1724 = vmatprep.subr.mxu0 0.0
    %1725 = vmatpush1.msra.mxu0 %v405
    %1726 = vmatprep.subr.mxu0 0.0
    %1727 = vmatpush1.msra.mxu0 %v404
    %1728 = vmatprep.subr.mxu0 0.0
    %1729 = vmatpush1.msra.mxu0 %v403
    %1730 = vmatprep.subr.mxu0 0.0
    %1731 = vmatpush2.msra.mxu0 0.0
    %1732 = vmatprep.subr.mxu0 0.0
    %1733 = vmatpush2.msra.mxu0 0.0
    %1734 = vmatprep.subr.mxu0 0.0
    %1735 = vmatpush2.msra.mxu0 0.0
    %1736 = vmatprep.subr.mxu0 0.0
    %1737 = vmatpush2.msra.mxu0 0.0
    %1738 = vmatprep.subr.mxu0 0.0
    %1739 = vmatpush2.msra.mxu0 0.0
    %1740 = vmatprep.subr.mxu0 0.0
    %1741 = vmatpush2.msra.mxu0 0.0
    %1742 = vmatprep.subr.mxu0 0.0
    %1743 = vmatpush2.msra.mxu0 0.0
    %1744 = vmatprep.subr.mxu0 0.0
    %1745 = vmatpush2.msra.mxu0 0.0
    %1746 = vmatprep.subr.mxu0 0.0
    %1747 = vmatpush2.msra.mxu0 0.0
    %1748 = vmatprep.subr.mxu0 0.0
    %1749 = vmatpush2.msra.mxu0 0.0
    %1750 = vmatprep.subr.mxu0 0.0
    %1751 = vmatpush2.msra.mxu0 0.0
    %1752 = vmatprep.subr.mxu0 0.0
    %1753 = vmatpush2.msra.mxu0 0.0
    %1754 = vmatprep.subr.mxu0 0.0
    %1755 = vmatpush2.msra.mxu0 0.0
    %1756 = vmatprep.subr.mxu0 0.0
    %1757 = vmatpush2.msra.mxu0 0.0
    %1758 = vmatprep.subr.mxu0 0.0
    %1759 = vmatpush2.msra.mxu0 0.0
    %1760 = vmatprep.subr.mxu0 0.0
    %1761 = vmatpush2.msra.mxu0 0.0
    %1762 = vmatprep.mubr.f32.mxu0 0.0
    %1763 = vmatmul.mubr.f32.gmra.mxu0 %v1549
    %v1764 = vpop.f32.mrf.mxu0
    %v1765 = vadd.f32 %v1695, %v1764
    %v1766 = vpop.f32.mrf.mxu0
    %1767 = vdwg.mxu0
    %v1768 = vadd.f32 %v1765, %v553
    %v1769 = vxor.u32 %v1768, 2147483648
    %v1770 = vmul.f32 %v1769, 1.442695
    %v1771 = vpow.pop %v1770
    %v1772 = vadd.f32 %v1771, 1.0
    %v1773 = vrcp.pop %v1772
    %v1774 = vmul.f32 1.0, %v1773
    %1775 = vmatprep.subr.mxu0 0.0
    %1776 = vmatpush1.msra.mxu0 0.0
    %1777 = vmatprep.subr.mxu0 0.0
    %1778 = vmatpush1.msra.mxu0 0.0
    %1779 = vmatprep.subr.mxu0 0.0
    %1780 = vmatpush1.msra.mxu0 0.0
    %1781 = vmatprep.subr.mxu0 0.0
    %1782 = vmatpush1.msra.mxu0 0.0
    %1783 = vmatprep.subr.mxu0 0.0
    %1784 = vmatpush1.msra.mxu0 0.0
    %1785 = vmatprep.subr.mxu0 0.0
    %1786 = vmatpush1.msra.mxu0 0.0
    %1787 = vmatprep.subr.mxu0 0.0
    %1788 = vmatpush1.msra.mxu0 0.0
    %1789 = vmatprep.subr.mxu0 0.0
    %1790 = vmatpush1.msra.mxu0 0.0
    %1791 = vmatprep.subr.mxu0 0.0
    %1792 = vmatpush1.msra.mxu0 0.0
    %1793 = vmatprep.subr.mxu0 0.0
    %1794 = vmatpush1.msra.mxu0 0.0
    %1795 = vmatprep.subr.mxu0 0.0
    %1796 = vmatpush1.msra.mxu0 0.0
    %1797 = vmatprep.subr.mxu0 0.0
    %1798 = vmatpush1.msra.mxu0 0.0
    %1799 = vmatprep.subr.mxu0 0.0
    %1800 = vmatpush1.msra.mxu0 %v570
    %1801 = vmatprep.subr.mxu0 0.0
    %1802 = vmatpush1.msra.mxu0 %v569
    %1803 = vmatprep.subr.mxu0 0.0
    %1804 = vmatpush1.msra.mxu0 %v568
    %1805 = vmatprep.subr.mxu0 0.0
    %1806 = vmatpush1.msra.mxu0 %v567
    %1807 = vmatprep.subr.mxu0 0.0
    %1808 = vmatpush2.msra.mxu0 0.0
    %1809 = vmatprep.subr.mxu0 0.0
    %1810 = vmatpush2.msra.mxu0 0.0
    %1811 = vmatprep.subr.mxu0 0.0
    %1812 = vmatpush2.msra.mxu0 0.0
    %1813 = vmatprep.subr.mxu0 0.0
    %1814 = vmatpush2.msra.mxu0 0.0
    %1815 = vmatprep.subr.mxu0 0.0
    %1816 = vmatpush2.msra.mxu0 0.0
    %1817 = vmatprep.subr.mxu0 0.0
    %1818 = vmatpush2.msra.mxu0 0.0
    %1819 = vmatprep.subr.mxu0 0.0
    %1820 = vmatpush2.msra.mxu0 0.0
    %1821 = vmatprep.subr.mxu0 0.0
    %1822 = vmatpush2.msra.mxu0 0.0
    %1823 = vmatprep.subr.mxu0 0.0
    %1824 = vmatpush2.msra.mxu0 0.0
    %1825 = vmatprep.subr.mxu0 0.0
    %1826 = vmatpush2.msra.mxu0 0.0
    %1827 = vmatprep.subr.mxu0 0.0
    %1828 = vmatpush2.msra.mxu0 0.0
    %1829 = vmatprep.subr.mxu0 0.0
    %1830 = vmatpush2.msra.mxu0 0.0
    %1831 = vmatprep.subr.mxu0 0.0
    %1832 = vmatpush2.msra.mxu0 0.0
    %1833 = vmatprep.subr.mxu0 0.0
    %1834 = vmatpush2.msra.mxu0 0.0
    %1835 = vmatprep.subr.mxu0 0.0
    %1836 = vmatpush2.msra.mxu0 0.0
    %1837 = vmatprep.subr.mxu0 0.0
    %1838 = vmatpush2.msra.mxu0 0.0
    %1839 = vmatprep.mubr.f32.mxu0 0.0
    %1840 = vmatmul.mubr.f32.gmra.mxu0 %v1476
    %v1841 = vpop.f32.mrf.mxu0
    %v1842 = vadd.f32 0.0, %v1841
    %v1843 = vpop.f32.mrf.mxu0
    %1844 = vdwg.mxu0
    %1845 = vmatprep.subr.mxu0 0.0
    %1846 = vmatpush1.msra.mxu0 0.0
    %1847 = vmatprep.subr.mxu0 0.0
    %1848 = vmatpush1.msra.mxu0 0.0
    %1849 = vmatprep.subr.mxu0 0.0
    %1850 = vmatpush1.msra.mxu0 0.0
    %1851 = vmatprep.subr.mxu0 0.0
    %1852 = vmatpush1.msra.mxu0 0.0
    %1853 = vmatprep.subr.mxu0 0.0
    %1854 = vmatpush1.msra.mxu0 0.0
    %1855 = vmatprep.subr.mxu0 0.0
    %1856 = vmatpush1.msra.mxu0 0.0
    %1857 = vmatprep.subr.mxu0 0.0
    %1858 = vmatpush1.msra.mxu0 0.0
    %1859 = vmatprep.subr.mxu0 0.0
    %1860 = vmatpush1.msra.mxu0 0.0
    %1861 = vmatprep.subr.mxu0 0.0
    %1862 = vmatpush1.msra.mxu0 0.0
    %1863 = vmatprep.subr.mxu0 0.0
    %1864 = vmatpush1.msra.mxu0 0.0
    %1865 = vmatprep.subr.mxu0 0.0
    %1866 = vmatpush1.msra.mxu0 0.0
    %1867 = vmatprep.subr.mxu0 0.0
    %1868 = vmatpush1.msra.mxu0 0.0
    %1869 = vmatprep.subr.mxu0 0.0
    %1870 = vmatpush1.msra.mxu0 %v565
    %1871 = vmatprep.subr.mxu0 0.0
    %1872 = vmatpush1.msra.mxu0 %v564
    %1873 = vmatprep.subr.mxu0 0.0
    %1874 = vmatpush1.msra.mxu0 %v563
    %1875 = vmatprep.subr.mxu0 0.0
    %1876 = vmatpush1.msra.mxu0 %v562
    %1877 = vmatprep.subr.mxu0 0.0
    %1878 = vmatpush2.msra.mxu0 0.0
    %1879 = vmatprep.subr.mxu0 0.0
    %1880 = vmatpush2.msra.mxu0 0.0
    %1881 = vmatprep.subr.mxu0 0.0
    %1882 = vmatpush2.msra.mxu0 0.0
    %1883 = vmatprep.subr.mxu0 0.0
    %1884 = vmatpush2.msra.mxu0 0.0
    %1885 = vmatprep.subr.mxu0 0.0
    %1886 = vmatpush2.msra.mxu0 0.0
    %1887 = vmatprep.subr.mxu0 0.0
    %1888 = vmatpush2.msra.mxu0 0.0
    %1889 = vmatprep.subr.mxu0 0.0
    %1890 = vmatpush2.msra.mxu0 0.0
    %1891 = vmatprep.subr.mxu0 0.0
    %1892 = vmatpush2.msra.mxu0 0.0
    %1893 = vmatprep.subr.mxu0 0.0
    %1894 = vmatpush2.msra.mxu0 0.0
    %1895 = vmatprep.subr.mxu0 0.0
    %1896 = vmatpush2.msra.mxu0 0.0
    %1897 = vmatprep.subr.mxu0 0.0
    %1898 = vmatpush2.msra.mxu0 0.0
    %1899 = vmatprep.subr.mxu0 0.0
    %1900 = vmatpush2.msra.mxu0 0.0
    %1901 = vmatprep.subr.mxu0 0.0
    %1902 = vmatpush2.msra.mxu0 0.0
    %1903 = vmatprep.subr.mxu0 0.0
    %1904 = vmatpush2.msra.mxu0 0.0
    %1905 = vmatprep.subr.mxu0 0.0
    %1906 = vmatpush2.msra.mxu0 0.0
    %1907 = vmatprep.subr.mxu0 0.0
    %1908 = vmatpush2.msra.mxu0 0.0
    %1909 = vmatprep.mubr.f32.mxu0 0.0
    %1910 = vmatmul.mubr.f32.gmra.mxu0 %v1549
    %v1911 = vpop.f32.mrf.mxu0
    %v1912 = vadd.f32 %v1842, %v1911
    %v1913 = vpop.f32.mrf.mxu0
    %1914 = vdwg.mxu0
    %v1915 = vadd.f32 %v1912, %v712
    %v1916 = vtanh.pop %v1915
    %1917 = vmatprep.subr.mxu0 0.0
    %1918 = vmatpush1.msra.mxu0 0.0
    %1919 = vmatprep.subr.mxu0 0.0
    %1920 = vmatpush1.msra.mxu0 0.0
    %1921 = vmatprep.subr.mxu0 0.0
    %1922 = vmatpush1.msra.mxu0 0.0
    %1923 = vmatprep.subr.mxu0 0.0
    %1924 = vmatpush1.msra.mxu0 0.0
    %1925 = vmatprep.subr.mxu0 0.0
    %1926 = vmatpush1.msra.mxu0 0.0
    %1927 = vmatprep.subr.mxu0 0.0
    %1928 = vmatpush1.msra.mxu0 0.0
    %1929 = vmatprep.subr.mxu0 0.0
    %1930 = vmatpush1.msra.mxu0 0.0
    %1931 = vmatprep.subr.mxu0 0.0
    %1932 = vmatpush1.msra.mxu0 0.0
    %1933 = vmatprep.subr.mxu0 0.0
    %1934 = vmatpush1.msra.mxu0 0.0
    %1935 = vmatprep.subr.mxu0 0.0
    %1936 = vmatpush1.msra.mxu0 0.0
    %1937 = vmatprep.subr.mxu0 0.0
    %1938 = vmatpush1.msra.mxu0 0.0
    %1939 = vmatprep.subr.mxu0 0.0
    %1940 = vmatpush1.msra.mxu0 0.0
    %1941 = vmatprep.subr.mxu0 0.0
    %1942 = vmatpush1.msra.mxu0 %v724
    %1943 = vmatprep.subr.mxu0 0.0
    %1944 = vmatpush1.msra.mxu0 %v723
    %1945 = vmatprep.subr.mxu0 0.0
    %1946 = vmatpush1.msra.mxu0 %v722
    %1947 = vmatprep.subr.mxu0 0.0
    %1948 = vmatpush1.msra.mxu0 %v721
    %1949 = vmatprep.subr.mxu0 0.0
    %1950 = vmatpush2.msra.mxu0 0.0
    %1951 = vmatprep.subr.mxu0 0.0
    %1952 = vmatpush2.msra.mxu0 0.0
    %1953 = vmatprep.subr.mxu0 0.0
    %1954 = vmatpush2.msra.mxu0 0.0
    %1955 = vmatprep.subr.mxu0 0.0
    %1956 = vmatpush2.msra.mxu0 0.0
    %1957 = vmatprep.subr.mxu0 0.0
    %1958 = vmatpush2.msra.mxu0 0.0
    %1959 = vmatprep.subr.mxu0 0.0
    %1960 = vmatpush2.msra.mxu0 0.0
    %1961 = vmatprep.subr.mxu0 0.0
    %1962 = vmatpush2.msra.mxu0 0.0
    %1963 = vmatprep.subr.mxu0 0.0
    %1964 = vmatpush2.msra.mxu0 0.0
    %1965 = vmatprep.subr.mxu0 0.0
    %1966 = vmatpush2.msra.mxu0 0.0
    %1967 = vmatprep.subr.mxu0 0.0
    %1968 = vmatpush2.msra.mxu0 0.0
    %1969 = vmatprep.subr.mxu0 0.0
    %1970 = vmatpush2.msra.mxu0 0.0
    %1971 = vmatprep.subr.mxu0 0.0
    %1972 = vmatpush2.msra.mxu0 0.0
    %1973 = vmatprep.subr.mxu0 0.0
    %1974 = vmatpush2.msra.mxu0 0.0
    %1975 = vmatprep.subr.mxu0 0.0
    %1976 = vmatpush2.msra.mxu0 0.0
    %1977 = vmatprep.subr.mxu0 0.0
    %1978 = vmatpush2.msra.mxu0 0.0
    %1979 = vmatprep.subr.mxu0 0.0
    %1980 = vmatpush2.msra.mxu0 0.0
    %1981 = vmatprep.mubr.f32.mxu0 0.0
    %1982 = vmatmul.mubr.f32.gmra.mxu0 %v1476
    %v1983 = vpop.f32.mrf.mxu0
    %v1984 = vadd.f32 0.0, %v1983
    %v1985 = vpop.f32.mrf.mxu0
    %1986 = vdwg.mxu0
    %1987 = vmatprep.subr.mxu0 0.0
    %1988 = vmatpush1.msra.mxu0 0.0
    %1989 = vmatprep.subr.mxu0 0.0
    %1990 = vmatpush1.msra.mxu0 0.0
    %1991 = vmatprep.subr.mxu0 0.0
    %1992 = vmatpush1.msra.mxu0 0.0
    %1993 = vmatprep.subr.mxu0 0.0
    %1994 = vmatpush1.msra.mxu0 0.0
    %1995 = vmatprep.subr.mxu0 0.0
    %1996 = vmatpush1.msra.mxu0 0.0
    %1997 = vmatprep.subr.mxu0 0.0
    %1998 = vmatpush1.msra.mxu0 0.0
    %1999 = vmatprep.subr.mxu0 0.0
    %2000 = vmatpush1.msra.mxu0 0.0
    %2001 = vmatprep.subr.mxu0 0.0
    %2002 = vmatpush1.msra.mxu0 0.0
    %2003 = vmatprep.subr.mxu0 0.0
    %2004 = vmatpush1.msra.mxu0 0.0
    %2005 = vmatprep.subr.mxu0 0.0
    %2006 = vmatpush1.msra.mxu0 0.0
    %2007 = vmatprep.subr.mxu0 0.0
    %2008 = vmatpush1.msra.mxu0 0.0
    %2009 = vmatprep.subr.mxu0 0.0
    %2010 = vmatpush1.msra.mxu0 0.0
    %2011 = vmatprep.subr.mxu0 0.0
    %2012 = vmatpush1.msra.mxu0 %v719
    %2013 = vmatprep.subr.mxu0 0.0
    %2014 = vmatpush1.msra.mxu0 %v718
    %2015 = vmatprep.subr.mxu0 0.0
    %2016 = vmatpush1.msra.mxu0 %v717
    %2017 = vmatprep.subr.mxu0 0.0
    %2018 = vmatpush1.msra.mxu0 %v716
    %2019 = vmatprep.subr.mxu0 0.0
    %2020 = vmatpush2.msra.mxu0 0.0
    %2021 = vmatprep.subr.mxu0 0.0
    %2022 = vmatpush2.msra.mxu0 0.0
    %2023 = vmatprep.subr.mxu0 0.0
    %2024 = vmatpush2.msra.mxu0 0.0
    %2025 = vmatprep.subr.mxu0 0.0
    %2026 = vmatpush2.msra.mxu0 0.0
    %2027 = vmatprep.subr.mxu0 0.0
    %2028 = vmatpush2.msra.mxu0 0.0
    %2029 = vmatprep.subr.mxu0 0.0
    %2030 = vmatpush2.msra.mxu0 0.0
    %2031 = vmatprep.subr.mxu0 0.0
    %2032 = vmatpush2.msra.mxu0 0.0
    %2033 = vmatprep.subr.mxu0 0.0
    %2034 = vmatpush2.msra.mxu0 0.0
    %2035 = vmatprep.subr.mxu0 0.0
    %2036 = vmatpush2.msra.mxu0 0.0
    %2037 = vmatprep.subr.mxu0 0.0
    %2038 = vmatpush2.msra.mxu0 0.0
    %2039 = vmatprep.subr.mxu0 0.0
    %2040 = vmatpush2.msra.mxu0 0.0
    %2041 = vmatprep.subr.mxu0 0.0
    %2042 = vmatpush2.msra.mxu0 0.0
    %2043 = vmatprep.subr.mxu0 0.0
    %2044 = vmatpush2.msra.mxu0 0.0
    %2045 = vmatprep.subr.mxu0 0.0
    %2046 = vmatpush2.msra.mxu0 0.0
    %2047 = vmatprep.subr.mxu0 0.0
    %2048 = vmatpush2.msra.mxu0 0.0
    %2049 = vmatprep.subr.mxu0 0.0
    %2050 = vmatpush2.msra.mxu0 0.0
    %2051 = vmatprep.mubr.f32.mxu0 0.0
    %2052 = vmatmul.mubr.f32.gmra.mxu0 %v1549
    %v2053 = vpop.f32.mrf.mxu0
    %v2054 = vadd.f32 %v1984, %v2053
    %v2055 = vpop.f32.mrf.mxu0
    %2056 = vdwg.mxu0
    %v2057 = vadd.f32 %v2054, %v866
    %v2058 = vxor.u32 %v2057, 2147483648
    %v2059 = vmul.f32 %v2058, 1.442695
    %v2060 = vpow.pop %v2059
    %v2061 = vadd.f32 %v2060, 1.0
    %v2062 = vrcp.pop %v2061
    %v2063 = vmul.f32 1.0, %v2062
    %v2064 = vmul.f32 %v1774, %v1471
    %v2065 = vmul.f32 %v1627, %v1916
    %v2066 = vadd.f32 %v2064, %v2065
    %v2067 = vtanh.pop %v2066
    %v2068 = vmul.f32 %v2063, %v2067
    %v2069 = vld [vmem:[#allocation2 + $0x3] sm:$0x1]
    %v2071 = vsel %vm247, %v2068, 0
    %2073 = vmatprep.subr.mxu0 0.0
    %2074 = vmatpush1.msra.mxu0 0.0
    %2075 = vmatprep.subr.mxu0 0.0
    %2076 = vmatpush1.msra.mxu0 0.0
    %2077 = vmatprep.subr.mxu0 0.0
    %2078 = vmatpush1.msra.mxu0 0.0
    %2079 = vmatprep.subr.mxu0 0.0
    %2080 = vmatpush1.msra.mxu0 0.0
    %2081 = vmatprep.subr.mxu0 0.0
    %2082 = vmatpush1.msra.mxu0 0.0
    %2083 = vmatprep.subr.mxu0 0.0
    %2084 = vmatpush1.msra.mxu0 0.0
    %2085 = vmatprep.subr.mxu0 0.0
    %2086 = vmatpush1.msra.mxu0 0.0
    %2087 = vmatprep.subr.mxu0 0.0
    %2088 = vmatpush1.msra.mxu0 0.0
    %2089 = vmatprep.subr.mxu0 0.0
    %2090 = vmatpush1.msra.mxu0 0.0
    %2091 = vmatprep.subr.mxu0 0.0
    %2092 = vmatpush1.msra.mxu0 0.0
    %2093 = vmatprep.subr.mxu0 0.0
    %2094 = vmatpush1.msra.mxu0 0.0
    %2095 = vmatprep.subr.mxu0 0.0
    %2096 = vmatpush1.msra.mxu0 0.0
    %2097 = vmatprep.subr.mxu0 0.0
    %2098 = vmatpush1.msra.mxu0 %v246
    %2099 = vmatprep.subr.mxu0 0.0
    %2100 = vmatpush1.msra.mxu0 %v245
    %2101 = vmatprep.subr.mxu0 0.0
    %2102 = vmatpush1.msra.mxu0 %v244
    %2103 = vmatprep.subr.mxu0 0.0
    %2104 = vmatpush1.msra.mxu0 %v243
    %2105 = vmatprep.subr.mxu0 0.0
    %2106 = vmatpush2.msra.mxu0 0.0
    %2107 = vmatprep.subr.mxu0 0.0
    %2108 = vmatpush2.msra.mxu0 0.0
    %2109 = vmatprep.subr.mxu0 0.0
    %2110 = vmatpush2.msra.mxu0 0.0
    %2111 = vmatprep.subr.mxu0 0.0
    %2112 = vmatpush2.msra.mxu0 0.0
    %2113 = vmatprep.subr.mxu0 0.0
    %2114 = vmatpush2.msra.mxu0 0.0
    %2115 = vmatprep.subr.mxu0 0.0
    %2116 = vmatpush2.msra.mxu0 0.0
    %2117 = vmatprep.subr.mxu0 0.0
    %2118 = vmatpush2.msra.mxu0 0.0
    %2119 = vmatprep.subr.mxu0 0.0
    %2120 = vmatpush2.msra.mxu0 0.0
    %2121 = vmatprep.subr.mxu0 0.0
    %2122 = vmatpush2.msra.mxu0 0.0
    %2123 = vmatprep.subr.mxu0 0.0
    %2124 = vmatpush2.msra.mxu0 0.0
    %2125 = vmatprep.subr.mxu0 0.0
    %2126 = vmatpush2.msra.mxu0 0.0
    %2127 = vmatprep.subr.mxu0 0.0
    %2128 = vmatpush2.msra.mxu0 0.0
    %2129 = vmatprep.subr.mxu0 0.0
    %2130 = vmatpush2.msra.mxu0 0.0
    %2131 = vmatprep.subr.mxu0 0.0
    %2132 = vmatpush2.msra.mxu0 0.0
    %2133 = vmatprep.subr.mxu0 0.0
    %2134 = vmatpush2.msra.mxu0 0.0
    %2135 = vmatprep.subr.mxu0 0.0
    %2136 = vmatpush2.msra.mxu0 0.0
    %2137 = vmatprep.mubr.f32.mxu0 0.0
    %2138 = vmatmul.mubr.f32.gmra.mxu0 %v2071
    %v2139 = vpop.f32.mrf.mxu0
    %v2140 = vadd.f32 0.0, %v2139
    %v2141 = vpop.f32.mrf.mxu0
    %2142 = vdwg.mxu0
    %v2144 = vsel %vm247, %v2069, 0
    %2146 = vmatprep.subr.mxu0 0.0
    %2147 = vmatpush1.msra.mxu0 0.0
    %2148 = vmatprep.subr.mxu0 0.0
    %2149 = vmatpush1.msra.mxu0 0.0
    %2150 = vmatprep.subr.mxu0 0.0
    %2151 = vmatpush1.msra.mxu0 0.0
    %2152 = vmatprep.subr.mxu0 0.0
    %2153 = vmatpush1.msra.mxu0 0.0
    %2154 = vmatprep.subr.mxu0 0.0
    %2155 = vmatpush1.msra.mxu0 0.0
    %2156 = vmatprep.subr.mxu0 0.0
    %2157 = vmatpush1.msra.mxu0 0.0
    %2158 = vmatprep.subr.mxu0 0.0
    %2159 = vmatpush1.msra.mxu0 0.0
    %2160 = vmatprep.subr.mxu0 0.0
    %2161 = vmatpush1.msra.mxu0 0.0
    %2162 = vmatprep.subr.mxu0 0.0
    %2163 = vmatpush1.msra.mxu0 0.0
    %2164 = vmatprep.subr.mxu0 0.0
    %2165 = vmatpush1.msra.mxu0 0.0
    %2166 = vmatprep.subr.mxu0 0.0
    %2167 = vmatpush1.msra.mxu0 0.0
    %2168 = vmatprep.subr.mxu0 0.0
    %2169 = vmatpush1.msra.mxu0 0.0
    %2170 = vmatprep.subr.mxu0 0.0
    %2171 = vmatpush1.msra.mxu0 %v242
    %2172 = vmatprep.subr.mxu0 0.0
    %2173 = vmatpush1.msra.mxu0 %v241
    %2174 = vmatprep.subr.mxu0 0.0
    %2175 = vmatpush1.msra.mxu0 %v240
    %2176 = vmatprep.subr.mxu0 0.0
    %2177 = vmatpush1.msra.mxu0 %v239
    %2178 = vmatprep.subr.mxu0 0.0
    %2179 = vmatpush2.msra.mxu0 0.0
    %2180 = vmatprep.subr.mxu0 0.0
    %2181 = vmatpush2.msra.mxu0 0.0
    %2182 = vmatprep.subr.mxu0 0.0
    %2183 = vmatpush2.msra.mxu0 0.0
    %2184 = vmatprep.subr.mxu0 0.0
    %2185 = vmatpush2.msra.mxu0 0.0
    %2186 = vmatprep.subr.mxu0 0.0
    %2187 = vmatpush2.msra.mxu0 0.0
    %2188 = vmatprep.subr.mxu0 0.0
    %2189 = vmatpush2.msra.mxu0 0.0
    %2190 = vmatprep.subr.mxu0 0.0
    %2191 = vmatpush2.msra.mxu0 0.0
    %2192 = vmatprep.subr.mxu0 0.0
    %2193 = vmatpush2.msra.mxu0 0.0
    %2194 = vmatprep.subr.mxu0 0.0
    %2195 = vmatpush2.msra.mxu0 0.0
    %2196 = vmatprep.subr.mxu0 0.0
    %2197 = vmatpush2.msra.mxu0 0.0
    %2198 = vmatprep.subr.mxu0 0.0
    %2199 = vmatpush2.msra.mxu0 0.0
    %2200 = vmatprep.subr.mxu0 0.0
    %2201 = vmatpush2.msra.mxu0 0.0
    %2202 = vmatprep.subr.mxu0 0.0
    %2203 = vmatpush2.msra.mxu0 0.0
    %2204 = vmatprep.subr.mxu0 0.0
    %2205 = vmatpush2.msra.mxu0 0.0
    %2206 = vmatprep.subr.mxu0 0.0
    %2207 = vmatpush2.msra.mxu0 0.0
    %2208 = vmatprep.subr.mxu0 0.0
    %2209 = vmatpush2.msra.mxu0 0.0
    %2210 = vmatprep.mubr.f32.mxu0 0.0
    %2211 = vmatmul.mubr.f32.gmra.mxu0 %v2144
    %v2212 = vpop.f32.mrf.mxu0
    %v2213 = vadd.f32 %v2140, %v2212
    %v2214 = vpop.f32.mrf.mxu0
    %2215 = vdwg.mxu0
    %v2216 = vadd.f32 %v2213, %v394
    %v2217 = vxor.u32 %v2216, 2147483648
    %v2218 = vmul.f32 %v2217, 1.442695
    %v2219 = vpow.pop %v2218
    %v2220 = vadd.f32 %v2219, 1.0
    %v2221 = vrcp.pop %v2220
    %v2222 = vmul.f32 1.0, %v2221
    %2223 = vmatprep.subr.mxu0 0.0
    %2224 = vmatpush1.msra.mxu0 0.0
    %2225 = vmatprep.subr.mxu0 0.0
    %2226 = vmatpush1.msra.mxu0 0.0
    %2227 = vmatprep.subr.mxu0 0.0
    %2228 = vmatpush1.msra.mxu0 0.0
    %2229 = vmatprep.subr.mxu0 0.0
    %2230 = vmatpush1.msra.mxu0 0.0
    %2231 = vmatprep.subr.mxu0 0.0
    %2232 = vmatpush1.msra.mxu0 0.0
    %2233 = vmatprep.subr.mxu0 0.0
    %2234 = vmatpush1.msra.mxu0 0.0
    %2235 = vmatprep.subr.mxu0 0.0
    %2236 = vmatpush1.msra.mxu0 0.0
    %2237 = vmatprep.subr.mxu0 0.0
    %2238 = vmatpush1.msra.mxu0 0.0
    %2239 = vmatprep.subr.mxu0 0.0
    %2240 = vmatpush1.msra.mxu0 0.0
    %2241 = vmatprep.subr.mxu0 0.0
    %2242 = vmatpush1.msra.mxu0 0.0
    %2243 = vmatprep.subr.mxu0 0.0
    %2244 = vmatpush1.msra.mxu0 0.0
    %2245 = vmatprep.subr.mxu0 0.0
    %2246 = vmatpush1.msra.mxu0 0.0
    %2247 = vmatprep.subr.mxu0 0.0
    %2248 = vmatpush1.msra.mxu0 %v411
    %2249 = vmatprep.subr.mxu0 0.0
    %2250 = vmatpush1.msra.mxu0 %v410
    %2251 = vmatprep.subr.mxu0 0.0
    %2252 = vmatpush1.msra.mxu0 %v409
    %2253 = vmatprep.subr.mxu0 0.0
    %2254 = vmatpush1.msra.mxu0 %v408
    %2255 = vmatprep.subr.mxu0 0.0
    %2256 = vmatpush2.msra.mxu0 0.0
    %2257 = vmatprep.subr.mxu0 0.0
    %2258 = vmatpush2.msra.mxu0 0.0
    %2259 = vmatprep.subr.mxu0 0.0
    %2260 = vmatpush2.msra.mxu0 0.0
    %2261 = vmatprep.subr.mxu0 0.0
    %2262 = vmatpush2.msra.mxu0 0.0
    %2263 = vmatprep.subr.mxu0 0.0
    %2264 = vmatpush2.msra.mxu0 0.0
    %2265 = vmatprep.subr.mxu0 0.0
    %2266 = vmatpush2.msra.mxu0 0.0
    %2267 = vmatprep.subr.mxu0 0.0
    %2268 = vmatpush2.msra.mxu0 0.0
    %2269 = vmatprep.subr.mxu0 0.0
    %2270 = vmatpush2.msra.mxu0 0.0
    %2271 = vmatprep.subr.mxu0 0.0
    %2272 = vmatpush2.msra.mxu0 0.0
    %2273 = vmatprep.subr.mxu0 0.0
    %2274 = vmatpush2.msra.mxu0 0.0
    %2275 = vmatprep.subr.mxu0 0.0
    %2276 = vmatpush2.msra.mxu0 0.0
    %2277 = vmatprep.subr.mxu0 0.0
    %2278 = vmatpush2.msra.mxu0 0.0
    %2279 = vmatprep.subr.mxu0 0.0
    %2280 = vmatpush2.msra.mxu0 0.0
    %2281 = vmatprep.subr.mxu0 0.0
    %2282 = vmatpush2.msra.mxu0 0.0
    %2283 = vmatprep.subr.mxu0 0.0
    %2284 = vmatpush2.msra.mxu0 0.0
    %2285 = vmatprep.subr.mxu0 0.0
    %2286 = vmatpush2.msra.mxu0 0.0
    %2287 = vmatprep.mubr.f32.mxu0 0.0
    %2288 = vmatmul.mubr.f32.gmra.mxu0 %v2071
    %v2289 = vpop.f32.mrf.mxu0
    %v2290 = vadd.f32 0.0, %v2289
    %v2291 = vpop.f32.mrf.mxu0
    %2292 = vdwg.mxu0
    %2293 = vmatprep.subr.mxu0 0.0
    %2294 = vmatpush1.msra.mxu0 0.0
    %2295 = vmatprep.subr.mxu0 0.0
    %2296 = vmatpush1.msra.mxu0 0.0
    %2297 = vmatprep.subr.mxu0 0.0
    %2298 = vmatpush1.msra.mxu0 0.0
    %2299 = vmatprep.subr.mxu0 0.0
    %2300 = vmatpush1.msra.mxu0 0.0
    %2301 = vmatprep.subr.mxu0 0.0
    %2302 = vmatpush1.msra.mxu0 0.0
    %2303 = vmatprep.subr.mxu0 0.0
    %2304 = vmatpush1.msra.mxu0 0.0
    %2305 = vmatprep.subr.mxu0 0.0
    %2306 = vmatpush1.msra.mxu0 0.0
    %2307 = vmatprep.subr.mxu0 0.0
    %2308 = vmatpush1.msra.mxu0 0.0
    %2309 = vmatprep.subr.mxu0 0.0
    %2310 = vmatpush1.msra.mxu0 0.0
    %2311 = vmatprep.subr.mxu0 0.0
    %2312 = vmatpush1.msra.mxu0 0.0
    %2313 = vmatprep.subr.mxu0 0.0
    %2314 = vmatpush1.msra.mxu0 0.0
    %2315 = vmatprep.subr.mxu0 0.0
    %2316 = vmatpush1.msra.mxu0 0.0
    %2317 = vmatprep.subr.mxu0 0.0
    %2318 = vmatpush1.msra.mxu0 %v406
    %2319 = vmatprep.subr.mxu0 0.0
    %2320 = vmatpush1.msra.mxu0 %v405
    %2321 = vmatprep.subr.mxu0 0.0
    %2322 = vmatpush1.msra.mxu0 %v404
    %2323 = vmatprep.subr.mxu0 0.0
    %2324 = vmatpush1.msra.mxu0 %v403
    %2325 = vmatprep.subr.mxu0 0.0
    %2326 = vmatpush2.msra.mxu0 0.0
    %2327 = vmatprep.subr.mxu0 0.0
    %2328 = vmatpush2.msra.mxu0 0.0
    %2329 = vmatprep.subr.mxu0 0.0
    %2330 = vmatpush2.msra.mxu0 0.0
    %2331 = vmatprep.subr.mxu0 0.0
    %2332 = vmatpush2.msra.mxu0 0.0
    %2333 = vmatprep.subr.mxu0 0.0
    %2334 = vmatpush2.msra.mxu0 0.0
    %2335 = vmatprep.subr.mxu0 0.0
    %2336 = vmatpush2.msra.mxu0 0.0
    %2337 = vmatprep.subr.mxu0 0.0
    %2338 = vmatpush2.msra.mxu0 0.0
    %2339 = vmatprep.subr.mxu0 0.0
    %2340 = vmatpush2.msra.mxu0 0.0
    %2341 = vmatprep.subr.mxu0 0.0
    %2342 = vmatpush2.msra.mxu0 0.0
    %2343 = vmatprep.subr.mxu0 0.0
    %2344 = vmatpush2.msra.mxu0 0.0
    %2345 = vmatprep.subr.mxu0 0.0
    %2346 = vmatpush2.msra.mxu0 0.0
    %2347 = vmatprep.subr.mxu0 0.0
    %2348 = vmatpush2.msra.mxu0 0.0
    %2349 = vmatprep.subr.mxu0 0.0
    %2350 = vmatpush2.msra.mxu0 0.0
    %2351 = vmatprep.subr.mxu0 0.0
    %2352 = vmatpush2.msra.mxu0 0.0
    %2353 = vmatprep.subr.mxu0 0.0
    %2354 = vmatpush2.msra.mxu0 0.0
    %2355 = vmatprep.subr.mxu0 0.0
    %2356 = vmatpush2.msra.mxu0 0.0
    %2357 = vmatprep.mubr.f32.mxu0 0.0
    %2358 = vmatmul.mubr.f32.gmra.mxu0 %v2144
    %v2359 = vpop.f32.mrf.mxu0
    %v2360 = vadd.f32 %v2290, %v2359
    %v2361 = vpop.f32.mrf.mxu0
    %2362 = vdwg.mxu0
    %v2363 = vadd.f32 %v2360, %v553
    %v2364 = vxor.u32 %v2363, 2147483648
    %v2365 = vmul.f32 %v2364, 1.442695
    %v2366 = vpow.pop %v2365
    %v2367 = vadd.f32 %v2366, 1.0
    %v2368 = vrcp.pop %v2367
    %v2369 = vmul.f32 1.0, %v2368
    %2370 = vmatprep.subr.mxu0 0.0
    %2371 = vmatpush1.msra.mxu0 0.0
    %2372 = vmatprep.subr.mxu0 0.0
    %2373 = vmatpush1.msra.mxu0 0.0
    %2374 = vmatprep.subr.mxu0 0.0
    %2375 = vmatpush1.msra.mxu0 0.0
    %2376 = vmatprep.subr.mxu0 0.0
    %2377 = vmatpush1.msra.mxu0 0.0
    %2378 = vmatprep.subr.mxu0 0.0
    %2379 = vmatpush1.msra.mxu0 0.0
    %2380 = vmatprep.subr.mxu0 0.0
    %2381 = vmatpush1.msra.mxu0 0.0
    %2382 = vmatprep.subr.mxu0 0.0
    %2383 = vmatpush1.msra.mxu0 0.0
    %2384 = vmatprep.subr.mxu0 0.0
    %2385 = vmatpush1.msra.mxu0 0.0
    %2386 = vmatprep.subr.mxu0 0.0
    %2387 = vmatpush1.msra.mxu0 0.0
    %2388 = vmatprep.subr.mxu0 0.0
    %2389 = vmatpush1.msra.mxu0 0.0
    %2390 = vmatprep.subr.mxu0 0.0
    %2391 = vmatpush1.msra.mxu0 0.0
    %2392 = vmatprep.subr.mxu0 0.0
    %2393 = vmatpush1.msra.mxu0 0.0
    %2394 = vmatprep.subr.mxu0 0.0
    %2395 = vmatpush1.msra.mxu0 %v570
    %2396 = vmatprep.subr.mxu0 0.0
    %2397 = vmatpush1.msra.mxu0 %v569
    %2398 = vmatprep.subr.mxu0 0.0
    %2399 = vmatpush1.msra.mxu0 %v568
    %2400 = vmatprep.subr.mxu0 0.0
    %2401 = vmatpush1.msra.mxu0 %v567
    %2402 = vmatprep.subr.mxu0 0.0
    %2403 = vmatpush2.msra.mxu0 0.0
    %2404 = vmatprep.subr.mxu0 0.0
    %2405 = vmatpush2.msra.mxu0 0.0
    %2406 = vmatprep.subr.mxu0 0.0
    %2407 = vmatpush2.msra.mxu0 0.0
    %2408 = vmatprep.subr.mxu0 0.0
    %2409 = vmatpush2.msra.mxu0 0.0
    %2410 = vmatprep.subr.mxu0 0.0
    %2411 = vmatpush2.msra.mxu0 0.0
    %2412 = vmatprep.subr.mxu0 0.0
    %2413 = vmatpush2.msra.mxu0 0.0
    %2414 = vmatprep.subr.mxu0 0.0
    %2415 = vmatpush2.msra.mxu0 0.0
    %2416 = vmatprep.subr.mxu0 0.0
    %2417 = vmatpush2.msra.mxu0 0.0
    %2418 = vmatprep.subr.mxu0 0.0
    %2419 = vmatpush2.msra.mxu0 0.0
    %2420 = vmatprep.subr.mxu0 0.0
    %2421 = vmatpush2.msra.mxu0 0.0
    %2422 = vmatprep.subr.mxu0 0.0
    %2423 = vmatpush2.msra.mxu0 0.0
    %2424 = vmatprep.subr.mxu0 0.0
    %2425 = vmatpush2.msra.mxu0 0.0
    %2426 = vmatprep.subr.mxu0 0.0
    %2427 = vmatpush2.msra.mxu0 0.0
    %2428 = vmatprep.subr.mxu0 0.0
    %2429 = vmatpush2.msra.mxu0 0.0
    %2430 = vmatprep.subr.mxu0 0.0
    %2431 = vmatpush2.msra.mxu0 0.0
    %2432 = vmatprep.subr.mxu0 0.0
    %2433 = vmatpush2.msra.mxu0 0.0
    %2434 = vmatprep.mubr.f32.mxu0 0.0
    %2435 = vmatmul.mubr.f32.gmra.mxu0 %v2071
    %v2436 = vpop.f32.mrf.mxu0
    %v2437 = vadd.f32 0.0, %v2436
    %v2438 = vpop.f32.mrf.mxu0
    %2439 = vdwg.mxu0
    %2440 = vmatprep.subr.mxu0 0.0
    %2441 = vmatpush1.msra.mxu0 0.0
    %2442 = vmatprep.subr.mxu0 0.0
    %2443 = vmatpush1.msra.mxu0 0.0
    %2444 = vmatprep.subr.mxu0 0.0
    %2445 = vmatpush1.msra.mxu0 0.0
    %2446 = vmatprep.subr.mxu0 0.0
    %2447 = vmatpush1.msra.mxu0 0.0
    %2448 = vmatprep.subr.mxu0 0.0
    %2449 = vmatpush1.msra.mxu0 0.0
    %2450 = vmatprep.subr.mxu0 0.0
    %2451 = vmatpush1.msra.mxu0 0.0
    %2452 = vmatprep.subr.mxu0 0.0
    %2453 = vmatpush1.msra.mxu0 0.0
    %2454 = vmatprep.subr.mxu0 0.0
    %2455 = vmatpush1.msra.mxu0 0.0
    %2456 = vmatprep.subr.mxu0 0.0
    %2457 = vmatpush1.msra.mxu0 0.0
    %2458 = vmatprep.subr.mxu0 0.0
    %2459 = vmatpush1.msra.mxu0 0.0
    %2460 = vmatprep.subr.mxu0 0.0
    %2461 = vmatpush1.msra.mxu0 0.0
    %2462 = vmatprep.subr.mxu0 0.0
    %2463 = vmatpush1.msra.mxu0 0.0
    %2464 = vmatprep.subr.mxu0 0.0
    %2465 = vmatpush1.msra.mxu0 %v565
    %2466 = vmatprep.subr.mxu0 0.0
    %2467 = vmatpush1.msra.mxu0 %v564
    %2468 = vmatprep.subr.mxu0 0.0
    %2469 = vmatpush1.msra.mxu0 %v563
    %2470 = vmatprep.subr.mxu0 0.0
    %2471 = vmatpush1.msra.mxu0 %v562
    %2472 = vmatprep.subr.mxu0 0.0
    %2473 = vmatpush2.msra.mxu0 0.0
    %2474 = vmatprep.subr.mxu0 0.0
    %2475 = vmatpush2.msra.mxu0 0.0
    %2476 = vmatprep.subr.mxu0 0.0
    %2477 = vmatpush2.msra.mxu0 0.0
    %2478 = vmatprep.subr.mxu0 0.0
    %2479 = vmatpush2.msra.mxu0 0.0
    %2480 = vmatprep.subr.mxu0 0.0
    %2481 = vmatpush2.msra.mxu0 0.0
    %2482 = vmatprep.subr.mxu0 0.0
    %2483 = vmatpush2.msra.mxu0 0.0
    %2484 = vmatprep.subr.mxu0 0.0
    %2485 = vmatpush2.msra.mxu0 0.0
    %2486 = vmatprep.subr.mxu0 0.0
    %2487 = vmatpush2.msra.mxu0 0.0
    %2488 = vmatprep.subr.mxu0 0.0
    %2489 = vmatpush2.msra.mxu0 0.0
    %2490 = vmatprep.subr.mxu0 0.0
    %2491 = vmatpush2.msra.mxu0 0.0
    %2492 = vmatprep.subr.mxu0 0.0
    %2493 = vmatpush2.msra.mxu0 0.0
    %2494 = vmatprep.subr.mxu0 0.0
    %2495 = vmatpush2.msra.mxu0 0.0
    %2496 = vmatprep.subr.mxu0 0.0
    %2497 = vmatpush2.msra.mxu0 0.0
    %2498 = vmatprep.subr.mxu0 0.0
    %2499 = vmatpush2.msra.mxu0 0.0
    %2500 = vmatprep.subr.mxu0 0.0
    %2501 = vmatpush2.msra.mxu0 0.0
    %2502 = vmatprep.subr.mxu0 0.0
    %2503 = vmatpush2.msra.mxu0 0.0
    %2504 = vmatprep.mubr.f32.mxu0 0.0
    %2505 = vmatmul.mubr.f32.gmra.mxu0 %v2144
    %v2506 = vpop.f32.mrf.mxu0
    %v2507 = vadd.f32 %v2437, %v2506
    %v2508 = vpop.f32.mrf.mxu0
    %2509 = vdwg.mxu0
    %v2510 = vadd.f32 %v2507, %v712
    %v2511 = vtanh.pop %v2510
    %2512 = vmatprep.subr.mxu0 0.0
    %2513 = vmatpush1.msra.mxu0 0.0
    %2514 = vmatprep.subr.mxu0 0.0
    %2515 = vmatpush1.msra.mxu0 0.0
    %2516 = vmatprep.subr.mxu0 0.0
    %2517 = vmatpush1.msra.mxu0 0.0
    %2518 = vmatprep.subr.mxu0 0.0
    %2519 = vmatpush1.msra.mxu0 0.0
    %2520 = vmatprep.subr.mxu0 0.0
    %2521 = vmatpush1.msra.mxu0 0.0
    %2522 = vmatprep.subr.mxu0 0.0
    %2523 = vmatpush1.msra.mxu0 0.0
    %2524 = vmatprep.subr.mxu0 0.0
    %2525 = vmatpush1.msra.mxu0 0.0
    %2526 = vmatprep.subr.mxu0 0.0
    %2527 = vmatpush1.msra.mxu0 0.0
    %2528 = vmatprep.subr.mxu0 0.0
    %2529 = vmatpush1.msra.mxu0 0.0
    %2530 = vmatprep.subr.mxu0 0.0
    %2531 = vmatpush1.msra.mxu0 0.0
    %2532 = vmatprep.subr.mxu0 0.0
    %2533 = vmatpush1.msra.mxu0 0.0
    %2534 = vmatprep.subr.mxu0 0.0
    %2535 = vmatpush1.msra.mxu0 0.0
    %2536 = vmatprep.subr.mxu0 0.0
    %2537 = vmatpush1.msra.mxu0 %v724
    %2538 = vmatprep.subr.mxu0 0.0
    %2539 = vmatpush1.msra.mxu0 %v723
    %2540 = vmatprep.subr.mxu0 0.0
    %2541 = vmatpush1.msra.mxu0 %v722
    %2542 = vmatprep.subr.mxu0 0.0
    %2543 = vmatpush1.msra.mxu0 %v721
    %2544 = vmatprep.subr.mxu0 0.0
    %2545 = vmatpush2.msra.mxu0 0.0
    %2546 = vmatprep.subr.mxu0 0.0
    %2547 = vmatpush2.msra.mxu0 0.0
    %2548 = vmatprep.subr.mxu0 0.0
    %2549 = vmatpush2.msra.mxu0 0.0
    %2550 = vmatprep.subr.mxu0 0.0
    %2551 = vmatpush2.msra.mxu0 0.0
    %2552 = vmatprep.subr.mxu0 0.0
    %2553 = vmatpush2.msra.mxu0 0.0
    %2554 = vmatprep.subr.mxu0 0.0
    %2555 = vmatpush2.msra.mxu0 0.0
    %2556 = vmatprep.subr.mxu0 0.0
    %2557 = vmatpush2.msra.mxu0 0.0
    %2558 = vmatprep.subr.mxu0 0.0
    %2559 = vmatpush2.msra.mxu0 0.0
    %2560 = vmatprep.subr.mxu0 0.0
    %2561 = vmatpush2.msra.mxu0 0.0
    %2562 = vmatprep.subr.mxu0 0.0
    %2563 = vmatpush2.msra.mxu0 0.0
    %2564 = vmatprep.subr.mxu0 0.0
    %2565 = vmatpush2.msra.mxu0 0.0
    %2566 = vmatprep.subr.mxu0 0.0
    %2567 = vmatpush2.msra.mxu0 0.0
    %2568 = vmatprep.subr.mxu0 0.0
    %2569 = vmatpush2.msra.mxu0 0.0
    %2570 = vmatprep.subr.mxu0 0.0
    %2571 = vmatpush2.msra.mxu0 0.0
    %2572 = vmatprep.subr.mxu0 0.0
    %2573 = vmatpush2.msra.mxu0 0.0
    %2574 = vmatprep.subr.mxu0 0.0
    %2575 = vmatpush2.msra.mxu0 0.0
    %2576 = vmatprep.mubr.f32.mxu0 0.0
    %2577 = vmatmul.mubr.f32.gmra.mxu0 %v2071
    %v2578 = vpop.f32.mrf.mxu0
    %v2579 = vadd.f32 0.0, %v2578
    %v2580 = vpop.f32.mrf.mxu0
    %2581 = vdwg.mxu0
    %2582 = vmatprep.subr.mxu0 0.0
    %2583 = vmatpush1.msra.mxu0 0.0
    %2584 = vmatprep.subr.mxu0 0.0
    %2585 = vmatpush1.msra.mxu0 0.0
    %2586 = vmatprep.subr.mxu0 0.0
    %2587 = vmatpush1.msra.mxu0 0.0
    %2588 = vmatprep.subr.mxu0 0.0
    %2589 = vmatpush1.msra.mxu0 0.0
    %2590 = vmatprep.subr.mxu0 0.0
    %2591 = vmatpush1.msra.mxu0 0.0
    %2592 = vmatprep.subr.mxu0 0.0
    %2593 = vmatpush1.msra.mxu0 0.0
    %2594 = vmatprep.subr.mxu0 0.0
    %2595 = vmatpush1.msra.mxu0 0.0
    %2596 = vmatprep.subr.mxu0 0.0
    %2597 = vmatpush1.msra.mxu0 0.0
    %2598 = vmatprep.subr.mxu0 0.0
    %2599 = vmatpush1.msra.mxu0 0.0
    %2600 = vmatprep.subr.mxu0 0.0
    %2601 = vmatpush1.msra.mxu0 0.0
    %2602 = vmatprep.subr.mxu0 0.0
    %2603 = vmatpush1.msra.mxu0 0.0
    %2604 = vmatprep.subr.mxu0 0.0
    %2605 = vmatpush1.msra.mxu0 0.0
    %2606 = vmatprep.subr.mxu0 0.0
    %2607 = vmatpush1.msra.mxu0 %v719
    %2608 = vmatprep.subr.mxu0 0.0
    %2609 = vmatpush1.msra.mxu0 %v718
    %2610 = vmatprep.subr.mxu0 0.0
    %2611 = vmatpush1.msra.mxu0 %v717
    %2612 = vmatprep.subr.mxu0 0.0
    %2613 = vmatpush1.msra.mxu0 %v716
    %2614 = vmatprep.subr.mxu0 0.0
    %2615 = vmatpush2.msra.mxu0 0.0
    %2616 = vmatprep.subr.mxu0 0.0
    %2617 = vmatpush2.msra.mxu0 0.0
    %2618 = vmatprep.subr.mxu0 0.0
    %2619 = vmatpush2.msra.mxu0 0.0
    %2620 = vmatprep.subr.mxu0 0.0
    %2621 = vmatpush2.msra.mxu0 0.0
    %2622 = vmatprep.subr.mxu0 0.0
    %2623 = vmatpush2.msra.mxu0 0.0
    %2624 = vmatprep.subr.mxu0 0.0
    %2625 = vmatpush2.msra.mxu0 0.0
    %2626 = vmatprep.subr.mxu0 0.0
    %2627 = vmatpush2.msra.mxu0 0.0
    %2628 = vmatprep.subr.mxu0 0.0
    %2629 = vmatpush2.msra.mxu0 0.0
    %2630 = vmatprep.subr.mxu0 0.0
    %2631 = vmatpush2.msra.mxu0 0.0
    %2632 = vmatprep.subr.mxu0 0.0
    %2633 = vmatpush2.msra.mxu0 0.0
    %2634 = vmatprep.subr.mxu0 0.0
    %2635 = vmatpush2.msra.mxu0 0.0
    %2636 = vmatprep.subr.mxu0 0.0
    %2637 = vmatpush2.msra.mxu0 0.0
    %2638 = vmatprep.subr.mxu0 0.0
    %2639 = vmatpush2.msra.mxu0 0.0
    %2640 = vmatprep.subr.mxu0 0.0
    %2641 = vmatpush2.msra.mxu0 0.0
    %2642 = vmatprep.subr.mxu0 0.0
    %2643 = vmatpush2.msra.mxu0 0.0
    %2644 = vmatprep.subr.mxu0 0.0
    %2645 = vmatpush2.msra.mxu0 0.0
    %2646 = vmatprep.mubr.f32.mxu0 0.0
    %2647 = vmatmul.mubr.f32.gmra.mxu0 %v2144
    %v2648 = vpop.f32.mrf.mxu0
    %v2649 = vadd.f32 %v2579, %v2648
    %v2650 = vpop.f32.mrf.mxu0
    %2651 = vdwg.mxu0
    %v2652 = vadd.f32 %v2649, %v866
    %v2653 = vxor.u32 %v2652, 2147483648
    %v2654 = vmul.f32 %v2653, 1.442695
    %v2655 = vpow.pop %v2654
    %v2656 = vadd.f32 %v2655, 1.0
    %v2657 = vrcp.pop %v2656
    %v2658 = vmul.f32 1.0, %v2657
    %v2659 = vmul.f32 %v2369, %v2066
    %v2660 = vmul.f32 %v2222, %v2511
    %v2661 = vadd.f32 %v2659, %v2660
    %v2662 = vtanh.pop %v2661
    %v2663 = vmul.f32 %v2658, %v2662
    %vm2664 = vcmask 253952
    %2665 = vst.msk [vmem:[#allocation24] sm:$0x1] %vm2664, %v2663
    %2666 = vst.msk [vmem:[#allocation26] sm:$0x1] %vm2664, %v2661
    %v2667 = vld [vmem:[#allocation16] sm:$0xff]
    %v2668 = vld [vmem:[#allocation16 + $0x8] sm:$0xff]
    %v2669 = vld [vmem:[#allocation16 + $0x10] sm:$0xff]
    %v2670 = vld [vmem:[#allocation16 + $0x18] sm:$0xff]
    %v2671 = vld [vmem:[#allocation17] sm:$0x1]
    %v2673 = vsel %vm247, %v2663, 0
    %2675 = vmatprep.subr.mxu0 0.0
    %2676 = vmatpush1.msra.mxu0 0.0
    %2677 = vmatprep.subr.mxu0 0.0
    %2678 = vmatpush1.msra.mxu0 0.0
    %2679 = vmatprep.subr.mxu0 0.0
    %2680 = vmatpush1.msra.mxu0 0.0
    %2681 = vmatprep.subr.mxu0 0.0
    %2682 = vmatpush1.msra.mxu0 0.0
    %2683 = vmatprep.subr.mxu0 0.0
    %2684 = vmatpush1.msra.mxu0 0.0
    %2685 = vmatprep.subr.mxu0 0.0
    %2686 = vmatpush1.msra.mxu0 0.0
    %2687 = vmatprep.subr.mxu0 0.0
    %2688 = vmatpush1.msra.mxu0 0.0
    %2689 = vmatprep.subr.mxu0 0.0
    %2690 = vmatpush1.msra.mxu0 0.0
    %2691 = vmatprep.subr.mxu0 0.0
    %2692 = vmatpush1.msra.mxu0 0.0
    %2693 = vmatprep.subr.mxu0 0.0
    %2694 = vmatpush1.msra.mxu0 0.0
    %2695 = vmatprep.subr.mxu0 0.0
    %2696 = vmatpush1.msra.mxu0 0.0
    %2697 = vmatprep.subr.mxu0 0.0
    %2698 = vmatpush1.msra.mxu0 0.0
    %2699 = vmatprep.subr.mxu0 0.0
    %2700 = vmatpush1.msra.mxu0 %v2670
    %2701 = vmatprep.subr.mxu0 0.0
    %2702 = vmatpush1.msra.mxu0 %v2669
    %2703 = vmatprep.subr.mxu0 0.0
    %2704 = vmatpush1.msra.mxu0 %v2668
    %2705 = vmatprep.subr.mxu0 0.0
    %2706 = vmatpush1.msra.mxu0 %v2667
    %2707 = vmatprep.subr.mxu0 0.0
    %2708 = vmatpush2.msra.mxu0 0.0
    %2709 = vmatprep.subr.mxu0 0.0
    %2710 = vmatpush2.msra.mxu0 0.0
    %2711 = vmatprep.subr.mxu0 0.0
    %2712 = vmatpush2.msra.mxu0 0.0
    %2713 = vmatprep.subr.mxu0 0.0
    %2714 = vmatpush2.msra.mxu0 0.0
    %2715 = vmatprep.subr.mxu0 0.0
    %2716 = vmatpush2.msra.mxu0 0.0
    %2717 = vmatprep.subr.mxu0 0.0
    %2718 = vmatpush2.msra.mxu0 0.0
    %2719 = vmatprep.subr.mxu0 0.0
    %2720 = vmatpush2.msra.mxu0 0.0
    %2721 = vmatprep.subr.mxu0 0.0
    %2722 = vmatpush2.msra.mxu0 0.0
    %2723 = vmatprep.subr.mxu0 0.0
    %2724 = vmatpush2.msra.mxu0 0.0
    %2725 = vmatprep.subr.mxu0 0.0
    %2726 = vmatpush2.msra.mxu0 0.0
    %2727 = vmatprep.subr.mxu0 0.0
    %2728 = vmatpush2.msra.mxu0 0.0
    %2729 = vmatprep.subr.mxu0 0.0
    %2730 = vmatpush2.msra.mxu0 0.0
    %2731 = vmatprep.subr.mxu0 0.0
    %2732 = vmatpush2.msra.mxu0 0.0
    %2733 = vmatprep.subr.mxu0 0.0
    %2734 = vmatpush2.msra.mxu0 0.0
    %2735 = vmatprep.subr.mxu0 0.0
    %2736 = vmatpush2.msra.mxu0 0.0
    %2737 = vmatprep.subr.mxu0 0.0
    %2738 = vmatpush2.msra.mxu0 0.0
    %2739 = vmatprep.mubr.f32.mxu0 0.0
    %2740 = vmatmul.mubr.f32.gmra.mxu0 %v2673
    %v2741 = vpop.f32.mrf.mxu0
    %v2742 = vadd.f32 %v2671, %v2741
    %v2743 = vpop.f32.mrf.mxu0
    %2744 = vdwg.mxu0
    %v2745 = vld [vmem:[%s11] sm:$0xff]
    %v2746 = vld [vmem:[%s11 + $0x8] sm:$0xff]
    %v2747 = vld [vmem:[%s12] sm:$0x1]
    %vm2748 = vcmask 130048
    %v2750 = vsel %vm2748, %v233, 0
    %2752 = vmatprep.subr.mxu0 0.0
    %2753 = vmatpush1.msra.mxu0 0.0
    %2754 = vmatprep.subr.mxu0 0.0
    %2755 = vmatpush1.msra.mxu0 0.0
    %2756 = vmatprep.subr.mxu0 0.0
    %2757 = vmatpush1.msra.mxu0 0.0
    %2758 = vmatprep.subr.mxu0 0.0
    %2759 = vmatpush1.msra.mxu0 0.0
    %2760 = vmatprep.subr.mxu0 0.0
    %2761 = vmatpush1.msra.mxu0 0.0
    %2762 = vmatprep.subr.mxu0 0.0
    %2763 = vmatpush1.msra.mxu0 0.0
    %2764 = vmatprep.subr.mxu0 0.0
    %2765 = vmatpush1.msra.mxu0 0.0
    %2766 = vmatprep.subr.mxu0 0.0
    %2767 = vmatpush1.msra.mxu0 0.0
    %2768 = vmatprep.subr.mxu0 0.0
    %2769 = vmatpush1.msra.mxu0 0.0
    %2770 = vmatprep.subr.mxu0 0.0
    %2771 = vmatpush1.msra.mxu0 0.0
    %2772 = vmatprep.subr.mxu0 0.0
    %2773 = vmatpush1.msra.mxu0 0.0
    %2774 = vmatprep.subr.mxu0 0.0
    %2775 = vmatpush1.msra.mxu0 0.0
    %2776 = vmatprep.subr.mxu0 0.0
    %2777 = vmatpush1.msra.mxu0 0.0
    %2778 = vmatprep.subr.mxu0 0.0
    %2779 = vmatpush1.msra.mxu0 0.0
    %2780 = vmatprep.subr.mxu0 0.0
    %2781 = vmatpush1.msra.mxu0 %v2746
    %2782 = vmatprep.subr.mxu0 0.0
    %2783 = vmatpush1.msra.mxu0 %v2745
    %2784 = vmatprep.subr.mxu0 0.0
    %2785 = vmatpush2.msra.mxu0 0.0
    %2786 = vmatprep.subr.mxu0 0.0
    %2787 = vmatpush2.msra.mxu0 0.0
    %2788 = vmatprep.subr.mxu0 0.0
    %2789 = vmatpush2.msra.mxu0 0.0
    %2790 = vmatprep.subr.mxu0 0.0
    %2791 = vmatpush2.msra.mxu0 0.0
    %2792 = vmatprep.subr.mxu0 0.0
    %2793 = vmatpush2.msra.mxu0 0.0
    %2794 = vmatprep.subr.mxu0 0.0
    %2795 = vmatpush2.msra.mxu0 0.0
    %2796 = vmatprep.subr.mxu0 0.0
    %2797 = vmatpush2.msra.mxu0 0.0
    %2798 = vmatprep.subr.mxu0 0.0
    %2799 = vmatpush2.msra.mxu0 0.0
    %2800 = vmatprep.subr.mxu0 0.0
    %2801 = vmatpush2.msra.mxu0 0.0
    %2802 = vmatprep.subr.mxu0 0.0
    %2803 = vmatpush2.msra.mxu0 0.0
    %2804 = vmatprep.subr.mxu0 0.0
    %2805 = vmatpush2.msra.mxu0 0.0
    %2806 = vmatprep.subr.mxu0 0.0
    %2807 = vmatpush2.msra.mxu0 0.0
    %2808 = vmatprep.subr.mxu0 0.0
    %2809 = vmatpush2.msra.mxu0 0.0
    %2810 = vmatprep.subr.mxu0 0.0
    %2811 = vmatpush2.msra.mxu0 0.0
    %2812 = vmatprep.subr.mxu0 0.0
    %2813 = vmatpush2.msra.mxu0 0.0
    %2814 = vmatprep.subr.mxu0 0.0
    %2815 = vmatpush2.msra.mxu0 0.0
    %2816 = vmatprep.mubr.f32.mxu0 0.0
    %2817 = vmatmul.mubr.f32.gmra.mxu0 %v2750
    %v2818 = vpop.f32.mrf.mxu0
    %v2819 = vadd.f32 %v2747, %v2818
    %v2820 = vpop.f32.mrf.mxu0
    %2821 = vdwg.mxu0
    %v2822 = vadd.f32 %v2742, %v2819
    %v2823 = vld [vmem:[#allocation8] sm:$0xff]
    %v2824 = vld [vmem:[#allocation8 + $0x8] sm:$0xff]
    %v2826 = vsel %vm247, %v2822, 0
    %v2829 = vsel %vm247, %v2823, 0
    %v2832 = vsel %vm247, %v2824, 0
    %2834 = vmatprep.subr.mxu0 0.0
    %2835 = vmatpush1.xpose.msra.mxu0 0.0
    %2836 = vmatprep.subr.mxu0 0.0
    %2837 = vmatpush1.xpose.msra.mxu0 0.0
    %2838 = vmatprep.subr.mxu0 0.0
    %2839 = vmatpush1.xpose.msra.mxu0 0.0
    %2840 = vmatprep.subr.mxu0 0.0
    %2841 = vmatpush1.xpose.msra.mxu0 0.0
    %2842 = vmatprep.subr.mxu0 0.0
    %2843 = vmatpush1.xpose.msra.mxu0 0.0
    %2844 = vmatprep.subr.mxu0 0.0
    %2845 = vmatpush1.xpose.msra.mxu0 0.0
    %2846 = vmatprep.subr.mxu0 0.0
    %2847 = vmatpush1.xpose.msra.mxu0 0.0
    %2848 = vmatprep.subr.mxu0 0.0
    %2849 = vmatpush1.xpose.msra.mxu0 0.0
    %2850 = vmatprep.subr.mxu0 0.0
    %2851 = vmatpush1.xpose.msra.mxu0 0.0
    %2852 = vmatprep.subr.mxu0 0.0
    %2853 = vmatpush1.xpose.msra.mxu0 0.0
    %2854 = vmatprep.subr.mxu0 0.0
    %2855 = vmatpush1.xpose.msra.mxu0 0.0
    %2856 = vmatprep.subr.mxu0 0.0
    %2857 = vmatpush1.xpose.msra.mxu0 0.0
    %2858 = vmatprep.subr.mxu0 0.0
    %2859 = vmatpush1.xpose.msra.mxu0 0.0
    %2860 = vmatprep.subr.mxu0 0.0
    %2861 = vmatpush1.xpose.msra.mxu0 0.0
    %2862 = vmatprep.subr.mxu0 0.0
    %2863 = vmatpush1.xpose.msra.mxu0 %v2832
    %2864 = vmatprep.subr.mxu0 0.0
    %2865 = vmatpush1.xpose.msra.mxu0 %v2829
    %2866 = vmatprep.subr.mxu0 0.0
    %2867 = vmatpush2.xpose.msra.mxu0 0.0
    %2868 = vmatprep.subr.mxu0 0.0
    %2869 = vmatpush2.xpose.msra.mxu0 0.0
    %2870 = vmatprep.subr.mxu0 0.0
    %2871 = vmatpush2.xpose.msra.mxu0 0.0
    %2872 = vmatprep.subr.mxu0 0.0
    %2873 = vmatpush2.xpose.msra.mxu0 0.0
    %2874 = vmatprep.subr.mxu0 0.0
    %2875 = vmatpush2.xpose.msra.mxu0 0.0
    %2876 = vmatprep.subr.mxu0 0.0
    %2877 = vmatpush2.xpose.msra.mxu0 0.0
    %2878 = vmatprep.subr.mxu0 0.0
    %2879 = vmatpush2.xpose.msra.mxu0 0.0
    %2880 = vmatprep.subr.mxu0 0.0
    %2881 = vmatpush2.xpose.msra.mxu0 0.0
    %2882 = vmatprep.subr.mxu0 0.0
    %2883 = vmatpush2.xpose.msra.mxu0 0.0
    %2884 = vmatprep.subr.mxu0 0.0
    %2885 = vmatpush2.xpose.msra.mxu0 0.0
    %2886 = vmatprep.subr.mxu0 0.0
    %2887 = vmatpush2.xpose.msra.mxu0 0.0
    %2888 = vmatprep.subr.mxu0 0.0
    %2889 = vmatpush2.xpose.msra.mxu0 0.0
    %2890 = vmatprep.subr.mxu0 0.0
    %2891 = vmatpush2.xpose.msra.mxu0 0.0
    %2892 = vmatprep.subr.mxu0 0.0
    %2893 = vmatpush2.xpose.msra.mxu0 0.0
    %2894 = vmatprep.subr.mxu0 0.0
    %2895 = vmatpush2.xpose.msra.mxu0 0.0
    %2896 = vmatprep.subr.mxu0 0.0
    %2897 = vmatpush2.xpose.msra.mxu0 0.0
    %2898 = vmatprep.mubr.f32.mxu0 0.0
    %2899 = vmatmul.mubr.f32.gmra.mxu0 %v2826
    %v2900 = vpop.f32.mrf.mxu0
    %v2901 = vadd.f32 0.0, %v2900
    %v2902 = vpop.f32.mrf.mxu0
    %2903 = vdwg.mxu0
    %v2904 = vsel %vm234, %v2901, -inf
    %2905 = vmax.xlane.f32.xlu0 %v2904
    %v2906 = vpop.xlane.xlu0 %2905
    %v2907 = vsub.f32 %v2901, %v2906
    %v2908 = vmul.f32 %v2907, 1.442695
    %v2909 = vpow.pop %v2908
    %v2910 = vsel %vm234, %v2909, 0.0
    %2911 = vadd.xlane.f32.xlu0 %v2910
    %v2912 = vpop.xlane.xlu0 %2911
    %v2913 = vrcp.pop %v2912
    %v2914 = vmul.f32 %v2909, %v2913
    %2915 = vst.msk [vmem:[#allocation29] sm:$0x1] %vm234, %v2914
    %v2917 = vsel %vm2748, %v2914, 0
    %2919 = vmatprep.subr.mxu0 0.0
    %2920 = vmatpush1.msra.mxu0 0.0
    %2921 = vmatprep.subr.mxu0 0.0
    %2922 = vmatpush1.msra.mxu0 0.0
    %2923 = vmatprep.subr.mxu0 0.0
    %2924 = vmatpush1.msra.mxu0 0.0
    %2925 = vmatprep.subr.mxu0 0.0
    %2926 = vmatpush1.msra.mxu0 0.0
    %2927 = vmatprep.subr.mxu0 0.0
    %2928 = vmatpush1.msra.mxu0 0.0
    %2929 = vmatprep.subr.mxu0 0.0
    %2930 = vmatpush1.msra.mxu0 0.0
    %2931 = vmatprep.subr.mxu0 0.0
    %2932 = vmatpush1.msra.mxu0 0.0
    %2933 = vmatprep.subr.mxu0 0.0
    %2934 = vmatpush1.msra.mxu0 0.0
    %2935 = vmatprep.subr.mxu0 0.0
    %2936 = vmatpush1.msra.mxu0 0.0
    %2937 = vmatprep.subr.mxu0 0.0
    %2938 = vmatpush1.msra.mxu0 0.0
    %2939 = vmatprep.subr.mxu0 0.0
    %2940 = vmatpush1.msra.mxu0 0.0
    %2941 = vmatprep.subr.mxu0 0.0
    %2942 = vmatpush1.msra.mxu0 0.0
    %2943 = vmatprep.subr.mxu0 0.0
    %2944 = vmatpush1.msra.mxu0 0.0
    %2945 = vmatprep.subr.mxu0 0.0
    %2946 = vmatpush1.msra.mxu0 0.0
    %2947 = vmatprep.subr.mxu0 0.0
    %2948 = vmatpush1.msra.mxu0 %v2824
    %2949 = vmatprep.subr.mxu0 0.0
    %2950 = vmatpush1.msra.mxu0 %v2823
    %2951 = vmatprep.subr.mxu0 0.0
    %2952 = vmatpush2.msra.mxu0 0.0
    %2953 = vmatprep.subr.mxu0 0.0
    %2954 = vmatpush2.msra.mxu0 0.0
    %2955 = vmatprep.subr.mxu0 0.0
    %2956 = vmatpush2.msra.mxu0 0.0
    %2957 = vmatprep.subr.mxu0 0.0
    %2958 = vmatpush2.msra.mxu0 0.0
    %2959 = vmatprep.subr.mxu0 0.0
    %2960 = vmatpush2.msra.mxu0 0.0
    %2961 = vmatprep.subr.mxu0 0.0
    %2962 = vmatpush2.msra.mxu0 0.0
    %2963 = vmatprep.subr.mxu0 0.0
    %2964 = vmatpush2.msra.mxu0 0.0
    %2965 = vmatprep.subr.mxu0 0.0
    %2966 = vmatpush2.msra.mxu0 0.0
    %2967 = vmatprep.subr.mxu0 0.0
    %2968 = vmatpush2.msra.mxu0 0.0
    %2969 = vmatprep.subr.mxu0 0.0
    %2970 = vmatpush2.msra.mxu0 0.0
    %2971 = vmatprep.subr.mxu0 0.0
    %2972 = vmatpush2.msra.mxu0 0.0
    %2973 = vmatprep.subr.mxu0 0.0
    %2974 = vmatpush2.msra.mxu0 0.0
    %2975 = vmatprep.subr.mxu0 0.0
    %2976 = vmatpush2.msra.mxu0 0.0
    %2977 = vmatprep.subr.mxu0 0.0
    %2978 = vmatpush2.msra.mxu0 0.0
    %2979 = vmatprep.subr.mxu0 0.0
    %2980 = vmatpush2.msra.mxu0 0.0
    %2981 = vmatprep.subr.mxu0 0.0
    %2982 = vmatpush2.msra.mxu0 0.0
    %2983 = vmatprep.mubr.f32.mxu0 0.0
    %2984 = vmatmul.mubr.f32.gmra.mxu0 %v2917
    %v2985 = vpop.f32.mrf.mxu0
    %v2986 = vadd.f32 0.0, %v2985
    %v2987 = vpop.f32.mrf.mxu0
    %2988 = vdwg.mxu0
    %v2989 = vld [vmem:[#allocation19] sm:$0xff]
    %v2990 = vld [vmem:[#allocation19 + $0x8] sm:$0xff]
    %v2991 = vld [vmem:[#allocation19 + $0x10] sm:$0xff]
    %v2992 = vld [vmem:[#allocation19 + $0x18] sm:$0xff]
    %v2993 = vld [vmem:[#allocation20] sm:$0xff]
    %v2994 = vld [vmem:[#allocation20 + $0x8] sm:$0xff]
    %v2995 = vld [vmem:[#allocation20 + $0x10] sm:$0xff]
    %v2996 = vld [vmem:[#allocation20 + $0x18] sm:$0xff]
    %v2998 = vsel %vm247, %v2986, 0
    %3000 = vmatprep.subr.mxu0 0.0
    %3001 = vmatpush1.msra.mxu0 0.0
    %3002 = vmatprep.subr.mxu0 0.0
    %3003 = vmatpush1.msra.mxu0 0.0
    %3004 = vmatprep.subr.mxu0 0.0
    %3005 = vmatpush1.msra.mxu0 0.0
    %3006 = vmatprep.subr.mxu0 0.0
    %3007 = vmatpush1.msra.mxu0 0.0
    %3008 = vmatprep.subr.mxu0 0.0
    %3009 = vmatpush1.msra.mxu0 0.0
    %3010 = vmatprep.subr.mxu0 0.0
    %3011 = vmatpush1.msra.mxu0 0.0
    %3012 = vmatprep.subr.mxu0 0.0
    %3013 = vmatpush1.msra.mxu0 0.0
    %3014 = vmatprep.subr.mxu0 0.0
    %3015 = vmatpush1.msra.mxu0 0.0
    %3016 = vmatprep.subr.mxu0 0.0
    %3017 = vmatpush1.msra.mxu0 0.0
    %3018 = vmatprep.subr.mxu0 0.0
    %3019 = vmatpush1.msra.mxu0 0.0
    %3020 = vmatprep.subr.mxu0 0.0
    %3021 = vmatpush1.msra.mxu0 0.0
    %3022 = vmatprep.subr.mxu0 0.0
    %3023 = vmatpush1.msra.mxu0 0.0
    %3024 = vmatprep.subr.mxu0 0.0
    %3025 = vmatpush1.msra.mxu0 %v2996
    %3026 = vmatprep.subr.mxu0 0.0
    %3027 = vmatpush1.msra.mxu0 %v2995
    %3028 = vmatprep.subr.mxu0 0.0
    %3029 = vmatpush1.msra.mxu0 %v2994
    %3030 = vmatprep.subr.mxu0 0.0
    %3031 = vmatpush1.msra.mxu0 %v2993
    %3032 = vmatprep.subr.mxu0 0.0
    %3033 = vmatpush2.msra.mxu0 0.0
    %3034 = vmatprep.subr.mxu0 0.0
    %3035 = vmatpush2.msra.mxu0 0.0
    %3036 = vmatprep.subr.mxu0 0.0
    %3037 = vmatpush2.msra.mxu0 0.0
    %3038 = vmatprep.subr.mxu0 0.0
    %3039 = vmatpush2.msra.mxu0 0.0
    %3040 = vmatprep.subr.mxu0 0.0
    %3041 = vmatpush2.msra.mxu0 0.0
    %3042 = vmatprep.subr.mxu0 0.0
    %3043 = vmatpush2.msra.mxu0 0.0
    %3044 = vmatprep.subr.mxu0 0.0
    %3045 = vmatpush2.msra.mxu0 0.0
    %3046 = vmatprep.subr.mxu0 0.0
    %3047 = vmatpush2.msra.mxu0 0.0
    %3048 = vmatprep.subr.mxu0 0.0
    %3049 = vmatpush2.msra.mxu0 0.0
    %3050 = vmatprep.subr.mxu0 0.0
    %3051 = vmatpush2.msra.mxu0 0.0
    %3052 = vmatprep.subr.mxu0 0.0
    %3053 = vmatpush2.msra.mxu0 0.0
    %3054 = vmatprep.subr.mxu0 0.0
    %3055 = vmatpush2.msra.mxu0 0.0
    %3056 = vmatprep.subr.mxu0 0.0
    %3057 = vmatpush2.msra.mxu0 0.0
    %3058 = vmatprep.subr.mxu0 0.0
    %3059 = vmatpush2.msra.mxu0 0.0
    %3060 = vmatprep.subr.mxu0 0.0
    %3061 = vmatpush2.msra.mxu0 0.0
    %3062 = vmatprep.subr.mxu0 0.0
    %3063 = vmatpush2.msra.mxu0 0.0
    %3064 = vmatprep.mubr.f32.mxu0 0.0
    %3065 = vmatmul.mubr.f32.gmra.mxu0 %v2998
    %v3066 = vpop.f32.mrf.mxu0
    %v3067 = vadd.f32 0.0, %v3066
    %v3068 = vpop.f32.mrf.mxu0
    %3069 = vdwg.mxu0
    %3070 = vmatprep.subr.mxu0 0.0
    %3071 = vmatpush1.msra.mxu0 0.0
    %3072 = vmatprep.subr.mxu0 0.0
    %3073 = vmatpush1.msra.mxu0 0.0
    %3074 = vmatprep.subr.mxu0 0.0
    %3075 = vmatpush1.msra.mxu0 0.0
    %3076 = vmatprep.subr.mxu0 0.0
    %3077 = vmatpush1.msra.mxu0 0.0
    %3078 = vmatprep.subr.mxu0 0.0
    %3079 = vmatpush1.msra.mxu0 0.0
    %3080 = vmatprep.subr.mxu0 0.0
    %3081 = vmatpush1.msra.mxu0 0.0
    %3082 = vmatprep.subr.mxu0 0.0
    %3083 = vmatpush1.msra.mxu0 0.0
    %3084 = vmatprep.subr.mxu0 0.0
    %3085 = vmatpush1.msra.mxu0 0.0
    %3086 = vmatprep.subr.mxu0 0.0
    %3087 = vmatpush1.msra.mxu0 0.0
    %3088 = vmatprep.subr.mxu0 0.0
    %3089 = vmatpush1.msra.mxu0 0.0
    %3090 = vmatprep.subr.mxu0 0.0
    %3091 = vmatpush1.msra.mxu0 0.0
    %3092 = vmatprep.subr.mxu0 0.0
    %3093 = vmatpush1.msra.mxu0 0.0
    %3094 = vmatprep.subr.mxu0 0.0
    %3095 = vmatpush1.msra.mxu0 %v2992
    %3096 = vmatprep.subr.mxu0 0.0
    %3097 = vmatpush1.msra.mxu0 %v2991
    %3098 = vmatprep.subr.mxu0 0.0
    %3099 = vmatpush1.msra.mxu0 %v2990
    %3100 = vmatprep.subr.mxu0 0.0
    %3101 = vmatpush1.msra.mxu0 %v2989
    %3102 = vmatprep.subr.mxu0 0.0
    %3103 = vmatpush2.msra.mxu0 0.0
    %3104 = vmatprep.subr.mxu0 0.0
    %3105 = vmatpush2.msra.mxu0 0.0
    %3106 = vmatprep.subr.mxu0 0.0
    %3107 = vmatpush2.msra.mxu0 0.0
    %3108 = vmatprep.subr.mxu0 0.0
    %3109 = vmatpush2.msra.mxu0 0.0
    %3110 = vmatprep.subr.mxu0 0.0
    %3111 = vmatpush2.msra.mxu0 0.0
    %3112 = vmatprep.subr.mxu0 0.0
    %3113 = vmatpush2.msra.mxu0 0.0
    %3114 = vmatprep.subr.mxu0 0.0
    %3115 = vmatpush2.msra.mxu0 0.0
    %3116 = vmatprep.subr.mxu0 0.0
    %3117 = vmatpush2.msra.mxu0 0.0
    %3118 = vmatprep.subr.mxu0 0.0
    %3119 = vmatpush2.msra.mxu0 0.0
    %3120 = vmatprep.subr.mxu0 0.0
    %3121 = vmatpush2.msra.mxu0 0.0
    %3122 = vmatprep.subr.mxu0 0.0
    %3123 = vmatpush2.msra.mxu0 0.0
    %3124 = vmatprep.subr.mxu0 0.0
    %3125 = vmatpush2.msra.mxu0 0.0
    %3126 = vmatprep.subr.mxu0 0.0
    %3127 = vmatpush2.msra.mxu0 0.0
    %3128 = vmatprep.subr.mxu0 0.0
    %3129 = vmatpush2.msra.mxu0 0.0
    %3130 = vmatprep.subr.mxu0 0.0
    %3131 = vmatpush2.msra.mxu0 0.0
    %3132 = vmatprep.subr.mxu0 0.0
    %3133 = vmatpush2.msra.mxu0 0.0
    %3134 = vmatprep.mubr.f32.mxu0 0.0
    %3135 = vmatmul.mubr.f32.gmra.mxu0 %v2673
    %v3136 = vpop.f32.mrf.mxu0
    %v3137 = vadd.f32 %v3067, %v3136
    %v3138 = vpop.f32.mrf.mxu0
    %3139 = vdwg.mxu0
    %v3140 = vld [vmem:[%s15] sm:$0x1]
    %v3141 = vadd.f32 %v3137, %v3140
    %v3142 = vtanh.pop %v3141
    %v3143 = vld [vmem:[#allocation22] sm:$0xff]
    %v3144 = vld [vmem:[#allocation22 + $0x8] sm:$0xff]
    %v3145 = vld [vmem:[#allocation22 + $0x10] sm:$0xff]
    %v3146 = vld [vmem:[#allocation22 + $0x18] sm:$0xff]
    %v3147 = vld [vmem:[%s17] sm:$0x1]
    %v3149 = vsel %vm247, %v3142, 0
    %3151 = vmatprep.subr.mxu0 0.0
    %3152 = vmatpush1.msra.mxu0 0.0
    %3153 = vmatprep.subr.mxu0 0.0
    %3154 = vmatpush1.msra.mxu0 0.0
    %3155 = vmatprep.subr.mxu0 0.0
    %3156 = vmatpush1.msra.mxu0 0.0
    %3157 = vmatprep.subr.mxu0 0.0
    %3158 = vmatpush1.msra.mxu0 0.0
    %3159 = vmatprep.subr.mxu0 0.0
    %3160 = vmatpush1.msra.mxu0 0.0
    %3161 = vmatprep.subr.mxu0 0.0
    %3162 = vmatpush1.msra.mxu0 0.0
    %3163 = vmatprep.subr.mxu0 0.0
    %3164 = vmatpush1.msra.mxu0 0.0
    %3165 = vmatprep.subr.mxu0 0.0
    %3166 = vmatpush1.msra.mxu0 0.0
    %3167 = vmatprep.subr.mxu0 0.0
    %3168 = vmatpush1.msra.mxu0 0.0
    %3169 = vmatprep.subr.mxu0 0.0
    %3170 = vmatpush1.msra.mxu0 0.0
    %3171 = vmatprep.subr.mxu0 0.0
    %3172 = vmatpush1.msra.mxu0 0.0
    %3173 = vmatprep.subr.mxu0 0.0
    %3174 = vmatpush1.msra.mxu0 0.0
    %3175 = vmatprep.subr.mxu0 0.0
    %3176 = vmatpush1.msra.mxu0 %v3146
    %3177 = vmatprep.subr.mxu0 0.0
    %3178 = vmatpush1.msra.mxu0 %v3145
    %3179 = vmatprep.subr.mxu0 0.0
    %3180 = vmatpush1.msra.mxu0 %v3144
    %3181 = vmatprep.subr.mxu0 0.0
    %3182 = vmatpush1.msra.mxu0 %v3143
    %3183 = vmatprep.subr.mxu0 0.0
    %3184 = vmatpush2.msra.mxu0 0.0
    %3185 = vmatprep.subr.mxu0 0.0
    %3186 = vmatpush2.msra.mxu0 0.0
    %3187 = vmatprep.subr.mxu0 0.0
    %3188 = vmatpush2.msra.mxu0 0.0
    %3189 = vmatprep.subr.mxu0 0.0
    %3190 = vmatpush2.msra.mxu0 0.0
    %3191 = vmatprep.subr.mxu0 0.0
    %3192 = vmatpush2.msra.mxu0 0.0
    %3193 = vmatprep.subr.mxu0 0.0
    %3194 = vmatpush2.msra.mxu0 0.0
    %3195 = vmatprep.subr.mxu0 0.0
    %3196 = vmatpush2.msra.mxu0 0.0
    %3197 = vmatprep.subr.mxu0 0.0
    %3198 = vmatpush2.msra.mxu0 0.0
    %3199 = vmatprep.subr.mxu0 0.0
    %3200 = vmatpush2.msra.mxu0 0.0
    %3201 = vmatprep.subr.mxu0 0.0
    %3202 = vmatpush2.msra.mxu0 0.0
    %3203 = vmatprep.subr.mxu0 0.0
    %3204 = vmatpush2.msra.mxu0 0.0
    %3205 = vmatprep.subr.mxu0 0.0
    %3206 = vmatpush2.msra.mxu0 0.0
    %3207 = vmatprep.subr.mxu0 0.0
    %3208 = vmatpush2.msra.mxu0 0.0
    %3209 = vmatprep.subr.mxu0 0.0
    %3210 = vmatpush2.msra.mxu0 0.0
    %3211 = vmatprep.subr.mxu0 0.0
    %3212 = vmatpush2.msra.mxu0 0.0
    %3213 = vmatprep.subr.mxu0 0.0
    %3214 = vmatpush2.msra.mxu0 0.0
    %3215 = vmatprep.mubr.f32.mxu0 0.0
    %3216 = vmatmul.mubr.f32.gmra.mxu0 %v3149
    %v3217 = vpop.f32.mrf.mxu0
    %v3218 = vadd.f32 %v3147, %v3217
    %v3219 = vpop.f32.mrf.mxu0
    %3220 = vdwg.mxu0
    %vm3221 = vcmask 1040384
    %v3222 = vsel %vm3221, %v3218, -inf
    %3223 = vmax.xlane.f32.xlu0 %v3222
    %v3224 = vpop.xlane.xlu0 %3223
    %v3225 = vsub.f32 %v3218, %v3224
    %v3226 = vmul.f32 %v3225, 1.442695
    %v3227 = vpow.pop %v3226
    %v3228 = vsel %vm3221, %v3227, 0.0
    %3229 = vadd.xlane.f32.xlu0 %v3228
    %v3230 = vpop.xlane.xlu0 %3229
    %v3231 = vlog2.pop %v3230
    %v3232 = vmul.f32 %v3231, 0.6931472
    %v3233 = vadd.f32 %v3224, %v3232
    %v3234 = vsub.f32 %v3218, %v3233
    %3235 = vst [vmem:[#allocation23] sm:$0x1] %v3234
    // Predicated region
    $region126: #{tpu_custom_call.1} parent=1 // pred_check
      _
    $region127: #{tpu_custom_call.1} parent=1 // pred_check_branch
      %3237 = sbr.rel (0) target = $region129
    $region128: #{tpu_custom_call.1} parent=1 // pred_region
      %s3239 = ssub.s32 16, 16
      %3240 = vsyncadd [#allocation4], %s3239
      %s3242 = sshll.u32 [#allocation23], 4
      %s3243 = int_to_ptr.vmem [resolvable:$true] %s3242
      %3245 = dma.vmem_to_hbm [thread:$0]  %s3243, 16, %s18, [#allocation4]
    $region129: #{tpu_custom_call.1} parent=1 // pred_fallthru
      _
    // Predicated region
    $region130: #{tpu_custom_call.1} parent=1 // pred_check
      _
    $region131: #{tpu_custom_call.1} parent=1 // pred_check_branch
      %3247 = sbr.rel (0) target = $region133
    $region132: #{tpu_custom_call.1} parent=1 // pred_region
      %s3249 = ssub.s32 16, 16
      %3250 = vsyncadd [#allocation25], %s3249
      %s3252 = sshll.u32 [#allocation24], 4
      %s3253 = int_to_ptr.vmem [resolvable:$true] %s3252
      %3255 = dma.vmem_to_hbm [thread:$0]  %s3253, 16, %s19, [#allocation25]
    $region133: #{tpu_custom_call.1} parent=1 // pred_fallthru
      _
    // Predicated region
    $region134: #{tpu_custom_call.1} parent=1 // pred_check
      _
    $region135: #{tpu_custom_call.1} parent=1 // pred_check_branch
      %3257 = sbr.rel (0) target = $region137
    $region136: #{tpu_custom_call.1} parent=1 // pred_region
      %s3259 = ssub.s32 16, 16
      %3260 = vsyncadd [#allocation25], %s3259
      %s3262 = sshll.u32 [#allocation26], 4
      %s3263 = int_to_ptr.vmem [resolvable:$true] %s3262
      %3265 = dma.vmem_to_hbm [thread:$0]  %s3263, 16, %s20, [#allocation25]
    $region137: #{tpu_custom_call.1} parent=1 // pred_fallthru
      _
    // Predicated region
    $region138: #{tpu_custom_call.1} parent=1 // pred_check
      _
    $region139: #{tpu_custom_call.1} parent=1 // pred_check_branch
      %3267 = sbr.rel (0) target = $region141
    $region140: #{tpu_custom_call.1} parent=1 // pred_region
      %s3269 = ssub.s32 16, 16
      %3270 = vsyncadd [#allocation28], %s3269
      %s3272 = sshll.u32 [#allocation27], 4
      %s3273 = int_to_ptr.vmem [resolvable:$true] %s3272
      %3275 = dma.vmem_to_hbm [thread:$0]  %s3273, 16, %s21, [#allocation28]
    $region141: #{tpu_custom_call.1} parent=1 // pred_fallthru
      _
    // Predicated region
    $region142: #{tpu_custom_call.1} parent=1 // pred_check
      _
    $region143: #{tpu_custom_call.1} parent=1 // pred_check_branch
      %3277 = sbr.rel (0) target = $region145
    $region144: #{tpu_custom_call.1} parent=1 // pred_region
      %s3279 = ssub.s32 16, 16
      %3280 = vsyncadd [#allocation28], %s3279
      %s3282 = sshll.u32 [#allocation29], 4
      %s3283 = int_to_ptr.vmem [resolvable:$true] %s3282
      %3285 = dma.vmem_to_hbm [thread:$0]  %s3283, 16, %s22, [#allocation28]
    $region145: #{tpu_custom_call.1} parent=1 // pred_fallthru
      _
    // Predicated region
    $region146: #{tpu_custom_call.1} parent=1 // pred_check
      _
    $region147: #{tpu_custom_call.1} parent=1 // pred_check_branch
      %3287 = sbr.rel (0) target = $region149
    $region148: #{tpu_custom_call.1} parent=1 // pred_region
      %3288 = dma.done [#allocation4], 16
    $region149: #{tpu_custom_call.1} parent=1 // pred_fallthru
      _
    // Predicated region
    $region150: #{tpu_custom_call.1} parent=1 // pred_check
      _
    $region151: #{tpu_custom_call.1} parent=1 // pred_check_branch
      %3290 = sbr.rel (0) target = $region153
    $region152: #{tpu_custom_call.1} parent=1 // pred_region
      %3291 = dma.done [#allocation25], 16
    $region153: #{tpu_custom_call.1} parent=1 // pred_fallthru
      _
    // Predicated region
    $region154: #{tpu_custom_call.1} parent=1 // pred_check
      _
    $region155: #{tpu_custom_call.1} parent=1 // pred_check_branch
      %3293 = sbr.rel (0) target = $region157
    $region156: #{tpu_custom_call.1} parent=1 // pred_region
      %3294 = dma.done [#allocation25], 16
    $region157: #{tpu_custom_call.1} parent=1 // pred_fallthru
      _
    // Predicated region
    $region158: #{tpu_custom_call.1} parent=1 // pred_check
      _
    $region159: #{tpu_custom_call.1} parent=1 // pred_check_branch
      %3296 = sbr.rel (0) target = $region161
    $region160: #{tpu_custom_call.1} parent=1 // pred_region
      %3297 = dma.done [#allocation28], 16
    $region161: #{tpu_custom_call.1} parent=1 // pred_fallthru
      _
    // Predicated region
    $region162: #{tpu_custom_call.1} parent=1 // pred_check
      _
    $region163: #{tpu_custom_call.1} parent=1 // pred_check_branch
      %3299 = sbr.rel (0) target = $region165
    $region164: #{tpu_custom_call.1} parent=1 // pred_region
      %3300 = dma.done [#allocation28], 16
    $region165: #{tpu_custom_call.1} parent=1 // pred_fallthru
      _
    %3301 = vsyncpa [#allocation3], 1
    %3302 = vsyncpa [#allocation6], 1
    %3303 = vsyncpa [#allocation9], 1
    %3304 = vsyncpa [#allocation12], 1
    %3305 = vsyncpa [#allocation15], 1
    %3306 = vsyncpa [#allocation18], 1
    %3307 = vsyncpa [#allocation21], 1
    %3308 = vsyncpa [#allocation4], 1
    %3309 = vsyncpa [#allocation25], 1
    %3310 = vsyncpa [#allocation28], 1

</llo_original>
